<compile_context>
chip_gen: v6e
topology: v6e:2x2x1
jax: 0.10.0
libtpu: 0.0.40
codegen_flags: <defaults>
</compile_context>

<pallas_src>
import jax
import jax.numpy as jnp
from jax.experimental import pallas as pl
from jax.experimental.pallas import tpu as pltpu


def fourier_kernel(a_ref, x_ref, bt_ref, o_ref):
    # a_ref : SMEM (1,) scalar output scale
    # x_ref : (tm, d)  row tile of the flattened input
    # bt_ref: (d, k)   = (2*pi * B)^T, VMEM-resident (constant index_map)
    # o_ref : (tm, 2k) output tile (lane-dense when 2k % 128 == 0)
    a = a_ref[0]
    ang = jnp.dot(
        x_ref[...],
        bt_ref[...],
        preferred_element_type=jnp.float32,
        precision=jax.lax.Precision.HIGHEST,
    )
    cosines = a * jnp.cos(ang)
    sines = a * jnp.sin(ang)
    o_ref[...] = jnp.concatenate([cosines, sines], axis=-1).astype(o_ref.dtype)


def _round_up(n, m):
    return ((n + m - 1) // m) * m


def fourier_embedding(x, B_mat, a, *, tm=1024, out_dtype=jnp.float32):
    """x: (B, N, d) f32; B_mat: (k, d) f32; a: (1,) f32 -> (B, N, 2k).

    tm is the row tile (main perf knob). out_dtype may be set to bfloat16 by
    callers that tolerate a half-width write stream (kernel is write-bound).
    """
    Bb, N, d = x.shape
    k, d2 = B_mat.shape
    assert d == d2
    M = Bb * N
    x2 = x.reshape(M, d)

    # One-time wrapper-level weight prep: transpose + fold 2*pi into B.
    bt = (2.0 * jnp.pi) * B_mat.T  # (d, k)

    # Clamp/round the tile so small inputs don't over-pad; keep 8-sublane align.
    tm = _round_up(max(1, min(tm, M)), 8)
    grid_m = pl.cdiv(M, tm)
    M_pad = grid_m * tm
    if M_pad != M:
        # Only touches x again in the ragged case; no-op for aligned M.
        x2 = jnp.pad(x2, ((0, M_pad - M), (0, 0)))

    cost = pl.CostEstimate(
        flops=2 * M * k * d,
        transcendentals=2 * M * k,
        bytes_accessed=M * d * 4 + k * d * 4
        + M * 2 * k * jnp.dtype(out_dtype).itemsize,
    )

    out2 = pl.pallas_call(
        fourier_kernel,
        out_shape=jax.ShapeDtypeStruct((M_pad, 2 * k), out_dtype),
        grid_spec=pltpu.PrefetchScalarGridSpec(
            num_scalar_prefetch=0,
            grid=(grid_m,),
            in_specs=[
                pl.BlockSpec(memory_space=pltpu.MemorySpace.SMEM),   # a (1,)
                pl.BlockSpec((tm, d), lambda i: (i, 0)),             # x row tile
                pl.BlockSpec((d, k), lambda i: (0, 0)),              # Bt, resident
            ],
            out_specs=pl.BlockSpec((tm, 2 * k), lambda i: (i, 0)),
        ),
        compiler_params=pltpu.CompilerParams(
            dimension_semantics=("parallel",)),
        cost_estimate=cost,
    )(a, x2, bt)

    return out2[:M].reshape(Bb, N, 2 * k)


if __name__ == "__main__":
    # Module hyper-params (small, consistent with the forward pass).
    input_dim = 16    # d
    output_dim = 64   # k  -> 2k = 128 (exactly lane-dense)
    sigma = 1.0

    batch, seq = 2, 64

    key = jax.random.PRNGKey(0)
    kB, kx = jax.random.split(key)

    # Parameter init mirrors sigma * randn(output_dim, input_dim) and a = 1.0.
    B_mat = sigma * jax.random.normal(kB, (output_dim, input_dim), dtype=jnp.float32)
    a = jnp.ones((1,), dtype=jnp.float32)

    x = jax.random.normal(kx, (batch, seq, input_dim), dtype=jnp.float32)

    out = fourier_embedding(x, B_mat, a)
    out = jax.block_until_ready(out)
    assert out.shape == (batch, seq, 2 * output_dim)

    # Pure-JAX reference check (scalar `a` broadcast — matches a_ref[0] semantics).
    bx_ref = jnp.einsum("BNd,kd->BNk", x, B_mat,
                        precision=jax.lax.Precision.HIGHEST)
    a0 = a[0]
    ref = jnp.concatenate(
        [a0 * jnp.cos(2 * jnp.pi * bx_ref),
         a0 * jnp.sin(2 * jnp.pi * bx_ref)],
        axis=2,
    )
    assert jnp.allclose(out, ref, atol=1e-3, rtol=1e-3)

    print("KERNEL_OK")
</pallas_src>

<mosaic_0001>
module attributes {stable_mosaic.version = 11 : i64} {
  func.func @fourier_kernel(%arg0: i32, %arg1: memref<1xf32, #tpu.memory_space<smem>>, %arg2: memref<128x16xf32, #tpu.memory_space<vmem>>, %arg3: memref<16x64xf32, #tpu.memory_space<vmem>>, %arg4: memref<128x128xf32, #tpu.memory_space<vmem>>) attributes {dimension_semantics = [#tpu.dimension_semantics<parallel>], iteration_bounds = array<i64: 1>, scalar_prefetch = 0 : i64, scratch_operands = 0 : i64, tpu.core_type = #tpu.core_type<tc>, window_params = [{transform_indices = @transform_0, window_bounds = array<i64: 1>}, {transform_indices = @transform_1, window_bounds = array<i64: 128, 16>}, {pipeline_mode = #tpu.pipeline_mode<synchronous>, transform_indices = @transform_2, window_bounds = array<i64: 16, 64>}, {transform_indices = @transform_3, window_bounds = array<i64: 128, 128>}]} {
    %c0 = arith.constant 0 : index
    %0 = memref.load %arg1[%c0] : memref<1xf32, #tpu.memory_space<smem>>
    %c0_0 = arith.constant 0 : index
    %c0_1 = arith.constant 0 : index
    %1 = vector.load %arg2[%c0_0, %c0_1] : memref<128x16xf32, #tpu.memory_space<vmem>>, vector<128x16xf32>
    %c0_2 = arith.constant 0 : index
    %c0_3 = arith.constant 0 : index
    %2 = vector.load %arg3[%c0_2, %c0_3] : memref<16x64xf32, #tpu.memory_space<vmem>>, vector<16x64xf32>
    %cst = arith.constant dense<0.000000e+00> : vector<128x64xf32>
    %3 = tpu.matmul %1, %2, %cst {dimension_numbers = #tpu.dot_dimension_numbers<[1], [0], [0], [1], [0, 0, 1, 1], [], []>, precision = #tpu.contract_precision<fp32>} : vector<128x16xf32>, vector<16x64xf32>, vector<128x64xf32> -> vector<128x64xf32>
    %4 = math.cos %3 : vector<128x64xf32>
    %5 = vector.broadcast %0 : f32 to vector<128x64xf32>
    %6 = arith.mulf %5, %4 : vector<128x64xf32>
    %7 = math.sin %3 : vector<128x64xf32>
    %8 = vector.broadcast %0 : f32 to vector<128x64xf32>
    %9 = arith.mulf %8, %7 : vector<128x64xf32>
    %10 = tpu.concatenate %6, %9 in 1 : vector<128x64xf32>, vector<128x64xf32> -> vector<128x128xf32>
    %c0_4 = arith.constant 0 : index
    %c0_5 = arith.constant 0 : index
    %11 = vector.load %arg4[%c0_4, %c0_5] : memref<128x128xf32, #tpu.memory_space<vmem>>, vector<128x128xf32>
    tpu.vector_store %arg4[%c0_4, %c0_5], %10 {strides = array<i32>} : memref<128x128xf32, #tpu.memory_space<vmem>>, vector<128x128xf32>,
    return
  }
  func.func @transform_0(%arg0: i32) -> i32 {
    %c0_i32 = arith.constant 0 : i32
    %c0_i32_0 = arith.constant 0 : i32
    return %c0_i32 : i32
  }
  func.func @transform_1(%arg0: i32) -> (i32, i32) {
    %c0_i32 = arith.constant 0 : i32
    %c0_i32_0 = arith.constant 0 : i32
    return %arg0, %c0_i32 : i32, i32
  }
  func.func @transform_2(%arg0: i32) -> (i32, i32) {
    %c0_i32 = arith.constant 0 : i32
    %c0_i32_0 = arith.constant 0 : i32
    %c0_i32_1 = arith.constant 0 : i32
    return %c0_i32, %c0_i32_0 : i32, i32
  }
  func.func @transform_3(%arg0: i32) -> (i32, i32) {
    %c0_i32 = arith.constant 0 : i32
    %c0_i32_0 = arith.constant 0 : i32
    return %arg0, %c0_i32 : i32, i32
  }
}

</mosaic_0001>

<llo_original>
// kernel: tpu_custom_call.1
$region0: #{tpu_custom_call.1}
  #allocation0 [shape = 'u32[]', space=smem, size = 0x4, offset = 0x4, fixed_abs, tag = 'smem constant byte address 0x4 - core index']
  #allocation1 [shape = 'u32[144,128]{1,0:T(1,128)}', space=vmem, size = 0x12000, scoped, tag = 'internal scratch']
  #allocation2 [shape = 'f32[1]{0:T(128)S(6)}', space=smem, size = 0x200, scoped, tag = 'scoped memory for tpu_custom_call.1']
  %s0 = inlined_call_operand.<no memory space> [shape: f32[1], index: 0, kind: input, shape index: {}]
  %s1 = inlined_call_operand.vmem [shape: f32[128,16], index: 1, kind: input, shape index: {}]
  %s2 = inlined_call_operand.vmem [shape: f32[16,64], index: 2, kind: input, shape index: {}]
  %s3 = inlined_call_operand.hbm [shape: f32[128,128], index: 3, kind: output, shape index: {}]
  %s4 = sld [smem:[#allocation0]]
  $region22: #{tpu_custom_call.1} parent=0
    _
  %s6 = ssub.s32 1, %s4
  %s7 = scalar_select 0, %s6, %s4
  %8 = sst [smem:[#allocation2]] %s0
  $region1: #{tpu_custom_call.1} parent=0
    #allocation3 [shape = 'u8[65536]{0}', space=vmem, size = 0x10000, scoped, tag = 'output window, operand 0, single buffered']
    #allocation4 [shape = 's32[1]{0}', space=sflag, size = 0x4, scoped, tag = 'scoped memory for tpu_custom_call.1']
    %9 = vsyncpa [#allocation4], 0
    // Predicated region
    $region2: #{tpu_custom_call.1} parent=1 // pred_check
      _
    $region3: #{tpu_custom_call.1} parent=1 // pred_check_branch
      %11 = sbr.rel (0) target = $region5
    $region4: #{tpu_custom_call.1} parent=1 // pred_region
      _
    $region5: #{tpu_custom_call.1} parent=1 // pred_fallthru
      _
    // Predicated region
    $region6: #{tpu_custom_call.1} parent=1 // pred_check
      _
    $region7: #{tpu_custom_call.1} parent=1 // pred_check_branch
      %13 = sbr.rel (0) target = $region9
    $region8: #{tpu_custom_call.1} parent=1 // pred_region
      _
    $region9: #{tpu_custom_call.1} parent=1 // pred_fallthru
      _
    // Predicated region
    $region10: #{tpu_custom_call.1} parent=1 // pred_check
      _
    $region11: #{tpu_custom_call.1} parent=1 // pred_check_branch
      %15 = sbr.rel (0) target = $region13
    $region12: #{tpu_custom_call.1} parent=1 // pred_region
      _
    $region13: #{tpu_custom_call.1} parent=1 // pred_fallthru
      _
    %s16 = sld [smem:[#allocation2]]
    %v17 = vld [vmem:[%s1] sm:$0xff]
    %v18 = vld [vmem:[%s1 + $0x8] sm:$0xff]
    %v19 = vld [vmem:[%s1 + $0x10] sm:$0xff]
    %v20 = vld [vmem:[%s1 + $0x18] sm:$0xff]
    %v21 = vld [vmem:[%s1 + $0x20] sm:$0xff]
    %v22 = vld [vmem:[%s1 + $0x28] sm:$0xff]
    %v23 = vld [vmem:[%s1 + $0x30] sm:$0xff]
    %v24 = vld [vmem:[%s1 + $0x38] sm:$0xff]
    %v25 = vld [vmem:[%s1 + $0x40] sm:$0xff]
    %v26 = vld [vmem:[%s1 + $0x48] sm:$0xff]
    %v27 = vld [vmem:[%s1 + $0x50] sm:$0xff]
    %v28 = vld [vmem:[%s1 + $0x58] sm:$0xff]
    %v29 = vld [vmem:[%s1 + $0x60] sm:$0xff]
    %v30 = vld [vmem:[%s1 + $0x68] sm:$0xff]
    %v31 = vld [vmem:[%s1 + $0x70] sm:$0xff]
    %v32 = vld [vmem:[%s1 + $0x78] sm:$0xff]
    %v33 = vld [vmem:[%s2] sm:$0xff]
    %v34 = vld [vmem:[%s2 + $0x8] sm:$0xff]
    %vm35 = vcmask 130048
    %v37 = vsel %vm35, %v17, 0
    %v40 = vsel %vm35, %v18, 0
    %v43 = vsel %vm35, %v19, 0
    %v46 = vsel %vm35, %v20, 0
    %v49 = vsel %vm35, %v21, 0
    %v52 = vsel %vm35, %v22, 0
    %v55 = vsel %vm35, %v23, 0
    %v58 = vsel %vm35, %v24, 0
    %v61 = vsel %vm35, %v25, 0
    %v64 = vsel %vm35, %v26, 0
    %v67 = vsel %vm35, %v27, 0
    %v70 = vsel %vm35, %v28, 0
    %v73 = vsel %vm35, %v29, 0
    %v76 = vsel %vm35, %v30, 0
    %v79 = vsel %vm35, %v31, 0
    %v82 = vsel %vm35, %v32, 0
    %84 = vmatprep.subr.mxu0 0.0
    %85 = vmatpush1.msra.mxu0 0.0
    %86 = vmatprep.subr.mxu0 0.0
    %87 = vmatpush1.msra.mxu0 0.0
    %88 = vmatprep.subr.mxu0 0.0
    %89 = vmatpush1.msra.mxu0 0.0
    %90 = vmatprep.subr.mxu0 0.0
    %91 = vmatpush1.msra.mxu0 0.0
    %92 = vmatprep.subr.mxu0 0.0
    %93 = vmatpush1.msra.mxu0 0.0
    %94 = vmatprep.subr.mxu0 0.0
    %95 = vmatpush1.msra.mxu0 0.0
    %96 = vmatprep.subr.mxu0 0.0
    %97 = vmatpush1.msra.mxu0 0.0
    %98 = vmatprep.subr.mxu0 0.0
    %99 = vmatpush1.msra.mxu0 0.0
    %100 = vmatprep.subr.mxu0 0.0
    %101 = vmatpush1.msra.mxu0 0.0
    %102 = vmatprep.subr.mxu0 0.0
    %103 = vmatpush1.msra.mxu0 0.0
    %104 = vmatprep.subr.mxu0 0.0
    %105 = vmatpush1.msra.mxu0 0.0
    %106 = vmatprep.subr.mxu0 0.0
    %107 = vmatpush1.msra.mxu0 0.0
    %108 = vmatprep.subr.mxu0 0.0
    %109 = vmatpush1.msra.mxu0 0.0
    %110 = vmatprep.subr.mxu0 0.0
    %111 = vmatpush1.msra.mxu0 0.0
    %112 = vmatprep.subr.mxu0 0.0
    %v113 = vand.u32 %v34, 4294901760
    %114 = vmatpush1.msra.mxu0 %v113
    %115 = vmatprep.subr.mxu0 0.0
    %v116 = vand.u32 %v33, 4294901760
    %117 = vmatpush1.msra.mxu0 %v116
    %118 = vmatprep.subr.mxu0 0.0
    %119 = vmatpush2.msra.mxu0 0.0
    %120 = vmatprep.subr.mxu0 0.0
    %121 = vmatpush2.msra.mxu0 0.0
    %122 = vmatprep.subr.mxu0 0.0
    %123 = vmatpush2.msra.mxu0 0.0
    %124 = vmatprep.subr.mxu0 0.0
    %125 = vmatpush2.msra.mxu0 0.0
    %126 = vmatprep.subr.mxu0 0.0
    %127 = vmatpush2.msra.mxu0 0.0
    %128 = vmatprep.subr.mxu0 0.0
    %129 = vmatpush2.msra.mxu0 0.0
    %130 = vmatprep.subr.mxu0 0.0
    %131 = vmatpush2.msra.mxu0 0.0
    %132 = vmatprep.subr.mxu0 0.0
    %133 = vmatpush2.msra.mxu0 0.0
    %134 = vmatprep.subr.mxu0 0.0
    %135 = vmatpush2.msra.mxu0 0.0
    %136 = vmatprep.subr.mxu0 0.0
    %137 = vmatpush2.msra.mxu0 0.0
    %138 = vmatprep.subr.mxu0 0.0
    %139 = vmatpush2.msra.mxu0 0.0
    %140 = vmatprep.subr.mxu0 0.0
    %141 = vmatpush2.msra.mxu0 0.0
    %142 = vmatprep.subr.mxu0 0.0
    %143 = vmatpush2.msra.mxu0 0.0
    %144 = vmatprep.subr.mxu0 0.0
    %145 = vmatpush2.msra.mxu0 0.0
    %146 = vmatprep.subr.mxu0 0.0
    %147 = vmatpush2.msra.mxu0 0.0
    %148 = vmatprep.subr.mxu0 0.0
    %149 = vmatpush2.msra.mxu0 0.0
    %150 = vmatprep.mubr.f32.mxu0 0.0
    %v151 = vand.u32 %v37, 4294901760
    %v152 = vsub.f32 %v37, %v151
    %v153 = vand.u32 %v152, 4294901760
    %v154 = vsub.f32 %v152, %v153
    %v155 = vand.u32 %v154, 4294901760
    %156 = vmatmul.mubr.f32.gmra.mxu0 %v155
    %v157 = vpop.f32.mrf.mxu0
    %v158 = vadd.f32 0.0, %v157
    %v159 = vpop.f32.mrf.mxu0
    %160 = vmatprep.mubr.f32.mxu0 0.0
    %v161 = vand.u32 %v40, 4294901760
    %v162 = vsub.f32 %v40, %v161
    %v163 = vand.u32 %v162, 4294901760
    %v164 = vsub.f32 %v162, %v163
    %v165 = vand.u32 %v164, 4294901760
    %166 = vmatmul.mubr.f32.gmra.mxu0 %v165
    %v167 = vpop.f32.mrf.mxu0
    %v168 = vadd.f32 0.0, %v167
    %v169 = vpop.f32.mrf.mxu0
    %170 = vmatprep.mubr.f32.mxu0 0.0
    %v171 = vand.u32 %v43, 4294901760
    %v172 = vsub.f32 %v43, %v171
    %v173 = vand.u32 %v172, 4294901760
    %v174 = vsub.f32 %v172, %v173
    %v175 = vand.u32 %v174, 4294901760
    %176 = vmatmul.mubr.f32.gmra.mxu0 %v175
    %v177 = vpop.f32.mrf.mxu0
    %v178 = vadd.f32 0.0, %v177
    %v179 = vpop.f32.mrf.mxu0
    %180 = vmatprep.mubr.f32.mxu0 0.0
    %v181 = vand.u32 %v46, 4294901760
    %v182 = vsub.f32 %v46, %v181
    %v183 = vand.u32 %v182, 4294901760
    %v184 = vsub.f32 %v182, %v183
    %v185 = vand.u32 %v184, 4294901760
    %186 = vmatmul.mubr.f32.gmra.mxu0 %v185
    %v187 = vpop.f32.mrf.mxu0
    %v188 = vadd.f32 0.0, %v187
    %v189 = vpop.f32.mrf.mxu0
    %190 = vmatprep.mubr.f32.mxu0 0.0
    %v191 = vand.u32 %v49, 4294901760
    %v192 = vsub.f32 %v49, %v191
    %v193 = vand.u32 %v192, 4294901760
    %v194 = vsub.f32 %v192, %v193
    %v195 = vand.u32 %v194, 4294901760
    %196 = vmatmul.mubr.f32.gmra.mxu0 %v195
    %v197 = vpop.f32.mrf.mxu0
    %v198 = vadd.f32 0.0, %v197
    %v199 = vpop.f32.mrf.mxu0
    %200 = vmatprep.mubr.f32.mxu0 0.0
    %v201 = vand.u32 %v52, 4294901760
    %v202 = vsub.f32 %v52, %v201
    %v203 = vand.u32 %v202, 4294901760
    %v204 = vsub.f32 %v202, %v203
    %v205 = vand.u32 %v204, 4294901760
    %206 = vmatmul.mubr.f32.gmra.mxu0 %v205
    %v207 = vpop.f32.mrf.mxu0
    %v208 = vadd.f32 0.0, %v207
    %v209 = vpop.f32.mrf.mxu0
    %210 = vmatprep.mubr.f32.mxu0 0.0
    %v211 = vand.u32 %v55, 4294901760
    %v212 = vsub.f32 %v55, %v211
    %v213 = vand.u32 %v212, 4294901760
    %v214 = vsub.f32 %v212, %v213
    %v215 = vand.u32 %v214, 4294901760
    %216 = vmatmul.mubr.f32.gmra.mxu0 %v215
    %v217 = vpop.f32.mrf.mxu0
    %v218 = vadd.f32 0.0, %v217
    %v219 = vpop.f32.mrf.mxu0
    %220 = vmatprep.mubr.f32.mxu0 0.0
    %v221 = vand.u32 %v58, 4294901760
    %v222 = vsub.f32 %v58, %v221
    %v223 = vand.u32 %v222, 4294901760
    %v224 = vsub.f32 %v222, %v223
    %v225 = vand.u32 %v224, 4294901760
    %226 = vmatmul.mubr.f32.gmra.mxu0 %v225
    %v227 = vpop.f32.mrf.mxu0
    %v228 = vadd.f32 0.0, %v227
    %v229 = vpop.f32.mrf.mxu0
    %230 = vmatprep.mubr.f32.mxu0 0.0
    %v231 = vand.u32 %v61, 4294901760
    %v232 = vsub.f32 %v61, %v231
    %v233 = vand.u32 %v232, 4294901760
    %v234 = vsub.f32 %v232, %v233
    %v235 = vand.u32 %v234, 4294901760
    %236 = vmatmul.mubr.f32.gmra.mxu0 %v235
    %v237 = vpop.f32.mrf.mxu0
    %v238 = vadd.f32 0.0, %v237
    %v239 = vpop.f32.mrf.mxu0
    %240 = vmatprep.mubr.f32.mxu0 0.0
    %v241 = vand.u32 %v64, 4294901760
    %v242 = vsub.f32 %v64, %v241
    %v243 = vand.u32 %v242, 4294901760
    %v244 = vsub.f32 %v242, %v243
    %v245 = vand.u32 %v244, 4294901760
    %246 = vmatmul.mubr.f32.gmra.mxu0 %v245
    %v247 = vpop.f32.mrf.mxu0
    %v248 = vadd.f32 0.0, %v247
    %v249 = vpop.f32.mrf.mxu0
    %250 = vmatprep.mubr.f32.mxu0 0.0
    %v251 = vand.u32 %v67, 4294901760
    %v252 = vsub.f32 %v67, %v251
    %v253 = vand.u32 %v252, 4294901760
    %v254 = vsub.f32 %v252, %v253
    %v255 = vand.u32 %v254, 4294901760
    %256 = vmatmul.mubr.f32.gmra.mxu0 %v255
    %v257 = vpop.f32.mrf.mxu0
    %v258 = vadd.f32 0.0, %v257
    %v259 = vpop.f32.mrf.mxu0
    %260 = vmatprep.mubr.f32.mxu0 0.0
    %v261 = vand.u32 %v70, 4294901760
    %v262 = vsub.f32 %v70, %v261
    %v263 = vand.u32 %v262, 4294901760
    %v264 = vsub.f32 %v262, %v263
    %v265 = vand.u32 %v264, 4294901760
    %266 = vmatmul.mubr.f32.gmra.mxu0 %v265
    %v267 = vpop.f32.mrf.mxu0
    %v268 = vadd.f32 0.0, %v267
    %v269 = vpop.f32.mrf.mxu0
    %270 = vmatprep.mubr.f32.mxu0 0.0
    %v271 = vand.u32 %v73, 4294901760
    %v272 = vsub.f32 %v73, %v271
    %v273 = vand.u32 %v272, 4294901760
    %v274 = vsub.f32 %v272, %v273
    %v275 = vand.u32 %v274, 4294901760
    %276 = vmatmul.mubr.f32.gmra.mxu0 %v275
    %v277 = vpop.f32.mrf.mxu0
    %v278 = vadd.f32 0.0, %v277
    %v279 = vpop.f32.mrf.mxu0
    %280 = vmatprep.mubr.f32.mxu0 0.0
    %v281 = vand.u32 %v76, 4294901760
    %v282 = vsub.f32 %v76, %v281
    %v283 = vand.u32 %v282, 4294901760
    %v284 = vsub.f32 %v282, %v283
    %v285 = vand.u32 %v284, 4294901760
    %286 = vmatmul.mubr.f32.gmra.mxu0 %v285
    %v287 = vpop.f32.mrf.mxu0
    %v288 = vadd.f32 0.0, %v287
    %v289 = vpop.f32.mrf.mxu0
    %290 = vmatprep.mubr.f32.mxu0 0.0
    %v291 = vand.u32 %v79, 4294901760
    %v292 = vsub.f32 %v79, %v291
    %v293 = vand.u32 %v292, 4294901760
    %v294 = vsub.f32 %v292, %v293
    %v295 = vand.u32 %v294, 4294901760
    %296 = vmatmul.mubr.f32.gmra.mxu0 %v295
    %v297 = vpop.f32.mrf.mxu0
    %v298 = vadd.f32 0.0, %v297
    %v299 = vpop.f32.mrf.mxu0
    %300 = vmatprep.mubr.f32.mxu0 0.0
    %v301 = vand.u32 %v82, 4294901760
    %v302 = vsub.f32 %v82, %v301
    %v303 = vand.u32 %v302, 4294901760
    %v304 = vsub.f32 %v302, %v303
    %v305 = vand.u32 %v304, 4294901760
    %306 = vmatmul.mubr.f32.gmra.mxu0 %v305
    %v307 = vpop.f32.mrf.mxu0
    %v308 = vadd.f32 0.0, %v307
    %v309 = vpop.f32.mrf.mxu0
    %310 = vdwg.mxu0
    %311 = vmatprep.subr.mxu0 0.0
    %312 = vmatpush1.msra.mxu0 0.0
    %313 = vmatprep.subr.mxu0 0.0
    %314 = vmatpush1.msra.mxu0 0.0
    %315 = vmatprep.subr.mxu0 0.0
    %316 = vmatpush1.msra.mxu0 0.0
    %317 = vmatprep.subr.mxu0 0.0
    %318 = vmatpush1.msra.mxu0 0.0
    %319 = vmatprep.subr.mxu0 0.0
    %320 = vmatpush1.msra.mxu0 0.0
    %321 = vmatprep.subr.mxu0 0.0
    %322 = vmatpush1.msra.mxu0 0.0
    %323 = vmatprep.subr.mxu0 0.0
    %324 = vmatpush1.msra.mxu0 0.0
    %325 = vmatprep.subr.mxu0 0.0
    %326 = vmatpush1.msra.mxu0 0.0
    %327 = vmatprep.subr.mxu0 0.0
    %328 = vmatpush1.msra.mxu0 0.0
    %329 = vmatprep.subr.mxu0 0.0
    %330 = vmatpush1.msra.mxu0 0.0
    %331 = vmatprep.subr.mxu0 0.0
    %332 = vmatpush1.msra.mxu0 0.0
    %333 = vmatprep.subr.mxu0 0.0
    %334 = vmatpush1.msra.mxu0 0.0
    %335 = vmatprep.subr.mxu0 0.0
    %336 = vmatpush1.msra.mxu0 0.0
    %337 = vmatprep.subr.mxu0 0.0
    %338 = vmatpush1.msra.mxu0 0.0
    %339 = vmatprep.subr.mxu0 0.0
    %v340 = vand.u32 %v34, 4294901760
    %v341 = vsub.f32 %v34, %v340
    %v342 = vand.u32 %v341, 4294901760
    %v343 = vsub.f32 %v341, %v342
    %v344 = vand.u32 %v343, 4294901760
    %345 = vmatpush1.msra.mxu0 %v344
    %346 = vmatprep.subr.mxu0 0.0
    %v347 = vand.u32 %v33, 4294901760
    %v348 = vsub.f32 %v33, %v347
    %v349 = vand.u32 %v348, 4294901760
    %v350 = vsub.f32 %v348, %v349
    %v351 = vand.u32 %v350, 4294901760
    %352 = vmatpush1.msra.mxu0 %v351
    %353 = vmatprep.subr.mxu0 0.0
    %354 = vmatpush2.msra.mxu0 0.0
    %355 = vmatprep.subr.mxu0 0.0
    %356 = vmatpush2.msra.mxu0 0.0
    %357 = vmatprep.subr.mxu0 0.0
    %358 = vmatpush2.msra.mxu0 0.0
    %359 = vmatprep.subr.mxu0 0.0
    %360 = vmatpush2.msra.mxu0 0.0
    %361 = vmatprep.subr.mxu0 0.0
    %362 = vmatpush2.msra.mxu0 0.0
    %363 = vmatprep.subr.mxu0 0.0
    %364 = vmatpush2.msra.mxu0 0.0
    %365 = vmatprep.subr.mxu0 0.0
    %366 = vmatpush2.msra.mxu0 0.0
    %367 = vmatprep.subr.mxu0 0.0
    %368 = vmatpush2.msra.mxu0 0.0
    %369 = vmatprep.subr.mxu0 0.0
    %370 = vmatpush2.msra.mxu0 0.0
    %371 = vmatprep.subr.mxu0 0.0
    %372 = vmatpush2.msra.mxu0 0.0
    %373 = vmatprep.subr.mxu0 0.0
    %374 = vmatpush2.msra.mxu0 0.0
    %375 = vmatprep.subr.mxu0 0.0
    %376 = vmatpush2.msra.mxu0 0.0
    %377 = vmatprep.subr.mxu0 0.0
    %378 = vmatpush2.msra.mxu0 0.0
    %379 = vmatprep.subr.mxu0 0.0
    %380 = vmatpush2.msra.mxu0 0.0
    %381 = vmatprep.subr.mxu0 0.0
    %382 = vmatpush2.msra.mxu0 0.0
    %383 = vmatprep.subr.mxu0 0.0
    %384 = vmatpush2.msra.mxu0 0.0
    %385 = vmatprep.mubr.f32.mxu0 0.0
    %v386 = vand.u32 %v37, 4294901760
    %387 = vmatmul.mubr.f32.gmra.mxu0 %v386
    %v388 = vpop.f32.mrf.mxu0
    %v389 = vadd.f32 %v158, %v388
    %v390 = vpop.f32.mrf.mxu0
    %391 = vmatprep.mubr.f32.mxu0 0.0
    %v392 = vand.u32 %v40, 4294901760
    %393 = vmatmul.mubr.f32.gmra.mxu0 %v392
    %v394 = vpop.f32.mrf.mxu0
    %v395 = vadd.f32 %v168, %v394
    %v396 = vpop.f32.mrf.mxu0
    %397 = vmatprep.mubr.f32.mxu0 0.0
    %v398 = vand.u32 %v43, 4294901760
    %399 = vmatmul.mubr.f32.gmra.mxu0 %v398
    %v400 = vpop.f32.mrf.mxu0
    %v401 = vadd.f32 %v178, %v400
    %v402 = vpop.f32.mrf.mxu0
    %403 = vmatprep.mubr.f32.mxu0 0.0
    %v404 = vand.u32 %v46, 4294901760
    %405 = vmatmul.mubr.f32.gmra.mxu0 %v404
    %v406 = vpop.f32.mrf.mxu0
    %v407 = vadd.f32 %v188, %v406
    %v408 = vpop.f32.mrf.mxu0
    %409 = vmatprep.mubr.f32.mxu0 0.0
    %v410 = vand.u32 %v49, 4294901760
    %411 = vmatmul.mubr.f32.gmra.mxu0 %v410
    %v412 = vpop.f32.mrf.mxu0
    %v413 = vadd.f32 %v198, %v412
    %v414 = vpop.f32.mrf.mxu0
    %415 = vmatprep.mubr.f32.mxu0 0.0
    %v416 = vand.u32 %v52, 4294901760
    %417 = vmatmul.mubr.f32.gmra.mxu0 %v416
    %v418 = vpop.f32.mrf.mxu0
    %v419 = vadd.f32 %v208, %v418
    %v420 = vpop.f32.mrf.mxu0
    %421 = vmatprep.mubr.f32.mxu0 0.0
    %v422 = vand.u32 %v55, 4294901760
    %423 = vmatmul.mubr.f32.gmra.mxu0 %v422
    %v424 = vpop.f32.mrf.mxu0
    %v425 = vadd.f32 %v218, %v424
    %v426 = vpop.f32.mrf.mxu0
    %427 = vmatprep.mubr.f32.mxu0 0.0
    %v428 = vand.u32 %v58, 4294901760
    %429 = vmatmul.mubr.f32.gmra.mxu0 %v428
    %v430 = vpop.f32.mrf.mxu0
    %v431 = vadd.f32 %v228, %v430
    %v432 = vpop.f32.mrf.mxu0
    %433 = vmatprep.mubr.f32.mxu0 0.0
    %v434 = vand.u32 %v61, 4294901760
    %435 = vmatmul.mubr.f32.gmra.mxu0 %v434
    %v436 = vpop.f32.mrf.mxu0
    %v437 = vadd.f32 %v238, %v436
    %v438 = vpop.f32.mrf.mxu0
    %439 = vmatprep.mubr.f32.mxu0 0.0
    %v440 = vand.u32 %v64, 4294901760
    %441 = vmatmul.mubr.f32.gmra.mxu0 %v440
    %v442 = vpop.f32.mrf.mxu0
    %v443 = vadd.f32 %v248, %v442
    %v444 = vpop.f32.mrf.mxu0
    %445 = vmatprep.mubr.f32.mxu0 0.0
    %v446 = vand.u32 %v67, 4294901760
    %447 = vmatmul.mubr.f32.gmra.mxu0 %v446
    %v448 = vpop.f32.mrf.mxu0
    %v449 = vadd.f32 %v258, %v448
    %v450 = vpop.f32.mrf.mxu0
    %451 = vmatprep.mubr.f32.mxu0 0.0
    %v452 = vand.u32 %v70, 4294901760
    %453 = vmatmul.mubr.f32.gmra.mxu0 %v452
    %v454 = vpop.f32.mrf.mxu0
    %v455 = vadd.f32 %v268, %v454
    %v456 = vpop.f32.mrf.mxu0
    %457 = vmatprep.mubr.f32.mxu0 0.0
    %v458 = vand.u32 %v73, 4294901760
    %459 = vmatmul.mubr.f32.gmra.mxu0 %v458
    %v460 = vpop.f32.mrf.mxu0
    %v461 = vadd.f32 %v278, %v460
    %v462 = vpop.f32.mrf.mxu0
    %463 = vmatprep.mubr.f32.mxu0 0.0
    %v464 = vand.u32 %v76, 4294901760
    %465 = vmatmul.mubr.f32.gmra.mxu0 %v464
    %v466 = vpop.f32.mrf.mxu0
    %v467 = vadd.f32 %v288, %v466
    %v468 = vpop.f32.mrf.mxu0
    %469 = vmatprep.mubr.f32.mxu0 0.0
    %v470 = vand.u32 %v79, 4294901760
    %471 = vmatmul.mubr.f32.gmra.mxu0 %v470
    %v472 = vpop.f32.mrf.mxu0
    %v473 = vadd.f32 %v298, %v472
    %v474 = vpop.f32.mrf.mxu0
    %475 = vmatprep.mubr.f32.mxu0 0.0
    %v476 = vand.u32 %v82, 4294901760
    %477 = vmatmul.mubr.f32.gmra.mxu0 %v476
    %v478 = vpop.f32.mrf.mxu0
    %v479 = vadd.f32 %v308, %v478
    %v480 = vpop.f32.mrf.mxu0
    %481 = vdwg.mxu0
    %482 = vmatprep.subr.mxu0 0.0
    %483 = vmatpush1.msra.mxu0 0.0
    %484 = vmatprep.subr.mxu0 0.0
    %485 = vmatpush1.msra.mxu0 0.0
    %486 = vmatprep.subr.mxu0 0.0
    %487 = vmatpush1.msra.mxu0 0.0
    %488 = vmatprep.subr.mxu0 0.0
    %489 = vmatpush1.msra.mxu0 0.0
    %490 = vmatprep.subr.mxu0 0.0
    %491 = vmatpush1.msra.mxu0 0.0
    %492 = vmatprep.subr.mxu0 0.0
    %493 = vmatpush1.msra.mxu0 0.0
    %494 = vmatprep.subr.mxu0 0.0
    %495 = vmatpush1.msra.mxu0 0.0
    %496 = vmatprep.subr.mxu0 0.0
    %497 = vmatpush1.msra.mxu0 0.0
    %498 = vmatprep.subr.mxu0 0.0
    %499 = vmatpush1.msra.mxu0 0.0
    %500 = vmatprep.subr.mxu0 0.0
    %501 = vmatpush1.msra.mxu0 0.0
    %502 = vmatprep.subr.mxu0 0.0
    %503 = vmatpush1.msra.mxu0 0.0
    %504 = vmatprep.subr.mxu0 0.0
    %505 = vmatpush1.msra.mxu0 0.0
    %506 = vmatprep.subr.mxu0 0.0
    %507 = vmatpush1.msra.mxu0 0.0
    %508 = vmatprep.subr.mxu0 0.0
    %509 = vmatpush1.msra.mxu0 0.0
    %510 = vmatprep.subr.mxu0 0.0
    %v511 = vand.u32 %v34, 4294901760
    %v512 = vsub.f32 %v34, %v511
    %513 = vmatpush1.msra.mxu0 %v512
    %514 = vmatprep.subr.mxu0 0.0
    %v515 = vand.u32 %v33, 4294901760
    %v516 = vsub.f32 %v33, %v515
    %517 = vmatpush1.msra.mxu0 %v516
    %518 = vmatprep.subr.mxu0 0.0
    %519 = vmatpush2.msra.mxu0 0.0
    %520 = vmatprep.subr.mxu0 0.0
    %521 = vmatpush2.msra.mxu0 0.0
    %522 = vmatprep.subr.mxu0 0.0
    %523 = vmatpush2.msra.mxu0 0.0
    %524 = vmatprep.subr.mxu0 0.0
    %525 = vmatpush2.msra.mxu0 0.0
    %526 = vmatprep.subr.mxu0 0.0
    %527 = vmatpush2.msra.mxu0 0.0
    %528 = vmatprep.subr.mxu0 0.0
    %529 = vmatpush2.msra.mxu0 0.0
    %530 = vmatprep.subr.mxu0 0.0
    %531 = vmatpush2.msra.mxu0 0.0
    %532 = vmatprep.subr.mxu0 0.0
    %533 = vmatpush2.msra.mxu0 0.0
    %534 = vmatprep.subr.mxu0 0.0
    %535 = vmatpush2.msra.mxu0 0.0
    %536 = vmatprep.subr.mxu0 0.0
    %537 = vmatpush2.msra.mxu0 0.0
    %538 = vmatprep.subr.mxu0 0.0
    %539 = vmatpush2.msra.mxu0 0.0
    %540 = vmatprep.subr.mxu0 0.0
    %541 = vmatpush2.msra.mxu0 0.0
    %542 = vmatprep.subr.mxu0 0.0
    %543 = vmatpush2.msra.mxu0 0.0
    %544 = vmatprep.subr.mxu0 0.0
    %545 = vmatpush2.msra.mxu0 0.0
    %546 = vmatprep.subr.mxu0 0.0
    %547 = vmatpush2.msra.mxu0 0.0
    %548 = vmatprep.subr.mxu0 0.0
    %549 = vmatpush2.msra.mxu0 0.0
    %550 = vmatprep.mubr.f32.mxu0 0.0
    %v551 = vand.u32 %v37, 4294901760
    %v552 = vsub.f32 %v37, %v551
    %553 = vmatmul.mubr.f32.gmra.mxu0 %v552
    %v554 = vpop.f32.mrf.mxu0
    %v555 = vadd.f32 %v389, %v554
    %v556 = vpop.f32.mrf.mxu0
    %557 = vmatprep.mubr.f32.mxu0 0.0
    %v558 = vand.u32 %v40, 4294901760
    %v559 = vsub.f32 %v40, %v558
    %560 = vmatmul.mubr.f32.gmra.mxu0 %v559
    %v561 = vpop.f32.mrf.mxu0
    %v562 = vadd.f32 %v395, %v561
    %v563 = vpop.f32.mrf.mxu0
    %564 = vmatprep.mubr.f32.mxu0 0.0
    %v565 = vand.u32 %v43, 4294901760
    %v566 = vsub.f32 %v43, %v565
    %567 = vmatmul.mubr.f32.gmra.mxu0 %v566
    %v568 = vpop.f32.mrf.mxu0
    %v569 = vadd.f32 %v401, %v568
    %v570 = vpop.f32.mrf.mxu0
    %571 = vmatprep.mubr.f32.mxu0 0.0
    %v572 = vand.u32 %v46, 4294901760
    %v573 = vsub.f32 %v46, %v572
    %574 = vmatmul.mubr.f32.gmra.mxu0 %v573
    %v575 = vpop.f32.mrf.mxu0
    %v576 = vadd.f32 %v407, %v575
    %v577 = vpop.f32.mrf.mxu0
    %578 = vmatprep.mubr.f32.mxu0 0.0
    %v579 = vand.u32 %v49, 4294901760
    %v580 = vsub.f32 %v49, %v579
    %581 = vmatmul.mubr.f32.gmra.mxu0 %v580
    %v582 = vpop.f32.mrf.mxu0
    %v583 = vadd.f32 %v413, %v582
    %v584 = vpop.f32.mrf.mxu0
    %585 = vmatprep.mubr.f32.mxu0 0.0
    %v586 = vand.u32 %v52, 4294901760
    %v587 = vsub.f32 %v52, %v586
    %588 = vmatmul.mubr.f32.gmra.mxu0 %v587
    %v589 = vpop.f32.mrf.mxu0
    %v590 = vadd.f32 %v419, %v589
    %v591 = vpop.f32.mrf.mxu0
    %592 = vmatprep.mubr.f32.mxu0 0.0
    %v593 = vand.u32 %v55, 4294901760
    %v594 = vsub.f32 %v55, %v593
    %595 = vmatmul.mubr.f32.gmra.mxu0 %v594
    %v596 = vpop.f32.mrf.mxu0
    %v597 = vadd.f32 %v425, %v596
    %v598 = vpop.f32.mrf.mxu0
    %599 = vmatprep.mubr.f32.mxu0 0.0
    %v600 = vand.u32 %v58, 4294901760
    %v601 = vsub.f32 %v58, %v600
    %602 = vmatmul.mubr.f32.gmra.mxu0 %v601
    %v603 = vpop.f32.mrf.mxu0
    %v604 = vadd.f32 %v431, %v603
    %v605 = vpop.f32.mrf.mxu0
    %606 = vmatprep.mubr.f32.mxu0 0.0
    %v607 = vand.u32 %v61, 4294901760
    %v608 = vsub.f32 %v61, %v607
    %609 = vmatmul.mubr.f32.gmra.mxu0 %v608
    %v610 = vpop.f32.mrf.mxu0
    %v611 = vadd.f32 %v437, %v610
    %v612 = vpop.f32.mrf.mxu0
    %613 = vmatprep.mubr.f32.mxu0 0.0
    %v614 = vand.u32 %v64, 4294901760
    %v615 = vsub.f32 %v64, %v614
    %616 = vmatmul.mubr.f32.gmra.mxu0 %v615
    %v617 = vpop.f32.mrf.mxu0
    %v618 = vadd.f32 %v443, %v617
    %v619 = vpop.f32.mrf.mxu0
    %620 = vmatprep.mubr.f32.mxu0 0.0
    %v621 = vand.u32 %v67, 4294901760
    %v622 = vsub.f32 %v67, %v621
    %623 = vmatmul.mubr.f32.gmra.mxu0 %v622
    %v624 = vpop.f32.mrf.mxu0
    %v625 = vadd.f32 %v449, %v624
    %v626 = vpop.f32.mrf.mxu0
    %627 = vmatprep.mubr.f32.mxu0 0.0
    %v628 = vand.u32 %v70, 4294901760
    %v629 = vsub.f32 %v70, %v628
    %630 = vmatmul.mubr.f32.gmra.mxu0 %v629
    %v631 = vpop.f32.mrf.mxu0
    %v632 = vadd.f32 %v455, %v631
    %v633 = vpop.f32.mrf.mxu0
    %634 = vmatprep.mubr.f32.mxu0 0.0
    %v635 = vand.u32 %v73, 4294901760
    %v636 = vsub.f32 %v73, %v635
    %637 = vmatmul.mubr.f32.gmra.mxu0 %v636
    %v638 = vpop.f32.mrf.mxu0
    %v639 = vadd.f32 %v461, %v638
    %v640 = vpop.f32.mrf.mxu0
    %641 = vmatprep.mubr.f32.mxu0 0.0
    %v642 = vand.u32 %v76, 4294901760
    %v643 = vsub.f32 %v76, %v642
    %644 = vmatmul.mubr.f32.gmra.mxu0 %v643
    %v645 = vpop.f32.mrf.mxu0
    %v646 = vadd.f32 %v467, %v645
    %v647 = vpop.f32.mrf.mxu0
    %648 = vmatprep.mubr.f32.mxu0 0.0
    %v649 = vand.u32 %v79, 4294901760
    %v650 = vsub.f32 %v79, %v649
    %651 = vmatmul.mubr.f32.gmra.mxu0 %v650
    %v652 = vpop.f32.mrf.mxu0
    %v653 = vadd.f32 %v473, %v652
    %v654 = vpop.f32.mrf.mxu0
    %655 = vmatprep.mubr.f32.mxu0 0.0
    %v656 = vand.u32 %v82, 4294901760
    %v657 = vsub.f32 %v82, %v656
    %658 = vmatmul.mubr.f32.gmra.mxu0 %v657
    %v659 = vpop.f32.mrf.mxu0
    %v660 = vadd.f32 %v479, %v659
    %v661 = vpop.f32.mrf.mxu0
    %662 = vdwg.mxu0
    %663 = vmatprep.subr.mxu0 0.0
    %664 = vmatpush1.msra.mxu0 0.0
    %665 = vmatprep.subr.mxu0 0.0
    %666 = vmatpush1.msra.mxu0 0.0
    %667 = vmatprep.subr.mxu0 0.0
    %668 = vmatpush1.msra.mxu0 0.0
    %669 = vmatprep.subr.mxu0 0.0
    %670 = vmatpush1.msra.mxu0 0.0
    %671 = vmatprep.subr.mxu0 0.0
    %672 = vmatpush1.msra.mxu0 0.0
    %673 = vmatprep.subr.mxu0 0.0
    %674 = vmatpush1.msra.mxu0 0.0
    %675 = vmatprep.subr.mxu0 0.0
    %676 = vmatpush1.msra.mxu0 0.0
    %677 = vmatprep.subr.mxu0 0.0
    %678 = vmatpush1.msra.mxu0 0.0
    %679 = vmatprep.subr.mxu0 0.0
    %680 = vmatpush1.msra.mxu0 0.0
    %681 = vmatprep.subr.mxu0 0.0
    %682 = vmatpush1.msra.mxu0 0.0
    %683 = vmatprep.subr.mxu0 0.0
    %684 = vmatpush1.msra.mxu0 0.0
    %685 = vmatprep.subr.mxu0 0.0
    %686 = vmatpush1.msra.mxu0 0.0
    %687 = vmatprep.subr.mxu0 0.0
    %688 = vmatpush1.msra.mxu0 0.0
    %689 = vmatprep.subr.mxu0 0.0
    %690 = vmatpush1.msra.mxu0 0.0
    %691 = vmatprep.subr.mxu0 0.0
    %v692 = vand.u32 %v34, 4294901760
    %693 = vmatpush1.msra.mxu0 %v692
    %694 = vmatprep.subr.mxu0 0.0
    %v695 = vand.u32 %v33, 4294901760
    %696 = vmatpush1.msra.mxu0 %v695
    %697 = vmatprep.subr.mxu0 0.0
    %698 = vmatpush2.msra.mxu0 0.0
    %699 = vmatprep.subr.mxu0 0.0
    %700 = vmatpush2.msra.mxu0 0.0
    %701 = vmatprep.subr.mxu0 0.0
    %702 = vmatpush2.msra.mxu0 0.0
    %703 = vmatprep.subr.mxu0 0.0
    %704 = vmatpush2.msra.mxu0 0.0
    %705 = vmatprep.subr.mxu0 0.0
    %706 = vmatpush2.msra.mxu0 0.0
    %707 = vmatprep.subr.mxu0 0.0
    %708 = vmatpush2.msra.mxu0 0.0
    %709 = vmatprep.subr.mxu0 0.0
    %710 = vmatpush2.msra.mxu0 0.0
    %711 = vmatprep.subr.mxu0 0.0
    %712 = vmatpush2.msra.mxu0 0.0
    %713 = vmatprep.subr.mxu0 0.0
    %714 = vmatpush2.msra.mxu0 0.0
    %715 = vmatprep.subr.mxu0 0.0
    %716 = vmatpush2.msra.mxu0 0.0
    %717 = vmatprep.subr.mxu0 0.0
    %718 = vmatpush2.msra.mxu0 0.0
    %719 = vmatprep.subr.mxu0 0.0
    %720 = vmatpush2.msra.mxu0 0.0
    %721 = vmatprep.subr.mxu0 0.0
    %722 = vmatpush2.msra.mxu0 0.0
    %723 = vmatprep.subr.mxu0 0.0
    %724 = vmatpush2.msra.mxu0 0.0
    %725 = vmatprep.subr.mxu0 0.0
    %726 = vmatpush2.msra.mxu0 0.0
    %727 = vmatprep.subr.mxu0 0.0
    %728 = vmatpush2.msra.mxu0 0.0
    %729 = vmatprep.mubr.f32.mxu0 0.0
    %v730 = vand.u32 %v37, 4294901760
    %v731 = vsub.f32 %v37, %v730
    %v732 = vand.u32 %v731, 4294901760
    %733 = vmatmul.mubr.f32.gmra.mxu0 %v732
    %v734 = vpop.f32.mrf.mxu0
    %v735 = vadd.f32 %v555, %v734
    %v736 = vpop.f32.mrf.mxu0
    %737 = vmatprep.mubr.f32.mxu0 0.0
    %v738 = vand.u32 %v40, 4294901760
    %v739 = vsub.f32 %v40, %v738
    %v740 = vand.u32 %v739, 4294901760
    %741 = vmatmul.mubr.f32.gmra.mxu0 %v740
    %v742 = vpop.f32.mrf.mxu0
    %v743 = vadd.f32 %v562, %v742
    %v744 = vpop.f32.mrf.mxu0
    %745 = vmatprep.mubr.f32.mxu0 0.0
    %v746 = vand.u32 %v43, 4294901760
    %v747 = vsub.f32 %v43, %v746
    %v748 = vand.u32 %v747, 4294901760
    %749 = vmatmul.mubr.f32.gmra.mxu0 %v748
    %v750 = vpop.f32.mrf.mxu0
    %v751 = vadd.f32 %v569, %v750
    %v752 = vpop.f32.mrf.mxu0
    %753 = vmatprep.mubr.f32.mxu0 0.0
    %v754 = vand.u32 %v46, 4294901760
    %v755 = vsub.f32 %v46, %v754
    %v756 = vand.u32 %v755, 4294901760
    %757 = vmatmul.mubr.f32.gmra.mxu0 %v756
    %v758 = vpop.f32.mrf.mxu0
    %v759 = vadd.f32 %v576, %v758
    %v760 = vpop.f32.mrf.mxu0
    %761 = vmatprep.mubr.f32.mxu0 0.0
    %v762 = vand.u32 %v49, 4294901760
    %v763 = vsub.f32 %v49, %v762
    %v764 = vand.u32 %v763, 4294901760
    %765 = vmatmul.mubr.f32.gmra.mxu0 %v764
    %v766 = vpop.f32.mrf.mxu0
    %v767 = vadd.f32 %v583, %v766
    %v768 = vpop.f32.mrf.mxu0
    %769 = vmatprep.mubr.f32.mxu0 0.0
    %v770 = vand.u32 %v52, 4294901760
    %v771 = vsub.f32 %v52, %v770
    %v772 = vand.u32 %v771, 4294901760
    %773 = vmatmul.mubr.f32.gmra.mxu0 %v772
    %v774 = vpop.f32.mrf.mxu0
    %v775 = vadd.f32 %v590, %v774
    %v776 = vpop.f32.mrf.mxu0
    %777 = vmatprep.mubr.f32.mxu0 0.0
    %v778 = vand.u32 %v55, 4294901760
    %v779 = vsub.f32 %v55, %v778
    %v780 = vand.u32 %v779, 4294901760
    %781 = vmatmul.mubr.f32.gmra.mxu0 %v780
    %v782 = vpop.f32.mrf.mxu0
    %v783 = vadd.f32 %v597, %v782
    %v784 = vpop.f32.mrf.mxu0
    %785 = vmatprep.mubr.f32.mxu0 0.0
    %v786 = vand.u32 %v58, 4294901760
    %v787 = vsub.f32 %v58, %v786
    %v788 = vand.u32 %v787, 4294901760
    %789 = vmatmul.mubr.f32.gmra.mxu0 %v788
    %v790 = vpop.f32.mrf.mxu0
    %v791 = vadd.f32 %v604, %v790
    %v792 = vpop.f32.mrf.mxu0
    %793 = vmatprep.mubr.f32.mxu0 0.0
    %v794 = vand.u32 %v61, 4294901760
    %v795 = vsub.f32 %v61, %v794
    %v796 = vand.u32 %v795, 4294901760
    %797 = vmatmul.mubr.f32.gmra.mxu0 %v796
    %v798 = vpop.f32.mrf.mxu0
    %v799 = vadd.f32 %v611, %v798
    %v800 = vpop.f32.mrf.mxu0
    %801 = vmatprep.mubr.f32.mxu0 0.0
    %v802 = vand.u32 %v64, 4294901760
    %v803 = vsub.f32 %v64, %v802
    %v804 = vand.u32 %v803, 4294901760
    %805 = vmatmul.mubr.f32.gmra.mxu0 %v804
    %v806 = vpop.f32.mrf.mxu0
    %v807 = vadd.f32 %v618, %v806
    %v808 = vpop.f32.mrf.mxu0
    %809 = vmatprep.mubr.f32.mxu0 0.0
    %v810 = vand.u32 %v67, 4294901760
    %v811 = vsub.f32 %v67, %v810
    %v812 = vand.u32 %v811, 4294901760
    %813 = vmatmul.mubr.f32.gmra.mxu0 %v812
    %v814 = vpop.f32.mrf.mxu0
    %v815 = vadd.f32 %v625, %v814
    %v816 = vpop.f32.mrf.mxu0
    %817 = vmatprep.mubr.f32.mxu0 0.0
    %v818 = vand.u32 %v70, 4294901760
    %v819 = vsub.f32 %v70, %v818
    %v820 = vand.u32 %v819, 4294901760
    %821 = vmatmul.mubr.f32.gmra.mxu0 %v820
    %v822 = vpop.f32.mrf.mxu0
    %v823 = vadd.f32 %v632, %v822
    %v824 = vpop.f32.mrf.mxu0
    %825 = vmatprep.mubr.f32.mxu0 0.0
    %v826 = vand.u32 %v73, 4294901760
    %v827 = vsub.f32 %v73, %v826
    %v828 = vand.u32 %v827, 4294901760
    %829 = vmatmul.mubr.f32.gmra.mxu0 %v828
    %v830 = vpop.f32.mrf.mxu0
    %v831 = vadd.f32 %v639, %v830
    %v832 = vpop.f32.mrf.mxu0
    %833 = vmatprep.mubr.f32.mxu0 0.0
    %v834 = vand.u32 %v76, 4294901760
    %v835 = vsub.f32 %v76, %v834
    %v836 = vand.u32 %v835, 4294901760
    %837 = vmatmul.mubr.f32.gmra.mxu0 %v836
    %v838 = vpop.f32.mrf.mxu0
    %v839 = vadd.f32 %v646, %v838
    %v840 = vpop.f32.mrf.mxu0
    %841 = vmatprep.mubr.f32.mxu0 0.0
    %v842 = vand.u32 %v79, 4294901760
    %v843 = vsub.f32 %v79, %v842
    %v844 = vand.u32 %v843, 4294901760
    %845 = vmatmul.mubr.f32.gmra.mxu0 %v844
    %v846 = vpop.f32.mrf.mxu0
    %v847 = vadd.f32 %v653, %v846
    %v848 = vpop.f32.mrf.mxu0
    %849 = vmatprep.mubr.f32.mxu0 0.0
    %v850 = vand.u32 %v82, 4294901760
    %v851 = vsub.f32 %v82, %v850
    %v852 = vand.u32 %v851, 4294901760
    %853 = vmatmul.mubr.f32.gmra.mxu0 %v852
    %v854 = vpop.f32.mrf.mxu0
    %v855 = vadd.f32 %v660, %v854
    %v856 = vpop.f32.mrf.mxu0
    %857 = vdwg.mxu0
    %858 = vmatprep.subr.mxu0 0.0
    %859 = vmatpush1.msra.mxu0 0.0
    %860 = vmatprep.subr.mxu0 0.0
    %861 = vmatpush1.msra.mxu0 0.0
    %862 = vmatprep.subr.mxu0 0.0
    %863 = vmatpush1.msra.mxu0 0.0
    %864 = vmatprep.subr.mxu0 0.0
    %865 = vmatpush1.msra.mxu0 0.0
    %866 = vmatprep.subr.mxu0 0.0
    %867 = vmatpush1.msra.mxu0 0.0
    %868 = vmatprep.subr.mxu0 0.0
    %869 = vmatpush1.msra.mxu0 0.0
    %870 = vmatprep.subr.mxu0 0.0
    %871 = vmatpush1.msra.mxu0 0.0
    %872 = vmatprep.subr.mxu0 0.0
    %873 = vmatpush1.msra.mxu0 0.0
    %874 = vmatprep.subr.mxu0 0.0
    %875 = vmatpush1.msra.mxu0 0.0
    %876 = vmatprep.subr.mxu0 0.0
    %877 = vmatpush1.msra.mxu0 0.0
    %878 = vmatprep.subr.mxu0 0.0
    %879 = vmatpush1.msra.mxu0 0.0
    %880 = vmatprep.subr.mxu0 0.0
    %881 = vmatpush1.msra.mxu0 0.0
    %882 = vmatprep.subr.mxu0 0.0
    %883 = vmatpush1.msra.mxu0 0.0
    %884 = vmatprep.subr.mxu0 0.0
    %885 = vmatpush1.msra.mxu0 0.0
    %886 = vmatprep.subr.mxu0 0.0
    %v887 = vand.u32 %v34, 4294901760
    %v888 = vsub.f32 %v34, %v887
    %v889 = vand.u32 %v888, 4294901760
    %890 = vmatpush1.msra.mxu0 %v889
    %891 = vmatprep.subr.mxu0 0.0
    %v892 = vand.u32 %v33, 4294901760
    %v893 = vsub.f32 %v33, %v892
    %v894 = vand.u32 %v893, 4294901760
    %895 = vmatpush1.msra.mxu0 %v894
    %896 = vmatprep.subr.mxu0 0.0
    %897 = vmatpush2.msra.mxu0 0.0
    %898 = vmatprep.subr.mxu0 0.0
    %899 = vmatpush2.msra.mxu0 0.0
    %900 = vmatprep.subr.mxu0 0.0
    %901 = vmatpush2.msra.mxu0 0.0
    %902 = vmatprep.subr.mxu0 0.0
    %903 = vmatpush2.msra.mxu0 0.0
    %904 = vmatprep.subr.mxu0 0.0
    %905 = vmatpush2.msra.mxu0 0.0
    %906 = vmatprep.subr.mxu0 0.0
    %907 = vmatpush2.msra.mxu0 0.0
    %908 = vmatprep.subr.mxu0 0.0
    %909 = vmatpush2.msra.mxu0 0.0
    %910 = vmatprep.subr.mxu0 0.0
    %911 = vmatpush2.msra.mxu0 0.0
    %912 = vmatprep.subr.mxu0 0.0
    %913 = vmatpush2.msra.mxu0 0.0
    %914 = vmatprep.subr.mxu0 0.0
    %915 = vmatpush2.msra.mxu0 0.0
    %916 = vmatprep.subr.mxu0 0.0
    %917 = vmatpush2.msra.mxu0 0.0
    %918 = vmatprep.subr.mxu0 0.0
    %919 = vmatpush2.msra.mxu0 0.0
    %920 = vmatprep.subr.mxu0 0.0
    %921 = vmatpush2.msra.mxu0 0.0
    %922 = vmatprep.subr.mxu0 0.0
    %923 = vmatpush2.msra.mxu0 0.0
    %924 = vmatprep.subr.mxu0 0.0
    %925 = vmatpush2.msra.mxu0 0.0
    %926 = vmatprep.subr.mxu0 0.0
    %927 = vmatpush2.msra.mxu0 0.0
    %928 = vmatprep.mubr.f32.mxu0 0.0
    %v929 = vand.u32 %v37, 4294901760
    %930 = vmatmul.mubr.f32.gmra.mxu0 %v929
    %v931 = vpop.f32.mrf.mxu0
    %v932 = vadd.f32 %v735, %v931
    %v933 = vpop.f32.mrf.mxu0
    %934 = vmatprep.mubr.f32.mxu0 0.0
    %v935 = vand.u32 %v40, 4294901760
    %936 = vmatmul.mubr.f32.gmra.mxu0 %v935
    %v937 = vpop.f32.mrf.mxu0
    %v938 = vadd.f32 %v743, %v937
    %v939 = vpop.f32.mrf.mxu0
    %940 = vmatprep.mubr.f32.mxu0 0.0
    %v941 = vand.u32 %v43, 4294901760
    %942 = vmatmul.mubr.f32.gmra.mxu0 %v941
    %v943 = vpop.f32.mrf.mxu0
    %v944 = vadd.f32 %v751, %v943
    %v945 = vpop.f32.mrf.mxu0
    %946 = vmatprep.mubr.f32.mxu0 0.0
    %v947 = vand.u32 %v46, 4294901760
    %948 = vmatmul.mubr.f32.gmra.mxu0 %v947
    %v949 = vpop.f32.mrf.mxu0
    %v950 = vadd.f32 %v759, %v949
    %v951 = vpop.f32.mrf.mxu0
    %952 = vmatprep.mubr.f32.mxu0 0.0
    %v953 = vand.u32 %v49, 4294901760
    %954 = vmatmul.mubr.f32.gmra.mxu0 %v953
    %v955 = vpop.f32.mrf.mxu0
    %v956 = vadd.f32 %v767, %v955
    %v957 = vpop.f32.mrf.mxu0
    %958 = vmatprep.mubr.f32.mxu0 0.0
    %v959 = vand.u32 %v52, 4294901760
    %960 = vmatmul.mubr.f32.gmra.mxu0 %v959
    %v961 = vpop.f32.mrf.mxu0
    %v962 = vadd.f32 %v775, %v961
    %v963 = vpop.f32.mrf.mxu0
    %964 = vmatprep.mubr.f32.mxu0 0.0
    %v965 = vand.u32 %v55, 4294901760
    %966 = vmatmul.mubr.f32.gmra.mxu0 %v965
    %v967 = vpop.f32.mrf.mxu0
    %v968 = vadd.f32 %v783, %v967
    %v969 = vpop.f32.mrf.mxu0
    %970 = vmatprep.mubr.f32.mxu0 0.0
    %v971 = vand.u32 %v58, 4294901760
    %972 = vmatmul.mubr.f32.gmra.mxu0 %v971
    %v973 = vpop.f32.mrf.mxu0
    %v974 = vadd.f32 %v791, %v973
    %v975 = vpop.f32.mrf.mxu0
    %976 = vmatprep.mubr.f32.mxu0 0.0
    %v977 = vand.u32 %v61, 4294901760
    %978 = vmatmul.mubr.f32.gmra.mxu0 %v977
    %v979 = vpop.f32.mrf.mxu0
    %v980 = vadd.f32 %v799, %v979
    %v981 = vpop.f32.mrf.mxu0
    %982 = vmatprep.mubr.f32.mxu0 0.0
    %v983 = vand.u32 %v64, 4294901760
    %984 = vmatmul.mubr.f32.gmra.mxu0 %v983
    %v985 = vpop.f32.mrf.mxu0
    %v986 = vadd.f32 %v807, %v985
    %v987 = vpop.f32.mrf.mxu0
    %988 = vmatprep.mubr.f32.mxu0 0.0
    %v989 = vand.u32 %v67, 4294901760
    %990 = vmatmul.mubr.f32.gmra.mxu0 %v989
    %v991 = vpop.f32.mrf.mxu0
    %v992 = vadd.f32 %v815, %v991
    %v993 = vpop.f32.mrf.mxu0
    %994 = vmatprep.mubr.f32.mxu0 0.0
    %v995 = vand.u32 %v70, 4294901760
    %996 = vmatmul.mubr.f32.gmra.mxu0 %v995
    %v997 = vpop.f32.mrf.mxu0
    %v998 = vadd.f32 %v823, %v997
    %v999 = vpop.f32.mrf.mxu0
    %1000 = vmatprep.mubr.f32.mxu0 0.0
    %v1001 = vand.u32 %v73, 4294901760
    %1002 = vmatmul.mubr.f32.gmra.mxu0 %v1001
    %v1003 = vpop.f32.mrf.mxu0
    %v1004 = vadd.f32 %v831, %v1003
    %v1005 = vpop.f32.mrf.mxu0
    %1006 = vmatprep.mubr.f32.mxu0 0.0
    %v1007 = vand.u32 %v76, 4294901760
    %1008 = vmatmul.mubr.f32.gmra.mxu0 %v1007
    %v1009 = vpop.f32.mrf.mxu0
    %v1010 = vadd.f32 %v839, %v1009
    %v1011 = vpop.f32.mrf.mxu0
    %1012 = vmatprep.mubr.f32.mxu0 0.0
    %v1013 = vand.u32 %v79, 4294901760
    %1014 = vmatmul.mubr.f32.gmra.mxu0 %v1013
    %v1015 = vpop.f32.mrf.mxu0
    %v1016 = vadd.f32 %v847, %v1015
    %v1017 = vpop.f32.mrf.mxu0
    %1018 = vmatprep.mubr.f32.mxu0 0.0
    %v1019 = vand.u32 %v82, 4294901760
    %1020 = vmatmul.mubr.f32.gmra.mxu0 %v1019
    %v1021 = vpop.f32.mrf.mxu0
    %v1022 = vadd.f32 %v855, %v1021
    %v1023 = vpop.f32.mrf.mxu0
    %1024 = vdwg.mxu0
    %1025 = vmatprep.subr.mxu0 0.0
    %1026 = vmatpush1.msra.mxu0 0.0
    %1027 = vmatprep.subr.mxu0 0.0
    %1028 = vmatpush1.msra.mxu0 0.0
    %1029 = vmatprep.subr.mxu0 0.0
    %1030 = vmatpush1.msra.mxu0 0.0
    %1031 = vmatprep.subr.mxu0 0.0
    %1032 = vmatpush1.msra.mxu0 0.0
    %1033 = vmatprep.subr.mxu0 0.0
    %1034 = vmatpush1.msra.mxu0 0.0
    %1035 = vmatprep.subr.mxu0 0.0
    %1036 = vmatpush1.msra.mxu0 0.0
    %1037 = vmatprep.subr.mxu0 0.0
    %1038 = vmatpush1.msra.mxu0 0.0
    %1039 = vmatprep.subr.mxu0 0.0
    %1040 = vmatpush1.msra.mxu0 0.0
    %1041 = vmatprep.subr.mxu0 0.0
    %1042 = vmatpush1.msra.mxu0 0.0
    %1043 = vmatprep.subr.mxu0 0.0
    %1044 = vmatpush1.msra.mxu0 0.0
    %1045 = vmatprep.subr.mxu0 0.0
    %1046 = vmatpush1.msra.mxu0 0.0
    %1047 = vmatprep.subr.mxu0 0.0
    %1048 = vmatpush1.msra.mxu0 0.0
    %1049 = vmatprep.subr.mxu0 0.0
    %1050 = vmatpush1.msra.mxu0 0.0
    %1051 = vmatprep.subr.mxu0 0.0
    %1052 = vmatpush1.msra.mxu0 0.0
    %1053 = vmatprep.subr.mxu0 0.0
    %v1054 = vand.u32 %v34, 4294901760
    %1055 = vmatpush1.msra.mxu0 %v1054
    %1056 = vmatprep.subr.mxu0 0.0
    %v1057 = vand.u32 %v33, 4294901760
    %1058 = vmatpush1.msra.mxu0 %v1057
    %1059 = vmatprep.subr.mxu0 0.0
    %1060 = vmatpush2.msra.mxu0 0.0
    %1061 = vmatprep.subr.mxu0 0.0
    %1062 = vmatpush2.msra.mxu0 0.0
    %1063 = vmatprep.subr.mxu0 0.0
    %1064 = vmatpush2.msra.mxu0 0.0
    %1065 = vmatprep.subr.mxu0 0.0
    %1066 = vmatpush2.msra.mxu0 0.0
    %1067 = vmatprep.subr.mxu0 0.0
    %1068 = vmatpush2.msra.mxu0 0.0
    %1069 = vmatprep.subr.mxu0 0.0
    %1070 = vmatpush2.msra.mxu0 0.0
    %1071 = vmatprep.subr.mxu0 0.0
    %1072 = vmatpush2.msra.mxu0 0.0
    %1073 = vmatprep.subr.mxu0 0.0
    %1074 = vmatpush2.msra.mxu0 0.0
    %1075 = vmatprep.subr.mxu0 0.0
    %1076 = vmatpush2.msra.mxu0 0.0
    %1077 = vmatprep.subr.mxu0 0.0
    %1078 = vmatpush2.msra.mxu0 0.0
    %1079 = vmatprep.subr.mxu0 0.0
    %1080 = vmatpush2.msra.mxu0 0.0
    %1081 = vmatprep.subr.mxu0 0.0
    %1082 = vmatpush2.msra.mxu0 0.0
    %1083 = vmatprep.subr.mxu0 0.0
    %1084 = vmatpush2.msra.mxu0 0.0
    %1085 = vmatprep.subr.mxu0 0.0
    %1086 = vmatpush2.msra.mxu0 0.0
    %1087 = vmatprep.subr.mxu0 0.0
    %1088 = vmatpush2.msra.mxu0 0.0
    %1089 = vmatprep.subr.mxu0 0.0
    %1090 = vmatpush2.msra.mxu0 0.0
    %1091 = vmatprep.mubr.f32.mxu0 0.0
    %v1092 = vand.u32 %v37, 4294901760
    %1093 = vmatmul.mubr.f32.gmra.mxu0 %v1092
    %v1094 = vpop.f32.mrf.mxu0
    %v1095 = vadd.f32 %v932, %v1094
    %v1096 = vpop.f32.mrf.mxu0
    %1097 = vmatprep.mubr.f32.mxu0 0.0
    %v1098 = vand.u32 %v40, 4294901760
    %1099 = vmatmul.mubr.f32.gmra.mxu0 %v1098
    %v1100 = vpop.f32.mrf.mxu0
    %v1101 = vadd.f32 %v938, %v1100
    %v1102 = vpop.f32.mrf.mxu0
    %1103 = vmatprep.mubr.f32.mxu0 0.0
    %v1104 = vand.u32 %v43, 4294901760
    %1105 = vmatmul.mubr.f32.gmra.mxu0 %v1104
    %v1106 = vpop.f32.mrf.mxu0
    %v1107 = vadd.f32 %v944, %v1106
    %v1108 = vpop.f32.mrf.mxu0
    %1109 = vmatprep.mubr.f32.mxu0 0.0
    %v1110 = vand.u32 %v46, 4294901760
    %1111 = vmatmul.mubr.f32.gmra.mxu0 %v1110
    %v1112 = vpop.f32.mrf.mxu0
    %v1113 = vadd.f32 %v950, %v1112
    %v1114 = vpop.f32.mrf.mxu0
    %1115 = vmatprep.mubr.f32.mxu0 0.0
    %v1116 = vand.u32 %v49, 4294901760
    %1117 = vmatmul.mubr.f32.gmra.mxu0 %v1116
    %v1118 = vpop.f32.mrf.mxu0
    %v1119 = vadd.f32 %v956, %v1118
    %v1120 = vpop.f32.mrf.mxu0
    %1121 = vmatprep.mubr.f32.mxu0 0.0
    %v1122 = vand.u32 %v52, 4294901760
    %1123 = vmatmul.mubr.f32.gmra.mxu0 %v1122
    %v1124 = vpop.f32.mrf.mxu0
    %v1125 = vadd.f32 %v962, %v1124
    %v1126 = vpop.f32.mrf.mxu0
    %1127 = vmatprep.mubr.f32.mxu0 0.0
    %v1128 = vand.u32 %v55, 4294901760
    %1129 = vmatmul.mubr.f32.gmra.mxu0 %v1128
    %v1130 = vpop.f32.mrf.mxu0
    %v1131 = vadd.f32 %v968, %v1130
    %v1132 = vpop.f32.mrf.mxu0
    %1133 = vmatprep.mubr.f32.mxu0 0.0
    %v1134 = vand.u32 %v58, 4294901760
    %1135 = vmatmul.mubr.f32.gmra.mxu0 %v1134
    %v1136 = vpop.f32.mrf.mxu0
    %v1137 = vadd.f32 %v974, %v1136
    %v1138 = vpop.f32.mrf.mxu0
    %1139 = vmatprep.mubr.f32.mxu0 0.0
    %v1140 = vand.u32 %v61, 4294901760
    %1141 = vmatmul.mubr.f32.gmra.mxu0 %v1140
    %v1142 = vpop.f32.mrf.mxu0
    %v1143 = vadd.f32 %v980, %v1142
    %v1144 = vpop.f32.mrf.mxu0
    %1145 = vmatprep.mubr.f32.mxu0 0.0
    %v1146 = vand.u32 %v64, 4294901760
    %1147 = vmatmul.mubr.f32.gmra.mxu0 %v1146
    %v1148 = vpop.f32.mrf.mxu0
    %v1149 = vadd.f32 %v986, %v1148
    %v1150 = vpop.f32.mrf.mxu0
    %1151 = vmatprep.mubr.f32.mxu0 0.0
    %v1152 = vand.u32 %v67, 4294901760
    %1153 = vmatmul.mubr.f32.gmra.mxu0 %v1152
    %v1154 = vpop.f32.mrf.mxu0
    %v1155 = vadd.f32 %v992, %v1154
    %v1156 = vpop.f32.mrf.mxu0
    %1157 = vmatprep.mubr.f32.mxu0 0.0
    %v1158 = vand.u32 %v70, 4294901760
    %1159 = vmatmul.mubr.f32.gmra.mxu0 %v1158
    %v1160 = vpop.f32.mrf.mxu0
    %v1161 = vadd.f32 %v998, %v1160
    %v1162 = vpop.f32.mrf.mxu0
    %1163 = vmatprep.mubr.f32.mxu0 0.0
    %v1164 = vand.u32 %v73, 4294901760
    %1165 = vmatmul.mubr.f32.gmra.mxu0 %v1164
    %v1166 = vpop.f32.mrf.mxu0
    %v1167 = vadd.f32 %v1004, %v1166
    %v1168 = vpop.f32.mrf.mxu0
    %1169 = vmatprep.mubr.f32.mxu0 0.0
    %v1170 = vand.u32 %v76, 4294901760
    %1171 = vmatmul.mubr.f32.gmra.mxu0 %v1170
    %v1172 = vpop.f32.mrf.mxu0
    %v1173 = vadd.f32 %v1010, %v1172
    %v1174 = vpop.f32.mrf.mxu0
    %1175 = vmatprep.mubr.f32.mxu0 0.0
    %v1176 = vand.u32 %v79, 4294901760
    %1177 = vmatmul.mubr.f32.gmra.mxu0 %v1176
    %v1178 = vpop.f32.mrf.mxu0
    %v1179 = vadd.f32 %v1016, %v1178
    %v1180 = vpop.f32.mrf.mxu0
    %1181 = vmatprep.mubr.f32.mxu0 0.0
    %v1182 = vand.u32 %v82, 4294901760
    %1183 = vmatmul.mubr.f32.gmra.mxu0 %v1182
    %v1184 = vpop.f32.mrf.mxu0
    %v1185 = vadd.f32 %v1022, %v1184
    %v1186 = vpop.f32.mrf.mxu0
    %1187 = vdwg.mxu0
    %v1188 = vand.u32 2147483647, %v1095
    %vm1189 = vcmp.le.f32.partialorder %v1188, 0.7853982
    %vm1190 = vcmp.lt.s32.totalorder %v1095, 0
    %v1191 = vand.u32 %v1095, 2139095040
    %v1192 = vshrl.u32 %v1191, 23
    %v1193 = vsub.s32 %v1192, 127
    %v1194 = vand.u32 2147483647, %v1095
    %v1195 = vand.u32 %v1194, 8388607
    %v1196 = vor.u32 %v1195, 8388608
    %v1197 = vsub.s32 0, %v1196
    %v1198 = vadd.s32 %v1193, 1
    %vm1199 = vcmp.gt.s32.totalorder %v1198, 0
    %v1200 = vsel %vm1199, %v1198, 0
    %v1201 = vshrl.u32 %v1200, 5
    %v1202 = vand.u32 %v1200, 31
    %v1203 = vsub.s32 32, %v1202
    %v1204 = vshrl.u32 683565275, %v1203
    %v1205 = vshll.u32 683565275, %v1202
    %v1206 = vshrl.u32 2475754826, %v1203
    %v1207 = vor.u32 %v1205, %v1206
    %v1208 = vshll.u32 2475754826, %v1202
    %v1209 = vshrl.u32 2131351028, %v1203
    %v1210 = vor.u32 %v1208, %v1209
    %v1211 = vshll.u32 2131351028, %v1202
    %v1212 = vshrl.u32 2102212464, %v1203
    %v1213 = vor.u32 %v1211, %v1212
    %v1214 = vshll.u32 2102212464, %v1202
    %v1215 = vshrl.u32 920167782, %v1203
    %v1216 = vor.u32 %v1214, %v1215
    %v1217 = vshll.u32 920167782, %v1202
    %v1218 = vshrl.u32 1326507024, %v1203
    %v1219 = vor.u32 %v1217, %v1218
    %vm1220 = vcmp.lt.s32.totalorder %v1201, 1
    %vm1221 = vcmp.lt.s32.totalorder %v1201, 2
    %vm1222 = vcmp.lt.s32.totalorder %v1201, 3
    %vm1223 = vcmp.lt.s32.totalorder %v1201, 4
    %v1224 = vsel %vm1220, %v1204, %v1207
    %v1225 = vsel %vm1223, %v1213, 2102212464
    %v1226 = vsel %vm1222, %v1210, %v1225
    %v1227 = vsel %vm1221, %v1224, %v1226
    %v1228 = vsel %vm1220, %v1207, %v1210
    %v1229 = vsel %vm1223, %v1216, 920167782
    %v1230 = vsel %vm1222, %v1213, %v1229
    %v1231 = vsel %vm1221, %v1228, %v1230
    %v1232 = vsel %vm1220, %v1210, %v1213
    %v1233 = vsel %vm1223, %v1219, 1326507024
    %v1234 = vsel %vm1222, %v1216, %v1233
    %v1235 = vsel %vm1221, %v1232, %v1234
    %v1236 = vshll.u32 %v1196, 8
    %v1237 = vmul.u32.u64.compose %v1236, %v1235
    %v1238 = vextract.low.u32 %v1237
    %v1239 = vextract.high.u32 %v1237
    %v1240 = vmul.u32.u64.compose %v1236, %v1231
    %v1241 = vextract.low.u32 %v1240
    %v1242 = vextract.high.u32 %v1240
    %v1243 = vmul.u32 %v1236, %v1227
    %v1244 = vadd.s32 %v1239, %v1241
    %vm1245 = vc.u32 %v1239, %v1241
    %v1246 = vadd.s32 %v1242, 1
    %v1247 = vsel %vm1245, %v1246, %v1242
    %v1248 = vadd.s32 %v1243, %v1247
    %v1249 = vadd.s32 %v1248, 536870912
    %v1250 = vshrl.u32 %v1249, 30
    %v1251 = vshll.u32 %v1250, 30
    %v1252 = vsub.s32 %v1248, %v1251
    %vm1253 = vcmp.lt.s32.totalorder %v1252, 0
    %v1254 = vsub.s32 0, %v1252
    %v1255 = vsel %vm1253, %v1254, %v1252
    %v1256 = vclz %v1255
    %v1257 = vsub.s32 %v1256, 2
    %vm1258 = vcmp.gt.s32.totalorder 0, %v1257
    %v1259 = vsel %vm1258, 0, %v1257
    %v1260 = vsub.s32 32, %v1259
    %v1261 = vshll.u32 %v1252, %v1259
    %v1262 = vshrl.u32 %v1244, %v1260
    %v1263 = vor.u32 %v1261, %v1262
    %v1264 = vsub.s32 4294967266, %v1259
    %v1265 = vadd.s32 %v1264, 127
    %v1266 = vshll.u32 %v1265, 23
    %v1267 = vor.u32 4788187, %v1266
    %v1268 = vand.u32 2147483647, %v1267
    %v1270 = vcvt.s32.f32 %v1263
    %v1271 = vmul.f32 %v1270, %v1268
    %v1272 = vxor.u32 %v1271, 2147483648
    %v1273 = vsel %vm1190, %v1272, %v1271
    %v1274 = vsub.s32 4, %v1250
    %v1275 = vsel %vm1190, %v1274, %v1250
    %v1276 = vsel %vm1189, %v1095, %v1273
    %v1277 = vsel %vm1189, 0, %v1275
    %v1278 = vcosq.f32.pop %v1276
    %v1279 = vsinq.f32.pop %v1276
    %vm1280 = vweird.f32 %v1095
    %v1281 = vand.u32 %v1277, 3
    %vm1282 = vcmp.lt.s32.totalorder %v1281, 2
    %vm1283 = vcmp.eq.s32.totalorder %v1281, 0
    %v1284 = vxor.u32 %v1279, 2147483648
    %v1285 = vsel %vm1283, %v1278, %v1284
    %vm1286 = vcmp.eq.s32.totalorder %v1281, 2
    %v1287 = vxor.u32 %v1278, 2147483648
    %v1288 = vsel %vm1286, %v1287, %v1279
    %v1289 = vsel %vm1282, %v1285, %v1288
    %v1290 = vsel %vm1280, nan, %v1289
    %v1291 = vand.u32 2147483647, %v1101
    %vm1292 = vcmp.le.f32.partialorder %v1291, 0.7853982
    %vm1293 = vcmp.lt.s32.totalorder %v1101, 0
    %v1294 = vand.u32 %v1101, 2139095040
    %v1295 = vshrl.u32 %v1294, 23
    %v1296 = vsub.s32 %v1295, 127
    %v1297 = vand.u32 2147483647, %v1101
    %v1298 = vand.u32 %v1297, 8388607
    %v1299 = vor.u32 %v1298, 8388608
    %v1300 = vsub.s32 0, %v1299
    %v1301 = vadd.s32 %v1296, 1
    %vm1302 = vcmp.gt.s32.totalorder %v1301, 0
    %v1303 = vsel %vm1302, %v1301, 0
    %v1304 = vshrl.u32 %v1303, 5
    %v1305 = vand.u32 %v1303, 31
    %v1306 = vsub.s32 32, %v1305
    %v1307 = vshrl.u32 683565275, %v1306
    %v1308 = vshll.u32 683565275, %v1305
    %v1309 = vshrl.u32 2475754826, %v1306
    %v1310 = vor.u32 %v1308, %v1309
    %v1311 = vshll.u32 2475754826, %v1305
    %v1312 = vshrl.u32 2131351028, %v1306
    %v1313 = vor.u32 %v1311, %v1312
    %v1314 = vshll.u32 2131351028, %v1305
    %v1315 = vshrl.u32 2102212464, %v1306
    %v1316 = vor.u32 %v1314, %v1315
    %v1317 = vshll.u32 2102212464, %v1305
    %v1318 = vshrl.u32 920167782, %v1306
    %v1319 = vor.u32 %v1317, %v1318
    %v1320 = vshll.u32 920167782, %v1305
    %v1321 = vshrl.u32 1326507024, %v1306
    %v1322 = vor.u32 %v1320, %v1321
    %vm1323 = vcmp.lt.s32.totalorder %v1304, 1
    %vm1324 = vcmp.lt.s32.totalorder %v1304, 2
    %vm1325 = vcmp.lt.s32.totalorder %v1304, 3
    %vm1326 = vcmp.lt.s32.totalorder %v1304, 4
    %v1327 = vsel %vm1323, %v1307, %v1310
    %v1328 = vsel %vm1326, %v1316, 2102212464
    %v1329 = vsel %vm1325, %v1313, %v1328
    %v1330 = vsel %vm1324, %v1327, %v1329
    %v1331 = vsel %vm1323, %v1310, %v1313
    %v1332 = vsel %vm1326, %v1319, 920167782
    %v1333 = vsel %vm1325, %v1316, %v1332
    %v1334 = vsel %vm1324, %v1331, %v1333
    %v1335 = vsel %vm1323, %v1313, %v1316
    %v1336 = vsel %vm1326, %v1322, 1326507024
    %v1337 = vsel %vm1325, %v1319, %v1336
    %v1338 = vsel %vm1324, %v1335, %v1337
    %v1339 = vshll.u32 %v1299, 8
    %v1340 = vmul.u32.u64.compose %v1339, %v1338
    %v1341 = vextract.low.u32 %v1340
    %v1342 = vextract.high.u32 %v1340
    %v1343 = vmul.u32.u64.compose %v1339, %v1334
    %v1344 = vextract.low.u32 %v1343
    %v1345 = vextract.high.u32 %v1343
    %v1346 = vmul.u32 %v1339, %v1330
    %v1347 = vadd.s32 %v1342, %v1344
    %vm1348 = vc.u32 %v1342, %v1344
    %v1349 = vadd.s32 %v1345, 1
    %v1350 = vsel %vm1348, %v1349, %v1345
    %v1351 = vadd.s32 %v1346, %v1350
    %v1352 = vadd.s32 %v1351, 536870912
    %v1353 = vshrl.u32 %v1352, 30
    %v1354 = vshll.u32 %v1353, 30
    %v1355 = vsub.s32 %v1351, %v1354
    %vm1356 = vcmp.lt.s32.totalorder %v1355, 0
    %v1357 = vsub.s32 0, %v1355
    %v1358 = vsel %vm1356, %v1357, %v1355
    %v1359 = vclz %v1358
    %v1360 = vsub.s32 %v1359, 2
    %vm1361 = vcmp.gt.s32.totalorder 0, %v1360
    %v1362 = vsel %vm1361, 0, %v1360
    %v1363 = vsub.s32 32, %v1362
    %v1364 = vshll.u32 %v1355, %v1362
    %v1365 = vshrl.u32 %v1347, %v1363
    %v1366 = vor.u32 %v1364, %v1365
    %v1367 = vsub.s32 4294967266, %v1362
    %v1368 = vadd.s32 %v1367, 127
    %v1369 = vshll.u32 %v1368, 23
    %v1370 = vor.u32 4788187, %v1369
    %v1371 = vand.u32 2147483647, %v1370
    %v1373 = vcvt.s32.f32 %v1366
    %v1374 = vmul.f32 %v1373, %v1371
    %v1375 = vxor.u32 %v1374, 2147483648
    %v1376 = vsel %vm1293, %v1375, %v1374
    %v1377 = vsub.s32 4, %v1353
    %v1378 = vsel %vm1293, %v1377, %v1353
    %v1379 = vsel %vm1292, %v1101, %v1376
    %v1380 = vsel %vm1292, 0, %v1378
    %v1381 = vcosq.f32.pop %v1379
    %v1382 = vsinq.f32.pop %v1379
    %vm1383 = vweird.f32 %v1101
    %v1384 = vand.u32 %v1380, 3
    %vm1385 = vcmp.lt.s32.totalorder %v1384, 2
    %vm1386 = vcmp.eq.s32.totalorder %v1384, 0
    %v1387 = vxor.u32 %v1382, 2147483648
    %v1388 = vsel %vm1386, %v1381, %v1387
    %vm1389 = vcmp.eq.s32.totalorder %v1384, 2
    %v1390 = vxor.u32 %v1381, 2147483648
    %v1391 = vsel %vm1389, %v1390, %v1382
    %v1392 = vsel %vm1385, %v1388, %v1391
    %v1393 = vsel %vm1383, nan, %v1392
    %v1394 = vand.u32 2147483647, %v1107
    %vm1395 = vcmp.le.f32.partialorder %v1394, 0.7853982
    %vm1396 = vcmp.lt.s32.totalorder %v1107, 0
    %v1397 = vand.u32 %v1107, 2139095040
    %v1398 = vshrl.u32 %v1397, 23
    %v1399 = vsub.s32 %v1398, 127
    %v1400 = vand.u32 2147483647, %v1107
    %v1401 = vand.u32 %v1400, 8388607
    %v1402 = vor.u32 %v1401, 8388608
    %v1403 = vsub.s32 0, %v1402
    %v1404 = vadd.s32 %v1399, 1
    %vm1405 = vcmp.gt.s32.totalorder %v1404, 0
    %v1406 = vsel %vm1405, %v1404, 0
    %v1407 = vshrl.u32 %v1406, 5
    %v1408 = vand.u32 %v1406, 31
    %v1409 = vsub.s32 32, %v1408
    %v1410 = vshrl.u32 683565275, %v1409
    %v1411 = vshll.u32 683565275, %v1408
    %v1412 = vshrl.u32 2475754826, %v1409
    %v1413 = vor.u32 %v1411, %v1412
    %v1414 = vshll.u32 2475754826, %v1408
    %v1415 = vshrl.u32 2131351028, %v1409
    %v1416 = vor.u32 %v1414, %v1415
    %v1417 = vshll.u32 2131351028, %v1408
    %v1418 = vshrl.u32 2102212464, %v1409
    %v1419 = vor.u32 %v1417, %v1418
    %v1420 = vshll.u32 2102212464, %v1408
    %v1421 = vshrl.u32 920167782, %v1409
    %v1422 = vor.u32 %v1420, %v1421
    %v1423 = vshll.u32 920167782, %v1408
    %v1424 = vshrl.u32 1326507024, %v1409
    %v1425 = vor.u32 %v1423, %v1424
    %vm1426 = vcmp.lt.s32.totalorder %v1407, 1
    %vm1427 = vcmp.lt.s32.totalorder %v1407, 2
    %vm1428 = vcmp.lt.s32.totalorder %v1407, 3
    %vm1429 = vcmp.lt.s32.totalorder %v1407, 4
    %v1430 = vsel %vm1426, %v1410, %v1413
    %v1431 = vsel %vm1429, %v1419, 2102212464
    %v1432 = vsel %vm1428, %v1416, %v1431
    %v1433 = vsel %vm1427, %v1430, %v1432
    %v1434 = vsel %vm1426, %v1413, %v1416
    %v1435 = vsel %vm1429, %v1422, 920167782
    %v1436 = vsel %vm1428, %v1419, %v1435
    %v1437 = vsel %vm1427, %v1434, %v1436
    %v1438 = vsel %vm1426, %v1416, %v1419
    %v1439 = vsel %vm1429, %v1425, 1326507024
    %v1440 = vsel %vm1428, %v1422, %v1439
    %v1441 = vsel %vm1427, %v1438, %v1440
    %v1442 = vshll.u32 %v1402, 8
    %v1443 = vmul.u32.u64.compose %v1442, %v1441
    %v1444 = vextract.low.u32 %v1443
    %v1445 = vextract.high.u32 %v1443
    %v1446 = vmul.u32.u64.compose %v1442, %v1437
    %v1447 = vextract.low.u32 %v1446
    %v1448 = vextract.high.u32 %v1446
    %v1449 = vmul.u32 %v1442, %v1433
    %v1450 = vadd.s32 %v1445, %v1447
    %vm1451 = vc.u32 %v1445, %v1447
    %v1452 = vadd.s32 %v1448, 1
    %v1453 = vsel %vm1451, %v1452, %v1448
    %v1454 = vadd.s32 %v1449, %v1453
    %v1455 = vadd.s32 %v1454, 536870912
    %v1456 = vshrl.u32 %v1455, 30
    %v1457 = vshll.u32 %v1456, 30
    %v1458 = vsub.s32 %v1454, %v1457
    %vm1459 = vcmp.lt.s32.totalorder %v1458, 0
    %v1460 = vsub.s32 0, %v1458
    %v1461 = vsel %vm1459, %v1460, %v1458
    %v1462 = vclz %v1461
    %v1463 = vsub.s32 %v1462, 2
    %vm1464 = vcmp.gt.s32.totalorder 0, %v1463
    %v1465 = vsel %vm1464, 0, %v1463
    %v1466 = vsub.s32 32, %v1465
    %v1467 = vshll.u32 %v1458, %v1465
    %v1468 = vshrl.u32 %v1450, %v1466
    %v1469 = vor.u32 %v1467, %v1468
    %v1470 = vsub.s32 4294967266, %v1465
    %v1471 = vadd.s32 %v1470, 127
    %v1472 = vshll.u32 %v1471, 23
    %v1473 = vor.u32 4788187, %v1472
    %v1474 = vand.u32 2147483647, %v1473
    %v1476 = vcvt.s32.f32 %v1469
    %v1477 = vmul.f32 %v1476, %v1474
    %v1478 = vxor.u32 %v1477, 2147483648
    %v1479 = vsel %vm1396, %v1478, %v1477
    %v1480 = vsub.s32 4, %v1456
    %v1481 = vsel %vm1396, %v1480, %v1456
    %v1482 = vsel %vm1395, %v1107, %v1479
    %v1483 = vsel %vm1395, 0, %v1481
    %v1484 = vcosq.f32.pop %v1482
    %v1485 = vsinq.f32.pop %v1482
    %vm1486 = vweird.f32 %v1107
    %v1487 = vand.u32 %v1483, 3
    %vm1488 = vcmp.lt.s32.totalorder %v1487, 2
    %vm1489 = vcmp.eq.s32.totalorder %v1487, 0
    %v1490 = vxor.u32 %v1485, 2147483648
    %v1491 = vsel %vm1489, %v1484, %v1490
    %vm1492 = vcmp.eq.s32.totalorder %v1487, 2
    %v1493 = vxor.u32 %v1484, 2147483648
    %v1494 = vsel %vm1492, %v1493, %v1485
    %v1495 = vsel %vm1488, %v1491, %v1494
    %v1496 = vsel %vm1486, nan, %v1495
    %v1497 = vand.u32 2147483647, %v1113
    %vm1498 = vcmp.le.f32.partialorder %v1497, 0.7853982
    %vm1499 = vcmp.lt.s32.totalorder %v1113, 0
    %v1500 = vand.u32 %v1113, 2139095040
    %v1501 = vshrl.u32 %v1500, 23
    %v1502 = vsub.s32 %v1501, 127
    %v1503 = vand.u32 2147483647, %v1113
    %v1504 = vand.u32 %v1503, 8388607
    %v1505 = vor.u32 %v1504, 8388608
    %v1506 = vsub.s32 0, %v1505
    %v1507 = vadd.s32 %v1502, 1
    %vm1508 = vcmp.gt.s32.totalorder %v1507, 0
    %v1509 = vsel %vm1508, %v1507, 0
    %v1510 = vshrl.u32 %v1509, 5
    %v1511 = vand.u32 %v1509, 31
    %v1512 = vsub.s32 32, %v1511
    %v1513 = vshrl.u32 683565275, %v1512
    %v1514 = vshll.u32 683565275, %v1511
    %v1515 = vshrl.u32 2475754826, %v1512
    %v1516 = vor.u32 %v1514, %v1515
    %v1517 = vshll.u32 2475754826, %v1511
    %v1518 = vshrl.u32 2131351028, %v1512
    %v1519 = vor.u32 %v1517, %v1518
    %v1520 = vshll.u32 2131351028, %v1511
    %v1521 = vshrl.u32 2102212464, %v1512
    %v1522 = vor.u32 %v1520, %v1521
    %v1523 = vshll.u32 2102212464, %v1511
    %v1524 = vshrl.u32 920167782, %v1512
    %v1525 = vor.u32 %v1523, %v1524
    %v1526 = vshll.u32 920167782, %v1511
    %v1527 = vshrl.u32 1326507024, %v1512
    %v1528 = vor.u32 %v1526, %v1527
    %vm1529 = vcmp.lt.s32.totalorder %v1510, 1
    %vm1530 = vcmp.lt.s32.totalorder %v1510, 2
    %vm1531 = vcmp.lt.s32.totalorder %v1510, 3
    %vm1532 = vcmp.lt.s32.totalorder %v1510, 4
    %v1533 = vsel %vm1529, %v1513, %v1516
    %v1534 = vsel %vm1532, %v1522, 2102212464
    %v1535 = vsel %vm1531, %v1519, %v1534
    %v1536 = vsel %vm1530, %v1533, %v1535
    %v1537 = vsel %vm1529, %v1516, %v1519
    %v1538 = vsel %vm1532, %v1525, 920167782
    %v1539 = vsel %vm1531, %v1522, %v1538
    %v1540 = vsel %vm1530, %v1537, %v1539
    %v1541 = vsel %vm1529, %v1519, %v1522
    %v1542 = vsel %vm1532, %v1528, 1326507024
    %v1543 = vsel %vm1531, %v1525, %v1542
    %v1544 = vsel %vm1530, %v1541, %v1543
    %v1545 = vshll.u32 %v1505, 8
    %v1546 = vmul.u32.u64.compose %v1545, %v1544
    %v1547 = vextract.low.u32 %v1546
    %v1548 = vextract.high.u32 %v1546
    %v1549 = vmul.u32.u64.compose %v1545, %v1540
    %v1550 = vextract.low.u32 %v1549
    %v1551 = vextract.high.u32 %v1549
    %v1552 = vmul.u32 %v1545, %v1536
    %v1553 = vadd.s32 %v1548, %v1550
    %vm1554 = vc.u32 %v1548, %v1550
    %v1555 = vadd.s32 %v1551, 1
    %v1556 = vsel %vm1554, %v1555, %v1551
    %v1557 = vadd.s32 %v1552, %v1556
    %v1558 = vadd.s32 %v1557, 536870912
    %v1559 = vshrl.u32 %v1558, 30
    %v1560 = vshll.u32 %v1559, 30
    %v1561 = vsub.s32 %v1557, %v1560
    %vm1562 = vcmp.lt.s32.totalorder %v1561, 0
    %v1563 = vsub.s32 0, %v1561
    %v1564 = vsel %vm1562, %v1563, %v1561
    %v1565 = vclz %v1564
    %v1566 = vsub.s32 %v1565, 2
    %vm1567 = vcmp.gt.s32.totalorder 0, %v1566
    %v1568 = vsel %vm1567, 0, %v1566
    %v1569 = vsub.s32 32, %v1568
    %v1570 = vshll.u32 %v1561, %v1568
    %v1571 = vshrl.u32 %v1553, %v1569
    %v1572 = vor.u32 %v1570, %v1571
    %v1573 = vsub.s32 4294967266, %v1568
    %v1574 = vadd.s32 %v1573, 127
    %v1575 = vshll.u32 %v1574, 23
    %v1576 = vor.u32 4788187, %v1575
    %v1577 = vand.u32 2147483647, %v1576
    %v1579 = vcvt.s32.f32 %v1572
    %v1580 = vmul.f32 %v1579, %v1577
    %v1581 = vxor.u32 %v1580, 2147483648
    %v1582 = vsel %vm1499, %v1581, %v1580
    %v1583 = vsub.s32 4, %v1559
    %v1584 = vsel %vm1499, %v1583, %v1559
    %v1585 = vsel %vm1498, %v1113, %v1582
    %v1586 = vsel %vm1498, 0, %v1584
    %v1587 = vcosq.f32.pop %v1585
    %v1588 = vsinq.f32.pop %v1585
    %vm1589 = vweird.f32 %v1113
    %v1590 = vand.u32 %v1586, 3
    %vm1591 = vcmp.lt.s32.totalorder %v1590, 2
    %vm1592 = vcmp.eq.s32.totalorder %v1590, 0
    %v1593 = vxor.u32 %v1588, 2147483648
    %v1594 = vsel %vm1592, %v1587, %v1593
    %vm1595 = vcmp.eq.s32.totalorder %v1590, 2
    %v1596 = vxor.u32 %v1587, 2147483648
    %v1597 = vsel %vm1595, %v1596, %v1588
    %v1598 = vsel %vm1591, %v1594, %v1597
    %v1599 = vsel %vm1589, nan, %v1598
    %v1600 = vand.u32 2147483647, %v1119
    %vm1601 = vcmp.le.f32.partialorder %v1600, 0.7853982
    %vm1602 = vcmp.lt.s32.totalorder %v1119, 0
    %v1603 = vand.u32 %v1119, 2139095040
    %v1604 = vshrl.u32 %v1603, 23
    %v1605 = vsub.s32 %v1604, 127
    %v1606 = vand.u32 2147483647, %v1119
    %v1607 = vand.u32 %v1606, 8388607
    %v1608 = vor.u32 %v1607, 8388608
    %v1609 = vsub.s32 0, %v1608
    %v1610 = vadd.s32 %v1605, 1
    %vm1611 = vcmp.gt.s32.totalorder %v1610, 0
    %v1612 = vsel %vm1611, %v1610, 0
    %v1613 = vshrl.u32 %v1612, 5
    %v1614 = vand.u32 %v1612, 31
    %v1615 = vsub.s32 32, %v1614
    %v1616 = vshrl.u32 683565275, %v1615
    %v1617 = vshll.u32 683565275, %v1614
    %v1618 = vshrl.u32 2475754826, %v1615
    %v1619 = vor.u32 %v1617, %v1618
    %v1620 = vshll.u32 2475754826, %v1614
    %v1621 = vshrl.u32 2131351028, %v1615
    %v1622 = vor.u32 %v1620, %v1621
    %v1623 = vshll.u32 2131351028, %v1614
    %v1624 = vshrl.u32 2102212464, %v1615
    %v1625 = vor.u32 %v1623, %v1624
    %v1626 = vshll.u32 2102212464, %v1614
    %v1627 = vshrl.u32 920167782, %v1615
    %v1628 = vor.u32 %v1626, %v1627
    %v1629 = vshll.u32 920167782, %v1614
    %v1630 = vshrl.u32 1326507024, %v1615
    %v1631 = vor.u32 %v1629, %v1630
    %vm1632 = vcmp.lt.s32.totalorder %v1613, 1
    %vm1633 = vcmp.lt.s32.totalorder %v1613, 2
    %vm1634 = vcmp.lt.s32.totalorder %v1613, 3
    %vm1635 = vcmp.lt.s32.totalorder %v1613, 4
    %v1636 = vsel %vm1632, %v1616, %v1619
    %v1637 = vsel %vm1635, %v1625, 2102212464
    %v1638 = vsel %vm1634, %v1622, %v1637
    %v1639 = vsel %vm1633, %v1636, %v1638
    %v1640 = vsel %vm1632, %v1619, %v1622
    %v1641 = vsel %vm1635, %v1628, 920167782
    %v1642 = vsel %vm1634, %v1625, %v1641
    %v1643 = vsel %vm1633, %v1640, %v1642
    %v1644 = vsel %vm1632, %v1622, %v1625
    %v1645 = vsel %vm1635, %v1631, 1326507024
    %v1646 = vsel %vm1634, %v1628, %v1645
    %v1647 = vsel %vm1633, %v1644, %v1646
    %v1648 = vshll.u32 %v1608, 8
    %v1649 = vmul.u32.u64.compose %v1648, %v1647
    %v1650 = vextract.low.u32 %v1649
    %v1651 = vextract.high.u32 %v1649
    %v1652 = vmul.u32.u64.compose %v1648, %v1643
    %v1653 = vextract.low.u32 %v1652
    %v1654 = vextract.high.u32 %v1652
    %v1655 = vmul.u32 %v1648, %v1639
    %v1656 = vadd.s32 %v1651, %v1653
    %vm1657 = vc.u32 %v1651, %v1653
    %v1658 = vadd.s32 %v1654, 1
    %v1659 = vsel %vm1657, %v1658, %v1654
    %v1660 = vadd.s32 %v1655, %v1659
    %v1661 = vadd.s32 %v1660, 536870912
    %v1662 = vshrl.u32 %v1661, 30
    %v1663 = vshll.u32 %v1662, 30
    %v1664 = vsub.s32 %v1660, %v1663
    %vm1665 = vcmp.lt.s32.totalorder %v1664, 0
    %v1666 = vsub.s32 0, %v1664
    %v1667 = vsel %vm1665, %v1666, %v1664
    %v1668 = vclz %v1667
    %v1669 = vsub.s32 %v1668, 2
    %vm1670 = vcmp.gt.s32.totalorder 0, %v1669
    %v1671 = vsel %vm1670, 0, %v1669
    %v1672 = vsub.s32 32, %v1671
    %v1673 = vshll.u32 %v1664, %v1671
    %v1674 = vshrl.u32 %v1656, %v1672
    %v1675 = vor.u32 %v1673, %v1674
    %v1676 = vsub.s32 4294967266, %v1671
    %v1677 = vadd.s32 %v1676, 127
    %v1678 = vshll.u32 %v1677, 23
    %v1679 = vor.u32 4788187, %v1678
    %v1680 = vand.u32 2147483647, %v1679
    %v1682 = vcvt.s32.f32 %v1675
    %v1683 = vmul.f32 %v1682, %v1680
    %v1684 = vxor.u32 %v1683, 2147483648
    %v1685 = vsel %vm1602, %v1684, %v1683
    %v1686 = vsub.s32 4, %v1662
    %v1687 = vsel %vm1602, %v1686, %v1662
    %v1688 = vsel %vm1601, %v1119, %v1685
    %v1689 = vsel %vm1601, 0, %v1687
    %v1690 = vcosq.f32.pop %v1688
    %v1691 = vsinq.f32.pop %v1688
    %vm1692 = vweird.f32 %v1119
    %v1693 = vand.u32 %v1689, 3
    %vm1694 = vcmp.lt.s32.totalorder %v1693, 2
    %vm1695 = vcmp.eq.s32.totalorder %v1693, 0
    %v1696 = vxor.u32 %v1691, 2147483648
    %v1697 = vsel %vm1695, %v1690, %v1696
    %vm1698 = vcmp.eq.s32.totalorder %v1693, 2
    %v1699 = vxor.u32 %v1690, 2147483648
    %v1700 = vsel %vm1698, %v1699, %v1691
    %v1701 = vsel %vm1694, %v1697, %v1700
    %v1702 = vsel %vm1692, nan, %v1701
    %v1703 = vand.u32 2147483647, %v1125
    %vm1704 = vcmp.le.f32.partialorder %v1703, 0.7853982
    %vm1705 = vcmp.lt.s32.totalorder %v1125, 0
    %v1706 = vand.u32 %v1125, 2139095040
    %v1707 = vshrl.u32 %v1706, 23
    %v1708 = vsub.s32 %v1707, 127
    %v1709 = vand.u32 2147483647, %v1125
    %v1710 = vand.u32 %v1709, 8388607
    %v1711 = vor.u32 %v1710, 8388608
    %v1712 = vsub.s32 0, %v1711
    %v1713 = vadd.s32 %v1708, 1
    %vm1714 = vcmp.gt.s32.totalorder %v1713, 0
    %v1715 = vsel %vm1714, %v1713, 0
    %v1716 = vshrl.u32 %v1715, 5
    %v1717 = vand.u32 %v1715, 31
    %v1718 = vsub.s32 32, %v1717
    %v1719 = vshrl.u32 683565275, %v1718
    %v1720 = vshll.u32 683565275, %v1717
    %v1721 = vshrl.u32 2475754826, %v1718
    %v1722 = vor.u32 %v1720, %v1721
    %v1723 = vshll.u32 2475754826, %v1717
    %v1724 = vshrl.u32 2131351028, %v1718
    %v1725 = vor.u32 %v1723, %v1724
    %v1726 = vshll.u32 2131351028, %v1717
    %v1727 = vshrl.u32 2102212464, %v1718
    %v1728 = vor.u32 %v1726, %v1727
    %v1729 = vshll.u32 2102212464, %v1717
    %v1730 = vshrl.u32 920167782, %v1718
    %v1731 = vor.u32 %v1729, %v1730
    %v1732 = vshll.u32 920167782, %v1717
    %v1733 = vshrl.u32 1326507024, %v1718
    %v1734 = vor.u32 %v1732, %v1733
    %vm1735 = vcmp.lt.s32.totalorder %v1716, 1
    %vm1736 = vcmp.lt.s32.totalorder %v1716, 2
    %vm1737 = vcmp.lt.s32.totalorder %v1716, 3
    %vm1738 = vcmp.lt.s32.totalorder %v1716, 4
    %v1739 = vsel %vm1735, %v1719, %v1722
    %v1740 = vsel %vm1738, %v1728, 2102212464
    %v1741 = vsel %vm1737, %v1725, %v1740
    %v1742 = vsel %vm1736, %v1739, %v1741
    %v1743 = vsel %vm1735, %v1722, %v1725
    %v1744 = vsel %vm1738, %v1731, 920167782
    %v1745 = vsel %vm1737, %v1728, %v1744
    %v1746 = vsel %vm1736, %v1743, %v1745
    %v1747 = vsel %vm1735, %v1725, %v1728
    %v1748 = vsel %vm1738, %v1734, 1326507024
    %v1749 = vsel %vm1737, %v1731, %v1748
    %v1750 = vsel %vm1736, %v1747, %v1749
    %v1751 = vshll.u32 %v1711, 8
    %v1752 = vmul.u32.u64.compose %v1751, %v1750
    %v1753 = vextract.low.u32 %v1752
    %v1754 = vextract.high.u32 %v1752
    %v1755 = vmul.u32.u64.compose %v1751, %v1746
    %v1756 = vextract.low.u32 %v1755
    %v1757 = vextract.high.u32 %v1755
    %v1758 = vmul.u32 %v1751, %v1742
    %v1759 = vadd.s32 %v1754, %v1756
    %vm1760 = vc.u32 %v1754, %v1756
    %v1761 = vadd.s32 %v1757, 1
    %v1762 = vsel %vm1760, %v1761, %v1757
    %v1763 = vadd.s32 %v1758, %v1762
    %v1764 = vadd.s32 %v1763, 536870912
    %v1765 = vshrl.u32 %v1764, 30
    %v1766 = vshll.u32 %v1765, 30
    %v1767 = vsub.s32 %v1763, %v1766
    %vm1768 = vcmp.lt.s32.totalorder %v1767, 0
    %v1769 = vsub.s32 0, %v1767
    %v1770 = vsel %vm1768, %v1769, %v1767
    %v1771 = vclz %v1770
    %v1772 = vsub.s32 %v1771, 2
    %vm1773 = vcmp.gt.s32.totalorder 0, %v1772
    %v1774 = vsel %vm1773, 0, %v1772
    %v1775 = vsub.s32 32, %v1774
    %v1776 = vshll.u32 %v1767, %v1774
    %v1777 = vshrl.u32 %v1759, %v1775
    %v1778 = vor.u32 %v1776, %v1777
    %v1779 = vsub.s32 4294967266, %v1774
    %v1780 = vadd.s32 %v1779, 127
    %v1781 = vshll.u32 %v1780, 23
    %v1782 = vor.u32 4788187, %v1781
    %v1783 = vand.u32 2147483647, %v1782
    %v1785 = vcvt.s32.f32 %v1778
    %v1786 = vmul.f32 %v1785, %v1783
    %v1787 = vxor.u32 %v1786, 2147483648
    %v1788 = vsel %vm1705, %v1787, %v1786
    %v1789 = vsub.s32 4, %v1765
    %v1790 = vsel %vm1705, %v1789, %v1765
    %v1791 = vsel %vm1704, %v1125, %v1788
    %v1792 = vsel %vm1704, 0, %v1790
    %v1793 = vcosq.f32.pop %v1791
    %v1794 = vsinq.f32.pop %v1791
    %vm1795 = vweird.f32 %v1125
    %v1796 = vand.u32 %v1792, 3
    %vm1797 = vcmp.lt.s32.totalorder %v1796, 2
    %vm1798 = vcmp.eq.s32.totalorder %v1796, 0
    %v1799 = vxor.u32 %v1794, 2147483648
    %v1800 = vsel %vm1798, %v1793, %v1799
    %vm1801 = vcmp.eq.s32.totalorder %v1796, 2
    %v1802 = vxor.u32 %v1793, 2147483648
    %v1803 = vsel %vm1801, %v1802, %v1794
    %v1804 = vsel %vm1797, %v1800, %v1803
    %v1805 = vsel %vm1795, nan, %v1804
    %v1806 = vand.u32 2147483647, %v1131
    %vm1807 = vcmp.le.f32.partialorder %v1806, 0.7853982
    %vm1808 = vcmp.lt.s32.totalorder %v1131, 0
    %v1809 = vand.u32 %v1131, 2139095040
    %v1810 = vshrl.u32 %v1809, 23
    %v1811 = vsub.s32 %v1810, 127
    %v1812 = vand.u32 2147483647, %v1131
    %v1813 = vand.u32 %v1812, 8388607
    %v1814 = vor.u32 %v1813, 8388608
    %v1815 = vsub.s32 0, %v1814
    %v1816 = vadd.s32 %v1811, 1
    %vm1817 = vcmp.gt.s32.totalorder %v1816, 0
    %v1818 = vsel %vm1817, %v1816, 0
    %v1819 = vshrl.u32 %v1818, 5
    %v1820 = vand.u32 %v1818, 31
    %v1821 = vsub.s32 32, %v1820
    %v1822 = vshrl.u32 683565275, %v1821
    %v1823 = vshll.u32 683565275, %v1820
    %v1824 = vshrl.u32 2475754826, %v1821
    %v1825 = vor.u32 %v1823, %v1824
    %v1826 = vshll.u32 2475754826, %v1820
    %v1827 = vshrl.u32 2131351028, %v1821
    %v1828 = vor.u32 %v1826, %v1827
    %v1829 = vshll.u32 2131351028, %v1820
    %v1830 = vshrl.u32 2102212464, %v1821
    %v1831 = vor.u32 %v1829, %v1830
    %v1832 = vshll.u32 2102212464, %v1820
    %v1833 = vshrl.u32 920167782, %v1821
    %v1834 = vor.u32 %v1832, %v1833
    %v1835 = vshll.u32 920167782, %v1820
    %v1836 = vshrl.u32 1326507024, %v1821
    %v1837 = vor.u32 %v1835, %v1836
    %vm1838 = vcmp.lt.s32.totalorder %v1819, 1
    %vm1839 = vcmp.lt.s32.totalorder %v1819, 2
    %vm1840 = vcmp.lt.s32.totalorder %v1819, 3
    %vm1841 = vcmp.lt.s32.totalorder %v1819, 4
    %v1842 = vsel %vm1838, %v1822, %v1825
    %v1843 = vsel %vm1841, %v1831, 2102212464
    %v1844 = vsel %vm1840, %v1828, %v1843
    %v1845 = vsel %vm1839, %v1842, %v1844
    %v1846 = vsel %vm1838, %v1825, %v1828
    %v1847 = vsel %vm1841, %v1834, 920167782
    %v1848 = vsel %vm1840, %v1831, %v1847
    %v1849 = vsel %vm1839, %v1846, %v1848
    %v1850 = vsel %vm1838, %v1828, %v1831
    %v1851 = vsel %vm1841, %v1837, 1326507024
    %v1852 = vsel %vm1840, %v1834, %v1851
    %v1853 = vsel %vm1839, %v1850, %v1852
    %v1854 = vshll.u32 %v1814, 8
    %v1855 = vmul.u32.u64.compose %v1854, %v1853
    %v1856 = vextract.low.u32 %v1855
    %v1857 = vextract.high.u32 %v1855
    %v1858 = vmul.u32.u64.compose %v1854, %v1849
    %v1859 = vextract.low.u32 %v1858
    %v1860 = vextract.high.u32 %v1858
    %v1861 = vmul.u32 %v1854, %v1845
    %v1862 = vadd.s32 %v1857, %v1859
    %vm1863 = vc.u32 %v1857, %v1859
    %v1864 = vadd.s32 %v1860, 1
    %v1865 = vsel %vm1863, %v1864, %v1860
    %v1866 = vadd.s32 %v1861, %v1865
    %v1867 = vadd.s32 %v1866, 536870912
    %v1868 = vshrl.u32 %v1867, 30
    %v1869 = vshll.u32 %v1868, 30
    %v1870 = vsub.s32 %v1866, %v1869
    %vm1871 = vcmp.lt.s32.totalorder %v1870, 0
    %v1872 = vsub.s32 0, %v1870
    %v1873 = vsel %vm1871, %v1872, %v1870
    %v1874 = vclz %v1873
    %v1875 = vsub.s32 %v1874, 2
    %vm1876 = vcmp.gt.s32.totalorder 0, %v1875
    %v1877 = vsel %vm1876, 0, %v1875
    %v1878 = vsub.s32 32, %v1877
    %v1879 = vshll.u32 %v1870, %v1877
    %v1880 = vshrl.u32 %v1862, %v1878
    %v1881 = vor.u32 %v1879, %v1880
    %v1882 = vsub.s32 4294967266, %v1877
    %v1883 = vadd.s32 %v1882, 127
    %v1884 = vshll.u32 %v1883, 23
    %v1885 = vor.u32 4788187, %v1884
    %v1886 = vand.u32 2147483647, %v1885
    %v1888 = vcvt.s32.f32 %v1881
    %v1889 = vmul.f32 %v1888, %v1886
    %v1890 = vxor.u32 %v1889, 2147483648
    %v1891 = vsel %vm1808, %v1890, %v1889
    %v1892 = vsub.s32 4, %v1868
    %v1893 = vsel %vm1808, %v1892, %v1868
    %v1894 = vsel %vm1807, %v1131, %v1891
    %v1895 = vsel %vm1807, 0, %v1893
    %v1896 = vcosq.f32.pop %v1894
    %v1897 = vsinq.f32.pop %v1894
    %vm1898 = vweird.f32 %v1131
    %v1899 = vand.u32 %v1895, 3
    %vm1900 = vcmp.lt.s32.totalorder %v1899, 2
    %vm1901 = vcmp.eq.s32.totalorder %v1899, 0
    %v1902 = vxor.u32 %v1897, 2147483648
    %v1903 = vsel %vm1901, %v1896, %v1902
    %vm1904 = vcmp.eq.s32.totalorder %v1899, 2
    %v1905 = vxor.u32 %v1896, 2147483648
    %v1906 = vsel %vm1904, %v1905, %v1897
    %v1907 = vsel %vm1900, %v1903, %v1906
    %v1908 = vsel %vm1898, nan, %v1907
    %v1909 = vand.u32 2147483647, %v1137
    %vm1910 = vcmp.le.f32.partialorder %v1909, 0.7853982
    %vm1911 = vcmp.lt.s32.totalorder %v1137, 0
    %v1912 = vand.u32 %v1137, 2139095040
    %v1913 = vshrl.u32 %v1912, 23
    %v1914 = vsub.s32 %v1913, 127
    %v1915 = vand.u32 2147483647, %v1137
    %v1916 = vand.u32 %v1915, 8388607
    %v1917 = vor.u32 %v1916, 8388608
    %v1918 = vsub.s32 0, %v1917
    %v1919 = vadd.s32 %v1914, 1
    %vm1920 = vcmp.gt.s32.totalorder %v1919, 0
    %v1921 = vsel %vm1920, %v1919, 0
    %v1922 = vshrl.u32 %v1921, 5
    %v1923 = vand.u32 %v1921, 31
    %v1924 = vsub.s32 32, %v1923
    %v1925 = vshrl.u32 683565275, %v1924
    %v1926 = vshll.u32 683565275, %v1923
    %v1927 = vshrl.u32 2475754826, %v1924
    %v1928 = vor.u32 %v1926, %v1927
    %v1929 = vshll.u32 2475754826, %v1923
    %v1930 = vshrl.u32 2131351028, %v1924
    %v1931 = vor.u32 %v1929, %v1930
    %v1932 = vshll.u32 2131351028, %v1923
    %v1933 = vshrl.u32 2102212464, %v1924
    %v1934 = vor.u32 %v1932, %v1933
    %v1935 = vshll.u32 2102212464, %v1923
    %v1936 = vshrl.u32 920167782, %v1924
    %v1937 = vor.u32 %v1935, %v1936
    %v1938 = vshll.u32 920167782, %v1923
    %v1939 = vshrl.u32 1326507024, %v1924
    %v1940 = vor.u32 %v1938, %v1939
    %vm1941 = vcmp.lt.s32.totalorder %v1922, 1
    %vm1942 = vcmp.lt.s32.totalorder %v1922, 2
    %vm1943 = vcmp.lt.s32.totalorder %v1922, 3
    %vm1944 = vcmp.lt.s32.totalorder %v1922, 4
    %v1945 = vsel %vm1941, %v1925, %v1928
    %v1946 = vsel %vm1944, %v1934, 2102212464
    %v1947 = vsel %vm1943, %v1931, %v1946
    %v1948 = vsel %vm1942, %v1945, %v1947
    %v1949 = vsel %vm1941, %v1928, %v1931
    %v1950 = vsel %vm1944, %v1937, 920167782
    %v1951 = vsel %vm1943, %v1934, %v1950
    %v1952 = vsel %vm1942, %v1949, %v1951
    %v1953 = vsel %vm1941, %v1931, %v1934
    %v1954 = vsel %vm1944, %v1940, 1326507024
    %v1955 = vsel %vm1943, %v1937, %v1954
    %v1956 = vsel %vm1942, %v1953, %v1955
    %v1957 = vshll.u32 %v1917, 8
    %v1958 = vmul.u32.u64.compose %v1957, %v1956
    %v1959 = vextract.low.u32 %v1958
    %v1960 = vextract.high.u32 %v1958
    %v1961 = vmul.u32.u64.compose %v1957, %v1952
    %v1962 = vextract.low.u32 %v1961
    %v1963 = vextract.high.u32 %v1961
    %v1964 = vmul.u32 %v1957, %v1948
    %v1965 = vadd.s32 %v1960, %v1962
    %vm1966 = vc.u32 %v1960, %v1962
    %v1967 = vadd.s32 %v1963, 1
    %v1968 = vsel %vm1966, %v1967, %v1963
    %v1969 = vadd.s32 %v1964, %v1968
    %v1970 = vadd.s32 %v1969, 536870912
    %v1971 = vshrl.u32 %v1970, 30
    %v1972 = vshll.u32 %v1971, 30
    %v1973 = vsub.s32 %v1969, %v1972
    %vm1974 = vcmp.lt.s32.totalorder %v1973, 0
    %v1975 = vsub.s32 0, %v1973
    %v1976 = vsel %vm1974, %v1975, %v1973
    %v1977 = vclz %v1976
    %v1978 = vsub.s32 %v1977, 2
    %vm1979 = vcmp.gt.s32.totalorder 0, %v1978
    %v1980 = vsel %vm1979, 0, %v1978
    %v1981 = vsub.s32 32, %v1980
    %v1982 = vshll.u32 %v1973, %v1980
    %v1983 = vshrl.u32 %v1965, %v1981
    %v1984 = vor.u32 %v1982, %v1983
    %v1985 = vsub.s32 4294967266, %v1980
    %v1986 = vadd.s32 %v1985, 127
    %v1987 = vshll.u32 %v1986, 23
    %v1988 = vor.u32 4788187, %v1987
    %v1989 = vand.u32 2147483647, %v1988
    %v1991 = vcvt.s32.f32 %v1984
    %v1992 = vmul.f32 %v1991, %v1989
    %v1993 = vxor.u32 %v1992, 2147483648
    %v1994 = vsel %vm1911, %v1993, %v1992
    %v1995 = vsub.s32 4, %v1971
    %v1996 = vsel %vm1911, %v1995, %v1971
    %v1997 = vsel %vm1910, %v1137, %v1994
    %v1998 = vsel %vm1910, 0, %v1996
    %v1999 = vcosq.f32.pop %v1997
    %v2000 = vsinq.f32.pop %v1997
    %vm2001 = vweird.f32 %v1137
    %v2002 = vand.u32 %v1998, 3
    %vm2003 = vcmp.lt.s32.totalorder %v2002, 2
    %vm2004 = vcmp.eq.s32.totalorder %v2002, 0
    %v2005 = vxor.u32 %v2000, 2147483648
    %v2006 = vsel %vm2004, %v1999, %v2005
    %vm2007 = vcmp.eq.s32.totalorder %v2002, 2
    %v2008 = vxor.u32 %v1999, 2147483648
    %v2009 = vsel %vm2007, %v2008, %v2000
    %v2010 = vsel %vm2003, %v2006, %v2009
    %v2011 = vsel %vm2001, nan, %v2010
    %v2012 = vand.u32 2147483647, %v1143
    %vm2013 = vcmp.le.f32.partialorder %v2012, 0.7853982
    %vm2014 = vcmp.lt.s32.totalorder %v1143, 0
    %v2015 = vand.u32 %v1143, 2139095040
    %v2016 = vshrl.u32 %v2015, 23
    %v2017 = vsub.s32 %v2016, 127
    %v2018 = vand.u32 2147483647, %v1143
    %v2019 = vand.u32 %v2018, 8388607
    %v2020 = vor.u32 %v2019, 8388608
    %v2021 = vsub.s32 0, %v2020
    %v2022 = vadd.s32 %v2017, 1
    %vm2023 = vcmp.gt.s32.totalorder %v2022, 0
    %v2024 = vsel %vm2023, %v2022, 0
    %v2025 = vshrl.u32 %v2024, 5
    %v2026 = vand.u32 %v2024, 31
    %v2027 = vsub.s32 32, %v2026
    %v2028 = vshrl.u32 683565275, %v2027
    %v2029 = vshll.u32 683565275, %v2026
    %v2030 = vshrl.u32 2475754826, %v2027
    %v2031 = vor.u32 %v2029, %v2030
    %v2032 = vshll.u32 2475754826, %v2026
    %v2033 = vshrl.u32 2131351028, %v2027
    %v2034 = vor.u32 %v2032, %v2033
    %v2035 = vshll.u32 2131351028, %v2026
    %v2036 = vshrl.u32 2102212464, %v2027
    %v2037 = vor.u32 %v2035, %v2036
    %v2038 = vshll.u32 2102212464, %v2026
    %v2039 = vshrl.u32 920167782, %v2027
    %v2040 = vor.u32 %v2038, %v2039
    %v2041 = vshll.u32 920167782, %v2026
    %v2042 = vshrl.u32 1326507024, %v2027
    %v2043 = vor.u32 %v2041, %v2042
    %vm2044 = vcmp.lt.s32.totalorder %v2025, 1
    %vm2045 = vcmp.lt.s32.totalorder %v2025, 2
    %vm2046 = vcmp.lt.s32.totalorder %v2025, 3
    %vm2047 = vcmp.lt.s32.totalorder %v2025, 4
    %v2048 = vsel %vm2044, %v2028, %v2031
    %v2049 = vsel %vm2047, %v2037, 2102212464
    %v2050 = vsel %vm2046, %v2034, %v2049
    %v2051 = vsel %vm2045, %v2048, %v2050
    %v2052 = vsel %vm2044, %v2031, %v2034
    %v2053 = vsel %vm2047, %v2040, 920167782
    %v2054 = vsel %vm2046, %v2037, %v2053
    %v2055 = vsel %vm2045, %v2052, %v2054
    %v2056 = vsel %vm2044, %v2034, %v2037
    %v2057 = vsel %vm2047, %v2043, 1326507024
    %v2058 = vsel %vm2046, %v2040, %v2057
    %v2059 = vsel %vm2045, %v2056, %v2058
    %v2060 = vshll.u32 %v2020, 8
    %v2061 = vmul.u32.u64.compose %v2060, %v2059
    %v2062 = vextract.low.u32 %v2061
    %v2063 = vextract.high.u32 %v2061
    %v2064 = vmul.u32.u64.compose %v2060, %v2055
    %v2065 = vextract.low.u32 %v2064
    %v2066 = vextract.high.u32 %v2064
    %v2067 = vmul.u32 %v2060, %v2051
    %v2068 = vadd.s32 %v2063, %v2065
    %vm2069 = vc.u32 %v2063, %v2065
    %v2070 = vadd.s32 %v2066, 1
    %v2071 = vsel %vm2069, %v2070, %v2066
    %v2072 = vadd.s32 %v2067, %v2071
    %v2073 = vadd.s32 %v2072, 536870912
    %v2074 = vshrl.u32 %v2073, 30
    %v2075 = vshll.u32 %v2074, 30
    %v2076 = vsub.s32 %v2072, %v2075
    %vm2077 = vcmp.lt.s32.totalorder %v2076, 0
    %v2078 = vsub.s32 0, %v2076
    %v2079 = vsel %vm2077, %v2078, %v2076
    %v2080 = vclz %v2079
    %v2081 = vsub.s32 %v2080, 2
    %vm2082 = vcmp.gt.s32.totalorder 0, %v2081
    %v2083 = vsel %vm2082, 0, %v2081
    %v2084 = vsub.s32 32, %v2083
    %v2085 = vshll.u32 %v2076, %v2083
    %v2086 = vshrl.u32 %v2068, %v2084
    %v2087 = vor.u32 %v2085, %v2086
    %v2088 = vsub.s32 4294967266, %v2083
    %v2089 = vadd.s32 %v2088, 127
    %v2090 = vshll.u32 %v2089, 23
    %v2091 = vor.u32 4788187, %v2090
    %v2092 = vand.u32 2147483647, %v2091
    %v2094 = vcvt.s32.f32 %v2087
    %v2095 = vmul.f32 %v2094, %v2092
    %v2096 = vxor.u32 %v2095, 2147483648
    %v2097 = vsel %vm2014, %v2096, %v2095
    %v2098 = vsub.s32 4, %v2074
    %v2099 = vsel %vm2014, %v2098, %v2074
    %v2100 = vsel %vm2013, %v1143, %v2097
    %v2101 = vsel %vm2013, 0, %v2099
    %v2102 = vcosq.f32.pop %v2100
    %v2103 = vsinq.f32.pop %v2100
    %vm2104 = vweird.f32 %v1143
    %v2105 = vand.u32 %v2101, 3
    %vm2106 = vcmp.lt.s32.totalorder %v2105, 2
    %vm2107 = vcmp.eq.s32.totalorder %v2105, 0
    %v2108 = vxor.u32 %v2103, 2147483648
    %v2109 = vsel %vm2107, %v2102, %v2108
    %vm2110 = vcmp.eq.s32.totalorder %v2105, 2
    %v2111 = vxor.u32 %v2102, 2147483648
    %v2112 = vsel %vm2110, %v2111, %v2103
    %v2113 = vsel %vm2106, %v2109, %v2112
    %v2114 = vsel %vm2104, nan, %v2113
    %v2115 = vand.u32 2147483647, %v1149
    %vm2116 = vcmp.le.f32.partialorder %v2115, 0.7853982
    %vm2117 = vcmp.lt.s32.totalorder %v1149, 0
    %v2118 = vand.u32 %v1149, 2139095040
    %v2119 = vshrl.u32 %v2118, 23
    %v2120 = vsub.s32 %v2119, 127
    %v2121 = vand.u32 2147483647, %v1149
    %v2122 = vand.u32 %v2121, 8388607
    %v2123 = vor.u32 %v2122, 8388608
    %v2124 = vsub.s32 0, %v2123
    %v2125 = vadd.s32 %v2120, 1
    %vm2126 = vcmp.gt.s32.totalorder %v2125, 0
    %v2127 = vsel %vm2126, %v2125, 0
    %v2128 = vshrl.u32 %v2127, 5
    %v2129 = vand.u32 %v2127, 31
    %v2130 = vsub.s32 32, %v2129
    %v2131 = vshrl.u32 683565275, %v2130
    %v2132 = vshll.u32 683565275, %v2129
    %v2133 = vshrl.u32 2475754826, %v2130
    %v2134 = vor.u32 %v2132, %v2133
    %v2135 = vshll.u32 2475754826, %v2129
    %v2136 = vshrl.u32 2131351028, %v2130
    %v2137 = vor.u32 %v2135, %v2136
    %v2138 = vshll.u32 2131351028, %v2129
    %v2139 = vshrl.u32 2102212464, %v2130
    %v2140 = vor.u32 %v2138, %v2139
    %v2141 = vshll.u32 2102212464, %v2129
    %v2142 = vshrl.u32 920167782, %v2130
    %v2143 = vor.u32 %v2141, %v2142
    %v2144 = vshll.u32 920167782, %v2129
    %v2145 = vshrl.u32 1326507024, %v2130
    %v2146 = vor.u32 %v2144, %v2145
    %vm2147 = vcmp.lt.s32.totalorder %v2128, 1
    %vm2148 = vcmp.lt.s32.totalorder %v2128, 2
    %vm2149 = vcmp.lt.s32.totalorder %v2128, 3
    %vm2150 = vcmp.lt.s32.totalorder %v2128, 4
    %v2151 = vsel %vm2147, %v2131, %v2134
    %v2152 = vsel %vm2150, %v2140, 2102212464
    %v2153 = vsel %vm2149, %v2137, %v2152
    %v2154 = vsel %vm2148, %v2151, %v2153
    %v2155 = vsel %vm2147, %v2134, %v2137
    %v2156 = vsel %vm2150, %v2143, 920167782
    %v2157 = vsel %vm2149, %v2140, %v2156
    %v2158 = vsel %vm2148, %v2155, %v2157
    %v2159 = vsel %vm2147, %v2137, %v2140
    %v2160 = vsel %vm2150, %v2146, 1326507024
    %v2161 = vsel %vm2149, %v2143, %v2160
    %v2162 = vsel %vm2148, %v2159, %v2161
    %v2163 = vshll.u32 %v2123, 8
    %v2164 = vmul.u32.u64.compose %v2163, %v2162
    %v2165 = vextract.low.u32 %v2164
    %v2166 = vextract.high.u32 %v2164
    %v2167 = vmul.u32.u64.compose %v2163, %v2158
    %v2168 = vextract.low.u32 %v2167
    %v2169 = vextract.high.u32 %v2167
    %v2170 = vmul.u32 %v2163, %v2154
    %v2171 = vadd.s32 %v2166, %v2168
    %vm2172 = vc.u32 %v2166, %v2168
    %v2173 = vadd.s32 %v2169, 1
    %v2174 = vsel %vm2172, %v2173, %v2169
    %v2175 = vadd.s32 %v2170, %v2174
    %v2176 = vadd.s32 %v2175, 536870912
    %v2177 = vshrl.u32 %v2176, 30
    %v2178 = vshll.u32 %v2177, 30
    %v2179 = vsub.s32 %v2175, %v2178
    %vm2180 = vcmp.lt.s32.totalorder %v2179, 0
    %v2181 = vsub.s32 0, %v2179
    %v2182 = vsel %vm2180, %v2181, %v2179
    %v2183 = vclz %v2182
    %v2184 = vsub.s32 %v2183, 2
    %vm2185 = vcmp.gt.s32.totalorder 0, %v2184
    %v2186 = vsel %vm2185, 0, %v2184
    %v2187 = vsub.s32 32, %v2186
    %v2188 = vshll.u32 %v2179, %v2186
    %v2189 = vshrl.u32 %v2171, %v2187
    %v2190 = vor.u32 %v2188, %v2189
    %v2191 = vsub.s32 4294967266, %v2186
    %v2192 = vadd.s32 %v2191, 127
    %v2193 = vshll.u32 %v2192, 23
    %v2194 = vor.u32 4788187, %v2193
    %v2195 = vand.u32 2147483647, %v2194
    %v2197 = vcvt.s32.f32 %v2190
    %v2198 = vmul.f32 %v2197, %v2195
    %v2199 = vxor.u32 %v2198, 2147483648
    %v2200 = vsel %vm2117, %v2199, %v2198
    %v2201 = vsub.s32 4, %v2177
    %v2202 = vsel %vm2117, %v2201, %v2177
    %v2203 = vsel %vm2116, %v1149, %v2200
    %v2204 = vsel %vm2116, 0, %v2202
    %v2205 = vcosq.f32.pop %v2203
    %v2206 = vsinq.f32.pop %v2203
    %vm2207 = vweird.f32 %v1149
    %v2208 = vand.u32 %v2204, 3
    %vm2209 = vcmp.lt.s32.totalorder %v2208, 2
    %vm2210 = vcmp.eq.s32.totalorder %v2208, 0
    %v2211 = vxor.u32 %v2206, 2147483648
    %v2212 = vsel %vm2210, %v2205, %v2211
    %vm2213 = vcmp.eq.s32.totalorder %v2208, 2
    %v2214 = vxor.u32 %v2205, 2147483648
    %v2215 = vsel %vm2213, %v2214, %v2206
    %v2216 = vsel %vm2209, %v2212, %v2215
    %v2217 = vsel %vm2207, nan, %v2216
    %v2218 = vand.u32 2147483647, %v1155
    %vm2219 = vcmp.le.f32.partialorder %v2218, 0.7853982
    %vm2220 = vcmp.lt.s32.totalorder %v1155, 0
    %v2221 = vand.u32 %v1155, 2139095040
    %v2222 = vshrl.u32 %v2221, 23
    %v2223 = vsub.s32 %v2222, 127
    %v2224 = vand.u32 2147483647, %v1155
    %v2225 = vand.u32 %v2224, 8388607
    %v2226 = vor.u32 %v2225, 8388608
    %v2227 = vsub.s32 0, %v2226
    %v2228 = vadd.s32 %v2223, 1
    %vm2229 = vcmp.gt.s32.totalorder %v2228, 0
    %v2230 = vsel %vm2229, %v2228, 0
    %v2231 = vshrl.u32 %v2230, 5
    %v2232 = vand.u32 %v2230, 31
    %v2233 = vsub.s32 32, %v2232
    %v2234 = vshrl.u32 683565275, %v2233
    %v2235 = vshll.u32 683565275, %v2232
    %v2236 = vshrl.u32 2475754826, %v2233
    %v2237 = vor.u32 %v2235, %v2236
    %v2238 = vshll.u32 2475754826, %v2232
    %v2239 = vshrl.u32 2131351028, %v2233
    %v2240 = vor.u32 %v2238, %v2239
    %v2241 = vshll.u32 2131351028, %v2232
    %v2242 = vshrl.u32 2102212464, %v2233
    %v2243 = vor.u32 %v2241, %v2242
    %v2244 = vshll.u32 2102212464, %v2232
    %v2245 = vshrl.u32 920167782, %v2233
    %v2246 = vor.u32 %v2244, %v2245
    %v2247 = vshll.u32 920167782, %v2232
    %v2248 = vshrl.u32 1326507024, %v2233
    %v2249 = vor.u32 %v2247, %v2248
    %vm2250 = vcmp.lt.s32.totalorder %v2231, 1
    %vm2251 = vcmp.lt.s32.totalorder %v2231, 2
    %vm2252 = vcmp.lt.s32.totalorder %v2231, 3
    %vm2253 = vcmp.lt.s32.totalorder %v2231, 4
    %v2254 = vsel %vm2250, %v2234, %v2237
    %v2255 = vsel %vm2253, %v2243, 2102212464
    %v2256 = vsel %vm2252, %v2240, %v2255
    %v2257 = vsel %vm2251, %v2254, %v2256
    %v2258 = vsel %vm2250, %v2237, %v2240
    %v2259 = vsel %vm2253, %v2246, 920167782
    %v2260 = vsel %vm2252, %v2243, %v2259
    %v2261 = vsel %vm2251, %v2258, %v2260
    %v2262 = vsel %vm2250, %v2240, %v2243
    %v2263 = vsel %vm2253, %v2249, 1326507024
    %v2264 = vsel %vm2252, %v2246, %v2263
    %v2265 = vsel %vm2251, %v2262, %v2264
    %v2266 = vshll.u32 %v2226, 8
    %v2267 = vmul.u32.u64.compose %v2266, %v2265
    %v2268 = vextract.low.u32 %v2267
    %v2269 = vextract.high.u32 %v2267
    %v2270 = vmul.u32.u64.compose %v2266, %v2261
    %v2271 = vextract.low.u32 %v2270
    %v2272 = vextract.high.u32 %v2270
    %v2273 = vmul.u32 %v2266, %v2257
    %v2274 = vadd.s32 %v2269, %v2271
    %vm2275 = vc.u32 %v2269, %v2271
    %v2276 = vadd.s32 %v2272, 1
    %v2277 = vsel %vm2275, %v2276, %v2272
    %v2278 = vadd.s32 %v2273, %v2277
    %v2279 = vadd.s32 %v2278, 536870912
    %v2280 = vshrl.u32 %v2279, 30
    %v2281 = vshll.u32 %v2280, 30
    %v2282 = vsub.s32 %v2278, %v2281
    %vm2283 = vcmp.lt.s32.totalorder %v2282, 0
    %v2284 = vsub.s32 0, %v2282
    %v2285 = vsel %vm2283, %v2284, %v2282
    %v2286 = vclz %v2285
    %v2287 = vsub.s32 %v2286, 2
    %vm2288 = vcmp.gt.s32.totalorder 0, %v2287
    %v2289 = vsel %vm2288, 0, %v2287
    %v2290 = vsub.s32 32, %v2289
    %v2291 = vshll.u32 %v2282, %v2289
    %v2292 = vshrl.u32 %v2274, %v2290
    %v2293 = vor.u32 %v2291, %v2292
    %v2294 = vsub.s32 4294967266, %v2289
    %v2295 = vadd.s32 %v2294, 127
    %v2296 = vshll.u32 %v2295, 23
    %v2297 = vor.u32 4788187, %v2296
    %v2298 = vand.u32 2147483647, %v2297
    %v2300 = vcvt.s32.f32 %v2293
    %v2301 = vmul.f32 %v2300, %v2298
    %v2302 = vxor.u32 %v2301, 2147483648
    %v2303 = vsel %vm2220, %v2302, %v2301
    %v2304 = vsub.s32 4, %v2280
    %v2305 = vsel %vm2220, %v2304, %v2280
    %v2306 = vsel %vm2219, %v1155, %v2303
    %v2307 = vsel %vm2219, 0, %v2305
    %v2308 = vcosq.f32.pop %v2306
    %v2309 = vsinq.f32.pop %v2306
    %vm2310 = vweird.f32 %v1155
    %v2311 = vand.u32 %v2307, 3
    %vm2312 = vcmp.lt.s32.totalorder %v2311, 2
    %vm2313 = vcmp.eq.s32.totalorder %v2311, 0
    %v2314 = vxor.u32 %v2309, 2147483648
    %v2315 = vsel %vm2313, %v2308, %v2314
    %vm2316 = vcmp.eq.s32.totalorder %v2311, 2
    %v2317 = vxor.u32 %v2308, 2147483648
    %v2318 = vsel %vm2316, %v2317, %v2309
    %v2319 = vsel %vm2312, %v2315, %v2318
    %v2320 = vsel %vm2310, nan, %v2319
    %v2321 = vand.u32 2147483647, %v1161
    %vm2322 = vcmp.le.f32.partialorder %v2321, 0.7853982
    %vm2323 = vcmp.lt.s32.totalorder %v1161, 0
    %v2324 = vand.u32 %v1161, 2139095040
    %v2325 = vshrl.u32 %v2324, 23
    %v2326 = vsub.s32 %v2325, 127
    %v2327 = vand.u32 2147483647, %v1161
    %v2328 = vand.u32 %v2327, 8388607
    %v2329 = vor.u32 %v2328, 8388608
    %v2330 = vsub.s32 0, %v2329
    %v2331 = vadd.s32 %v2326, 1
    %vm2332 = vcmp.gt.s32.totalorder %v2331, 0
    %v2333 = vsel %vm2332, %v2331, 0
    %v2334 = vshrl.u32 %v2333, 5
    %v2335 = vand.u32 %v2333, 31
    %v2336 = vsub.s32 32, %v2335
    %v2337 = vshrl.u32 683565275, %v2336
    %v2338 = vshll.u32 683565275, %v2335
    %v2339 = vshrl.u32 2475754826, %v2336
    %v2340 = vor.u32 %v2338, %v2339
    %v2341 = vshll.u32 2475754826, %v2335
    %v2342 = vshrl.u32 2131351028, %v2336
    %v2343 = vor.u32 %v2341, %v2342
    %v2344 = vshll.u32 2131351028, %v2335
    %v2345 = vshrl.u32 2102212464, %v2336
    %v2346 = vor.u32 %v2344, %v2345
    %v2347 = vshll.u32 2102212464, %v2335
    %v2348 = vshrl.u32 920167782, %v2336
    %v2349 = vor.u32 %v2347, %v2348
    %v2350 = vshll.u32 920167782, %v2335
    %v2351 = vshrl.u32 1326507024, %v2336
    %v2352 = vor.u32 %v2350, %v2351
    %vm2353 = vcmp.lt.s32.totalorder %v2334, 1
    %vm2354 = vcmp.lt.s32.totalorder %v2334, 2
    %vm2355 = vcmp.lt.s32.totalorder %v2334, 3
    %vm2356 = vcmp.lt.s32.totalorder %v2334, 4
    %v2357 = vsel %vm2353, %v2337, %v2340
    %v2358 = vsel %vm2356, %v2346, 2102212464
    %v2359 = vsel %vm2355, %v2343, %v2358
    %v2360 = vsel %vm2354, %v2357, %v2359
    %v2361 = vsel %vm2353, %v2340, %v2343
    %v2362 = vsel %vm2356, %v2349, 920167782
    %v2363 = vsel %vm2355, %v2346, %v2362
    %v2364 = vsel %vm2354, %v2361, %v2363
    %v2365 = vsel %vm2353, %v2343, %v2346
    %v2366 = vsel %vm2356, %v2352, 1326507024
    %v2367 = vsel %vm2355, %v2349, %v2366
    %v2368 = vsel %vm2354, %v2365, %v2367
    %v2369 = vshll.u32 %v2329, 8
    %v2370 = vmul.u32.u64.compose %v2369, %v2368
    %v2371 = vextract.low.u32 %v2370
    %v2372 = vextract.high.u32 %v2370
    %v2373 = vmul.u32.u64.compose %v2369, %v2364
    %v2374 = vextract.low.u32 %v2373
    %v2375 = vextract.high.u32 %v2373
    %v2376 = vmul.u32 %v2369, %v2360
    %v2377 = vadd.s32 %v2372, %v2374
    %vm2378 = vc.u32 %v2372, %v2374
    %v2379 = vadd.s32 %v2375, 1
    %v2380 = vsel %vm2378, %v2379, %v2375
    %v2381 = vadd.s32 %v2376, %v2380
    %v2382 = vadd.s32 %v2381, 536870912
    %v2383 = vshrl.u32 %v2382, 30
    %v2384 = vshll.u32 %v2383, 30
    %v2385 = vsub.s32 %v2381, %v2384
    %vm2386 = vcmp.lt.s32.totalorder %v2385, 0
    %v2387 = vsub.s32 0, %v2385
    %v2388 = vsel %vm2386, %v2387, %v2385
    %v2389 = vclz %v2388
    %v2390 = vsub.s32 %v2389, 2
    %vm2391 = vcmp.gt.s32.totalorder 0, %v2390
    %v2392 = vsel %vm2391, 0, %v2390
    %v2393 = vsub.s32 32, %v2392
    %v2394 = vshll.u32 %v2385, %v2392
    %v2395 = vshrl.u32 %v2377, %v2393
    %v2396 = vor.u32 %v2394, %v2395
    %v2397 = vsub.s32 4294967266, %v2392
    %v2398 = vadd.s32 %v2397, 127
    %v2399 = vshll.u32 %v2398, 23
    %v2400 = vor.u32 4788187, %v2399
    %v2401 = vand.u32 2147483647, %v2400
    %v2403 = vcvt.s32.f32 %v2396
    %v2404 = vmul.f32 %v2403, %v2401
    %v2405 = vxor.u32 %v2404, 2147483648
    %v2406 = vsel %vm2323, %v2405, %v2404
    %v2407 = vsub.s32 4, %v2383
    %v2408 = vsel %vm2323, %v2407, %v2383
    %v2409 = vsel %vm2322, %v1161, %v2406
    %v2410 = vsel %vm2322, 0, %v2408
    %v2411 = vcosq.f32.pop %v2409
    %v2412 = vsinq.f32.pop %v2409
    %vm2413 = vweird.f32 %v1161
    %v2414 = vand.u32 %v2410, 3
    %vm2415 = vcmp.lt.s32.totalorder %v2414, 2
    %vm2416 = vcmp.eq.s32.totalorder %v2414, 0
    %v2417 = vxor.u32 %v2412, 2147483648
    %v2418 = vsel %vm2416, %v2411, %v2417
    %vm2419 = vcmp.eq.s32.totalorder %v2414, 2
    %v2420 = vxor.u32 %v2411, 2147483648
    %v2421 = vsel %vm2419, %v2420, %v2412
    %v2422 = vsel %vm2415, %v2418, %v2421
    %v2423 = vsel %vm2413, nan, %v2422
    %v2424 = vand.u32 2147483647, %v1167
    %vm2425 = vcmp.le.f32.partialorder %v2424, 0.7853982
    %vm2426 = vcmp.lt.s32.totalorder %v1167, 0
    %v2427 = vand.u32 %v1167, 2139095040
    %v2428 = vshrl.u32 %v2427, 23
    %v2429 = vsub.s32 %v2428, 127
    %v2430 = vand.u32 2147483647, %v1167
    %v2431 = vand.u32 %v2430, 8388607
    %v2432 = vor.u32 %v2431, 8388608
    %v2433 = vsub.s32 0, %v2432
    %v2434 = vadd.s32 %v2429, 1
    %vm2435 = vcmp.gt.s32.totalorder %v2434, 0
    %v2436 = vsel %vm2435, %v2434, 0
    %v2437 = vshrl.u32 %v2436, 5
    %v2438 = vand.u32 %v2436, 31
    %v2439 = vsub.s32 32, %v2438
    %v2440 = vshrl.u32 683565275, %v2439
    %v2441 = vshll.u32 683565275, %v2438
    %v2442 = vshrl.u32 2475754826, %v2439
    %v2443 = vor.u32 %v2441, %v2442
    %v2444 = vshll.u32 2475754826, %v2438
    %v2445 = vshrl.u32 2131351028, %v2439
    %v2446 = vor.u32 %v2444, %v2445
    %v2447 = vshll.u32 2131351028, %v2438
    %v2448 = vshrl.u32 2102212464, %v2439
    %v2449 = vor.u32 %v2447, %v2448
    %v2450 = vshll.u32 2102212464, %v2438
    %v2451 = vshrl.u32 920167782, %v2439
    %v2452 = vor.u32 %v2450, %v2451
    %v2453 = vshll.u32 920167782, %v2438
    %v2454 = vshrl.u32 1326507024, %v2439
    %v2455 = vor.u32 %v2453, %v2454
    %vm2456 = vcmp.lt.s32.totalorder %v2437, 1
    %vm2457 = vcmp.lt.s32.totalorder %v2437, 2
    %vm2458 = vcmp.lt.s32.totalorder %v2437, 3
    %vm2459 = vcmp.lt.s32.totalorder %v2437, 4
    %v2460 = vsel %vm2456, %v2440, %v2443
    %v2461 = vsel %vm2459, %v2449, 2102212464
    %v2462 = vsel %vm2458, %v2446, %v2461
    %v2463 = vsel %vm2457, %v2460, %v2462
    %v2464 = vsel %vm2456, %v2443, %v2446
    %v2465 = vsel %vm2459, %v2452, 920167782
    %v2466 = vsel %vm2458, %v2449, %v2465
    %v2467 = vsel %vm2457, %v2464, %v2466
    %v2468 = vsel %vm2456, %v2446, %v2449
    %v2469 = vsel %vm2459, %v2455, 1326507024
    %v2470 = vsel %vm2458, %v2452, %v2469
    %v2471 = vsel %vm2457, %v2468, %v2470
    %v2472 = vshll.u32 %v2432, 8
    %v2473 = vmul.u32.u64.compose %v2472, %v2471
    %v2474 = vextract.low.u32 %v2473
    %v2475 = vextract.high.u32 %v2473
    %v2476 = vmul.u32.u64.compose %v2472, %v2467
    %v2477 = vextract.low.u32 %v2476
    %v2478 = vextract.high.u32 %v2476
    %v2479 = vmul.u32 %v2472, %v2463
    %v2480 = vadd.s32 %v2475, %v2477
    %vm2481 = vc.u32 %v2475, %v2477
    %v2482 = vadd.s32 %v2478, 1
    %v2483 = vsel %vm2481, %v2482, %v2478
    %v2484 = vadd.s32 %v2479, %v2483
    %v2485 = vadd.s32 %v2484, 536870912
    %v2486 = vshrl.u32 %v2485, 30
    %v2487 = vshll.u32 %v2486, 30
    %v2488 = vsub.s32 %v2484, %v2487
    %vm2489 = vcmp.lt.s32.totalorder %v2488, 0
    %v2490 = vsub.s32 0, %v2488
    %v2491 = vsel %vm2489, %v2490, %v2488
    %v2492 = vclz %v2491
    %v2493 = vsub.s32 %v2492, 2
    %vm2494 = vcmp.gt.s32.totalorder 0, %v2493
    %v2495 = vsel %vm2494, 0, %v2493
    %v2496 = vsub.s32 32, %v2495
    %v2497 = vshll.u32 %v2488, %v2495
    %v2498 = vshrl.u32 %v2480, %v2496
    %v2499 = vor.u32 %v2497, %v2498
    %v2500 = vsub.s32 4294967266, %v2495
    %v2501 = vadd.s32 %v2500, 127
    %v2502 = vshll.u32 %v2501, 23
    %v2503 = vor.u32 4788187, %v2502
    %v2504 = vand.u32 2147483647, %v2503
    %v2506 = vcvt.s32.f32 %v2499
    %v2507 = vmul.f32 %v2506, %v2504
    %v2508 = vxor.u32 %v2507, 2147483648
    %v2509 = vsel %vm2426, %v2508, %v2507
    %v2510 = vsub.s32 4, %v2486
    %v2511 = vsel %vm2426, %v2510, %v2486
    %v2512 = vsel %vm2425, %v1167, %v2509
    %v2513 = vsel %vm2425, 0, %v2511
    %v2514 = vcosq.f32.pop %v2512
    %v2515 = vsinq.f32.pop %v2512
    %vm2516 = vweird.f32 %v1167
    %v2517 = vand.u32 %v2513, 3
    %vm2518 = vcmp.lt.s32.totalorder %v2517, 2
    %vm2519 = vcmp.eq.s32.totalorder %v2517, 0
    %v2520 = vxor.u32 %v2515, 2147483648
    %v2521 = vsel %vm2519, %v2514, %v2520
    %vm2522 = vcmp.eq.s32.totalorder %v2517, 2
    %v2523 = vxor.u32 %v2514, 2147483648
    %v2524 = vsel %vm2522, %v2523, %v2515
    %v2525 = vsel %vm2518, %v2521, %v2524
    %v2526 = vsel %vm2516, nan, %v2525
    %v2527 = vand.u32 2147483647, %v1173
    %vm2528 = vcmp.le.f32.partialorder %v2527, 0.7853982
    %vm2529 = vcmp.lt.s32.totalorder %v1173, 0
    %v2530 = vand.u32 %v1173, 2139095040
    %v2531 = vshrl.u32 %v2530, 23
    %v2532 = vsub.s32 %v2531, 127
    %v2533 = vand.u32 2147483647, %v1173
    %v2534 = vand.u32 %v2533, 8388607
    %v2535 = vor.u32 %v2534, 8388608
    %v2536 = vsub.s32 0, %v2535
    %v2537 = vadd.s32 %v2532, 1
    %vm2538 = vcmp.gt.s32.totalorder %v2537, 0
    %v2539 = vsel %vm2538, %v2537, 0
    %v2540 = vshrl.u32 %v2539, 5
    %v2541 = vand.u32 %v2539, 31
    %v2542 = vsub.s32 32, %v2541
    %v2543 = vshrl.u32 683565275, %v2542
    %v2544 = vshll.u32 683565275, %v2541
    %v2545 = vshrl.u32 2475754826, %v2542
    %v2546 = vor.u32 %v2544, %v2545
    %v2547 = vshll.u32 2475754826, %v2541
    %v2548 = vshrl.u32 2131351028, %v2542
    %v2549 = vor.u32 %v2547, %v2548
    %v2550 = vshll.u32 2131351028, %v2541
    %v2551 = vshrl.u32 2102212464, %v2542
    %v2552 = vor.u32 %v2550, %v2551
    %v2553 = vshll.u32 2102212464, %v2541
    %v2554 = vshrl.u32 920167782, %v2542
    %v2555 = vor.u32 %v2553, %v2554
    %v2556 = vshll.u32 920167782, %v2541
    %v2557 = vshrl.u32 1326507024, %v2542
    %v2558 = vor.u32 %v2556, %v2557
    %vm2559 = vcmp.lt.s32.totalorder %v2540, 1
    %vm2560 = vcmp.lt.s32.totalorder %v2540, 2
    %vm2561 = vcmp.lt.s32.totalorder %v2540, 3
    %vm2562 = vcmp.lt.s32.totalorder %v2540, 4
    %v2563 = vsel %vm2559, %v2543, %v2546
    %v2564 = vsel %vm2562, %v2552, 2102212464
    %v2565 = vsel %vm2561, %v2549, %v2564
    %v2566 = vsel %vm2560, %v2563, %v2565
    %v2567 = vsel %vm2559, %v2546, %v2549
    %v2568 = vsel %vm2562, %v2555, 920167782
    %v2569 = vsel %vm2561, %v2552, %v2568
    %v2570 = vsel %vm2560, %v2567, %v2569
    %v2571 = vsel %vm2559, %v2549, %v2552
    %v2572 = vsel %vm2562, %v2558, 1326507024
    %v2573 = vsel %vm2561, %v2555, %v2572
    %v2574 = vsel %vm2560, %v2571, %v2573
    %v2575 = vshll.u32 %v2535, 8
    %v2576 = vmul.u32.u64.compose %v2575, %v2574
    %v2577 = vextract.low.u32 %v2576
    %v2578 = vextract.high.u32 %v2576
    %v2579 = vmul.u32.u64.compose %v2575, %v2570
    %v2580 = vextract.low.u32 %v2579
    %v2581 = vextract.high.u32 %v2579
    %v2582 = vmul.u32 %v2575, %v2566
    %v2583 = vadd.s32 %v2578, %v2580
    %vm2584 = vc.u32 %v2578, %v2580
    %v2585 = vadd.s32 %v2581, 1
    %v2586 = vsel %vm2584, %v2585, %v2581
    %v2587 = vadd.s32 %v2582, %v2586
    %v2588 = vadd.s32 %v2587, 536870912
    %v2589 = vshrl.u32 %v2588, 30
    %v2590 = vshll.u32 %v2589, 30
    %v2591 = vsub.s32 %v2587, %v2590
    %vm2592 = vcmp.lt.s32.totalorder %v2591, 0
    %v2593 = vsub.s32 0, %v2591
    %v2594 = vsel %vm2592, %v2593, %v2591
    %v2595 = vclz %v2594
    %v2596 = vsub.s32 %v2595, 2
    %vm2597 = vcmp.gt.s32.totalorder 0, %v2596
    %v2598 = vsel %vm2597, 0, %v2596
    %v2599 = vsub.s32 32, %v2598
    %v2600 = vshll.u32 %v2591, %v2598
    %v2601 = vshrl.u32 %v2583, %v2599
    %v2602 = vor.u32 %v2600, %v2601
    %v2603 = vsub.s32 4294967266, %v2598
    %v2604 = vadd.s32 %v2603, 127
    %v2605 = vshll.u32 %v2604, 23
    %v2606 = vor.u32 4788187, %v2605
    %v2607 = vand.u32 2147483647, %v2606
    %v2609 = vcvt.s32.f32 %v2602
    %v2610 = vmul.f32 %v2609, %v2607
    %v2611 = vxor.u32 %v2610, 2147483648
    %v2612 = vsel %vm2529, %v2611, %v2610
    %v2613 = vsub.s32 4, %v2589
    %v2614 = vsel %vm2529, %v2613, %v2589
    %v2615 = vsel %vm2528, %v1173, %v2612
    %v2616 = vsel %vm2528, 0, %v2614
    %v2617 = vcosq.f32.pop %v2615
    %v2618 = vsinq.f32.pop %v2615
    %vm2619 = vweird.f32 %v1173
    %v2620 = vand.u32 %v2616, 3
    %vm2621 = vcmp.lt.s32.totalorder %v2620, 2
    %vm2622 = vcmp.eq.s32.totalorder %v2620, 0
    %v2623 = vxor.u32 %v2618, 2147483648
    %v2624 = vsel %vm2622, %v2617, %v2623
    %vm2625 = vcmp.eq.s32.totalorder %v2620, 2
    %v2626 = vxor.u32 %v2617, 2147483648
    %v2627 = vsel %vm2625, %v2626, %v2618
    %v2628 = vsel %vm2621, %v2624, %v2627
    %v2629 = vsel %vm2619, nan, %v2628
    %v2630 = vand.u32 2147483647, %v1179
    %vm2631 = vcmp.le.f32.partialorder %v2630, 0.7853982
    %vm2632 = vcmp.lt.s32.totalorder %v1179, 0
    %v2633 = vand.u32 %v1179, 2139095040
    %v2634 = vshrl.u32 %v2633, 23
    %v2635 = vsub.s32 %v2634, 127
    %v2636 = vand.u32 2147483647, %v1179
    %v2637 = vand.u32 %v2636, 8388607
    %v2638 = vor.u32 %v2637, 8388608
    %v2639 = vsub.s32 0, %v2638
    %v2640 = vadd.s32 %v2635, 1
    %vm2641 = vcmp.gt.s32.totalorder %v2640, 0
    %v2642 = vsel %vm2641, %v2640, 0
    %v2643 = vshrl.u32 %v2642, 5
    %v2644 = vand.u32 %v2642, 31
    %v2645 = vsub.s32 32, %v2644
    %v2646 = vshrl.u32 683565275, %v2645
    %v2647 = vshll.u32 683565275, %v2644
    %v2648 = vshrl.u32 2475754826, %v2645
    %v2649 = vor.u32 %v2647, %v2648
    %v2650 = vshll.u32 2475754826, %v2644
    %v2651 = vshrl.u32 2131351028, %v2645
    %v2652 = vor.u32 %v2650, %v2651
    %v2653 = vshll.u32 2131351028, %v2644
    %v2654 = vshrl.u32 2102212464, %v2645
    %v2655 = vor.u32 %v2653, %v2654
    %v2656 = vshll.u32 2102212464, %v2644
    %v2657 = vshrl.u32 920167782, %v2645
    %v2658 = vor.u32 %v2656, %v2657
    %v2659 = vshll.u32 920167782, %v2644
    %v2660 = vshrl.u32 1326507024, %v2645
    %v2661 = vor.u32 %v2659, %v2660
    %vm2662 = vcmp.lt.s32.totalorder %v2643, 1
    %vm2663 = vcmp.lt.s32.totalorder %v2643, 2
    %vm2664 = vcmp.lt.s32.totalorder %v2643, 3
    %vm2665 = vcmp.lt.s32.totalorder %v2643, 4
    %v2666 = vsel %vm2662, %v2646, %v2649
    %v2667 = vsel %vm2665, %v2655, 2102212464
    %v2668 = vsel %vm2664, %v2652, %v2667
    %v2669 = vsel %vm2663, %v2666, %v2668
    %v2670 = vsel %vm2662, %v2649, %v2652
    %v2671 = vsel %vm2665, %v2658, 920167782
    %v2672 = vsel %vm2664, %v2655, %v2671
    %v2673 = vsel %vm2663, %v2670, %v2672
    %v2674 = vsel %vm2662, %v2652, %v2655
    %v2675 = vsel %vm2665, %v2661, 1326507024
    %v2676 = vsel %vm2664, %v2658, %v2675
    %v2677 = vsel %vm2663, %v2674, %v2676
    %v2678 = vshll.u32 %v2638, 8
    %v2679 = vmul.u32.u64.compose %v2678, %v2677
    %v2680 = vextract.low.u32 %v2679
    %v2681 = vextract.high.u32 %v2679
    %v2682 = vmul.u32.u64.compose %v2678, %v2673
    %v2683 = vextract.low.u32 %v2682
    %v2684 = vextract.high.u32 %v2682
    %v2685 = vmul.u32 %v2678, %v2669
    %v2686 = vadd.s32 %v2681, %v2683
    %vm2687 = vc.u32 %v2681, %v2683
    %v2688 = vadd.s32 %v2684, 1
    %v2689 = vsel %vm2687, %v2688, %v2684
    %v2690 = vadd.s32 %v2685, %v2689
    %v2691 = vadd.s32 %v2690, 536870912
    %v2692 = vshrl.u32 %v2691, 30
    %v2693 = vshll.u32 %v2692, 30
    %v2694 = vsub.s32 %v2690, %v2693
    %vm2695 = vcmp.lt.s32.totalorder %v2694, 0
    %v2696 = vsub.s32 0, %v2694
    %v2697 = vsel %vm2695, %v2696, %v2694
    %v2698 = vclz %v2697
    %v2699 = vsub.s32 %v2698, 2
    %vm2700 = vcmp.gt.s32.totalorder 0, %v2699
    %v2701 = vsel %vm2700, 0, %v2699
    %v2702 = vsub.s32 32, %v2701
    %v2703 = vshll.u32 %v2694, %v2701
    %v2704 = vshrl.u32 %v2686, %v2702
    %v2705 = vor.u32 %v2703, %v2704
    %v2706 = vsub.s32 4294967266, %v2701
    %v2707 = vadd.s32 %v2706, 127
    %v2708 = vshll.u32 %v2707, 23
    %v2709 = vor.u32 4788187, %v2708
    %v2710 = vand.u32 2147483647, %v2709
    %v2712 = vcvt.s32.f32 %v2705
    %v2713 = vmul.f32 %v2712, %v2710
    %v2714 = vxor.u32 %v2713, 2147483648
    %v2715 = vsel %vm2632, %v2714, %v2713
    %v2716 = vsub.s32 4, %v2692
    %v2717 = vsel %vm2632, %v2716, %v2692
    %v2718 = vsel %vm2631, %v1179, %v2715
    %v2719 = vsel %vm2631, 0, %v2717
    %v2720 = vcosq.f32.pop %v2718
    %v2721 = vsinq.f32.pop %v2718
    %vm2722 = vweird.f32 %v1179
    %v2723 = vand.u32 %v2719, 3
    %vm2724 = vcmp.lt.s32.totalorder %v2723, 2
    %vm2725 = vcmp.eq.s32.totalorder %v2723, 0
    %v2726 = vxor.u32 %v2721, 2147483648
    %v2727 = vsel %vm2725, %v2720, %v2726
    %vm2728 = vcmp.eq.s32.totalorder %v2723, 2
    %v2729 = vxor.u32 %v2720, 2147483648
    %v2730 = vsel %vm2728, %v2729, %v2721
    %v2731 = vsel %vm2724, %v2727, %v2730
    %v2732 = vsel %vm2722, nan, %v2731
    %v2733 = vand.u32 2147483647, %v1185
    %vm2734 = vcmp.le.f32.partialorder %v2733, 0.7853982
    %vm2735 = vcmp.lt.s32.totalorder %v1185, 0
    %v2736 = vand.u32 %v1185, 2139095040
    %v2737 = vshrl.u32 %v2736, 23
    %v2738 = vsub.s32 %v2737, 127
    %v2739 = vand.u32 2147483647, %v1185
    %v2740 = vand.u32 %v2739, 8388607
    %v2741 = vor.u32 %v2740, 8388608
    %v2742 = vsub.s32 0, %v2741
    %v2743 = vadd.s32 %v2738, 1
    %vm2744 = vcmp.gt.s32.totalorder %v2743, 0
    %v2745 = vsel %vm2744, %v2743, 0
    %v2746 = vshrl.u32 %v2745, 5
    %v2747 = vand.u32 %v2745, 31
    %v2748 = vsub.s32 32, %v2747
    %v2749 = vshrl.u32 683565275, %v2748
    %v2750 = vshll.u32 683565275, %v2747
    %v2751 = vshrl.u32 2475754826, %v2748
    %v2752 = vor.u32 %v2750, %v2751
    %v2753 = vshll.u32 2475754826, %v2747
    %v2754 = vshrl.u32 2131351028, %v2748
    %v2755 = vor.u32 %v2753, %v2754
    %v2756 = vshll.u32 2131351028, %v2747
    %v2757 = vshrl.u32 2102212464, %v2748
    %v2758 = vor.u32 %v2756, %v2757
    %v2759 = vshll.u32 2102212464, %v2747
    %v2760 = vshrl.u32 920167782, %v2748
    %v2761 = vor.u32 %v2759, %v2760
    %v2762 = vshll.u32 920167782, %v2747
    %v2763 = vshrl.u32 1326507024, %v2748
    %v2764 = vor.u32 %v2762, %v2763
    %vm2765 = vcmp.lt.s32.totalorder %v2746, 1
    %vm2766 = vcmp.lt.s32.totalorder %v2746, 2
    %vm2767 = vcmp.lt.s32.totalorder %v2746, 3
    %vm2768 = vcmp.lt.s32.totalorder %v2746, 4
    %v2769 = vsel %vm2765, %v2749, %v2752
    %v2770 = vsel %vm2768, %v2758, 2102212464
    %v2771 = vsel %vm2767, %v2755, %v2770
    %v2772 = vsel %vm2766, %v2769, %v2771
    %v2773 = vsel %vm2765, %v2752, %v2755
    %v2774 = vsel %vm2768, %v2761, 920167782
    %v2775 = vsel %vm2767, %v2758, %v2774
    %v2776 = vsel %vm2766, %v2773, %v2775
    %v2777 = vsel %vm2765, %v2755, %v2758
    %v2778 = vsel %vm2768, %v2764, 1326507024
    %v2779 = vsel %vm2767, %v2761, %v2778
    %v2780 = vsel %vm2766, %v2777, %v2779
    %v2781 = vshll.u32 %v2741, 8
    %v2782 = vmul.u32.u64.compose %v2781, %v2780
    %v2783 = vextract.low.u32 %v2782
    %v2784 = vextract.high.u32 %v2782
    %v2785 = vmul.u32.u64.compose %v2781, %v2776
    %v2786 = vextract.low.u32 %v2785
    %v2787 = vextract.high.u32 %v2785
    %v2788 = vmul.u32 %v2781, %v2772
    %v2789 = vadd.s32 %v2784, %v2786
    %vm2790 = vc.u32 %v2784, %v2786
    %v2791 = vadd.s32 %v2787, 1
    %v2792 = vsel %vm2790, %v2791, %v2787
    %v2793 = vadd.s32 %v2788, %v2792
    %v2794 = vadd.s32 %v2793, 536870912
    %v2795 = vshrl.u32 %v2794, 30
    %v2796 = vshll.u32 %v2795, 30
    %v2797 = vsub.s32 %v2793, %v2796
    %vm2798 = vcmp.lt.s32.totalorder %v2797, 0
    %v2799 = vsub.s32 0, %v2797
    %v2800 = vsel %vm2798, %v2799, %v2797
    %v2801 = vclz %v2800
    %v2802 = vsub.s32 %v2801, 2
    %vm2803 = vcmp.gt.s32.totalorder 0, %v2802
    %v2804 = vsel %vm2803, 0, %v2802
    %v2805 = vsub.s32 32, %v2804
    %v2806 = vshll.u32 %v2797, %v2804
    %v2807 = vshrl.u32 %v2789, %v2805
    %v2808 = vor.u32 %v2806, %v2807
    %v2809 = vsub.s32 4294967266, %v2804
    %v2810 = vadd.s32 %v2809, 127
    %v2811 = vshll.u32 %v2810, 23
    %v2812 = vor.u32 4788187, %v2811
    %v2813 = vand.u32 2147483647, %v2812
    %v2815 = vcvt.s32.f32 %v2808
    %v2816 = vmul.f32 %v2815, %v2813
    %v2817 = vxor.u32 %v2816, 2147483648
    %v2818 = vsel %vm2735, %v2817, %v2816
    %v2819 = vsub.s32 4, %v2795
    %v2820 = vsel %vm2735, %v2819, %v2795
    %v2821 = vsel %vm2734, %v1185, %v2818
    %v2822 = vsel %vm2734, 0, %v2820
    %v2823 = vcosq.f32.pop %v2821
    %v2824 = vsinq.f32.pop %v2821
    %vm2825 = vweird.f32 %v1185
    %v2826 = vand.u32 %v2822, 3
    %vm2827 = vcmp.lt.s32.totalorder %v2826, 2
    %vm2828 = vcmp.eq.s32.totalorder %v2826, 0
    %v2829 = vxor.u32 %v2824, 2147483648
    %v2830 = vsel %vm2828, %v2823, %v2829
    %vm2831 = vcmp.eq.s32.totalorder %v2826, 2
    %v2832 = vxor.u32 %v2823, 2147483648
    %v2833 = vsel %vm2831, %v2832, %v2824
    %v2834 = vsel %vm2827, %v2830, %v2833
    %v2835 = vsel %vm2825, nan, %v2834
    %v2836 = vstv %s16
    %v2837 = vmul.f32 %v2836, %v1290
    %v2838 = vmul.f32 %v2836, %v1393
    %v2839 = vmul.f32 %v2836, %v1496
    %v2840 = vmul.f32 %v2836, %v1599
    %v2841 = vmul.f32 %v2836, %v1702
    %v2842 = vmul.f32 %v2836, %v1805
    %v2843 = vmul.f32 %v2836, %v1908
    %v2844 = vmul.f32 %v2836, %v2011
    %v2845 = vmul.f32 %v2836, %v2114
    %v2846 = vmul.f32 %v2836, %v2217
    %v2847 = vmul.f32 %v2836, %v2320
    %v2848 = vmul.f32 %v2836, %v2423
    %v2849 = vmul.f32 %v2836, %v2526
    %v2850 = vmul.f32 %v2836, %v2629
    %v2851 = vmul.f32 %v2836, %v2732
    %v2852 = vmul.f32 %v2836, %v2835
    %v2853 = vand.u32 2147483647, %v1095
    %vm2854 = vcmp.le.f32.partialorder %v2853, 0.7853982
    %vm2855 = vcmp.lt.s32.totalorder %v1095, 0
    %v2856 = vand.u32 %v1095, 2139095040
    %v2857 = vshrl.u32 %v2856, 23
    %v2858 = vsub.s32 %v2857, 127
    %v2859 = vand.u32 2147483647, %v1095
    %v2860 = vand.u32 %v2859, 8388607
    %v2861 = vor.u32 %v2860, 8388608
    %v2862 = vsub.s32 0, %v2861
    %v2863 = vadd.s32 %v2858, 1
    %vm2864 = vcmp.gt.s32.totalorder %v2863, 0
    %v2865 = vsel %vm2864, %v2863, 0
    %v2866 = vshrl.u32 %v2865, 5
    %v2867 = vand.u32 %v2865, 31
    %v2868 = vsub.s32 32, %v2867
    %v2869 = vshrl.u32 683565275, %v2868
    %v2870 = vshll.u32 683565275, %v2867
    %v2871 = vshrl.u32 2475754826, %v2868
    %v2872 = vor.u32 %v2870, %v2871
    %v2873 = vshll.u32 2475754826, %v2867
    %v2874 = vshrl.u32 2131351028, %v2868
    %v2875 = vor.u32 %v2873, %v2874
    %v2876 = vshll.u32 2131351028, %v2867
    %v2877 = vshrl.u32 2102212464, %v2868
    %v2878 = vor.u32 %v2876, %v2877
    %v2879 = vshll.u32 2102212464, %v2867
    %v2880 = vshrl.u32 920167782, %v2868
    %v2881 = vor.u32 %v2879, %v2880
    %v2882 = vshll.u32 920167782, %v2867
    %v2883 = vshrl.u32 1326507024, %v2868
    %v2884 = vor.u32 %v2882, %v2883
    %vm2885 = vcmp.lt.s32.totalorder %v2866, 1
    %vm2886 = vcmp.lt.s32.totalorder %v2866, 2
    %vm2887 = vcmp.lt.s32.totalorder %v2866, 3
    %vm2888 = vcmp.lt.s32.totalorder %v2866, 4
    %v2889 = vsel %vm2885, %v2869, %v2872
    %v2890 = vsel %vm2888, %v2878, 2102212464
    %v2891 = vsel %vm2887, %v2875, %v2890
    %v2892 = vsel %vm2886, %v2889, %v2891
    %v2893 = vsel %vm2885, %v2872, %v2875
    %v2894 = vsel %vm2888, %v2881, 920167782
    %v2895 = vsel %vm2887, %v2878, %v2894
    %v2896 = vsel %vm2886, %v2893, %v2895
    %v2897 = vsel %vm2885, %v2875, %v2878
    %v2898 = vsel %vm2888, %v2884, 1326507024
    %v2899 = vsel %vm2887, %v2881, %v2898
    %v2900 = vsel %vm2886, %v2897, %v2899
    %v2901 = vshll.u32 %v2861, 8
    %v2902 = vmul.u32.u64.compose %v2901, %v2900
    %v2903 = vextract.low.u32 %v2902
    %v2904 = vextract.high.u32 %v2902
    %v2905 = vmul.u32.u64.compose %v2901, %v2896
    %v2906 = vextract.low.u32 %v2905
    %v2907 = vextract.high.u32 %v2905
    %v2908 = vmul.u32 %v2901, %v2892
    %v2909 = vadd.s32 %v2904, %v2906
    %vm2910 = vc.u32 %v2904, %v2906
    %v2911 = vadd.s32 %v2907, 1
    %v2912 = vsel %vm2910, %v2911, %v2907
    %v2913 = vadd.s32 %v2908, %v2912
    %v2914 = vadd.s32 %v2913, 536870912
    %v2915 = vshrl.u32 %v2914, 30
    %v2916 = vshll.u32 %v2915, 30
    %v2917 = vsub.s32 %v2913, %v2916
    %vm2918 = vcmp.lt.s32.totalorder %v2917, 0
    %v2919 = vsub.s32 0, %v2917
    %v2920 = vsel %vm2918, %v2919, %v2917
    %v2921 = vclz %v2920
    %v2922 = vsub.s32 %v2921, 2
    %vm2923 = vcmp.gt.s32.totalorder 0, %v2922
    %v2924 = vsel %vm2923, 0, %v2922
    %v2925 = vsub.s32 32, %v2924
    %v2926 = vshll.u32 %v2917, %v2924
    %v2927 = vshrl.u32 %v2909, %v2925
    %v2928 = vor.u32 %v2926, %v2927
    %v2929 = vsub.s32 4294967266, %v2924
    %v2930 = vadd.s32 %v2929, 127
    %v2931 = vshll.u32 %v2930, 23
    %v2932 = vor.u32 4788187, %v2931
    %v2933 = vand.u32 2147483647, %v2932
    %v2935 = vcvt.s32.f32 %v2928
    %v2936 = vmul.f32 %v2935, %v2933
    %v2937 = vxor.u32 %v2936, 2147483648
    %v2938 = vsel %vm2855, %v2937, %v2936
    %v2939 = vsub.s32 4, %v2915
    %v2940 = vsel %vm2855, %v2939, %v2915
    %v2941 = vsel %vm2854, %v1095, %v2938
    %v2942 = vsel %vm2854, 0, %v2940
    %v2943 = vcosq.f32.pop %v2941
    %v2944 = vsinq.f32.pop %v2941
    %vm2945 = vweird.f32 %v1095
    %v2946 = vadd.s32 %v2942, 3
    %v2947 = vand.u32 %v2946, 3
    %vm2948 = vcmp.lt.s32.totalorder %v2947, 2
    %vm2949 = vcmp.eq.s32.totalorder %v2947, 0
    %v2950 = vxor.u32 %v2944, 2147483648
    %v2951 = vsel %vm2949, %v2943, %v2950
    %vm2952 = vcmp.eq.s32.totalorder %v2947, 2
    %v2953 = vxor.u32 %v2943, 2147483648
    %v2954 = vsel %vm2952, %v2953, %v2944
    %v2955 = vsel %vm2948, %v2951, %v2954
    %v2956 = vsel %vm2945, nan, %v2955
    %v2957 = vand.u32 2147483647, %v1101
    %vm2958 = vcmp.le.f32.partialorder %v2957, 0.7853982
    %vm2959 = vcmp.lt.s32.totalorder %v1101, 0
    %v2960 = vand.u32 %v1101, 2139095040
    %v2961 = vshrl.u32 %v2960, 23
    %v2962 = vsub.s32 %v2961, 127
    %v2963 = vand.u32 2147483647, %v1101
    %v2964 = vand.u32 %v2963, 8388607
    %v2965 = vor.u32 %v2964, 8388608
    %v2966 = vsub.s32 0, %v2965
    %v2967 = vadd.s32 %v2962, 1
    %vm2968 = vcmp.gt.s32.totalorder %v2967, 0
    %v2969 = vsel %vm2968, %v2967, 0
    %v2970 = vshrl.u32 %v2969, 5
    %v2971 = vand.u32 %v2969, 31
    %v2972 = vsub.s32 32, %v2971
    %v2973 = vshrl.u32 683565275, %v2972
    %v2974 = vshll.u32 683565275, %v2971
    %v2975 = vshrl.u32 2475754826, %v2972
    %v2976 = vor.u32 %v2974, %v2975
    %v2977 = vshll.u32 2475754826, %v2971
    %v2978 = vshrl.u32 2131351028, %v2972
    %v2979 = vor.u32 %v2977, %v2978
    %v2980 = vshll.u32 2131351028, %v2971
    %v2981 = vshrl.u32 2102212464, %v2972
    %v2982 = vor.u32 %v2980, %v2981
    %v2983 = vshll.u32 2102212464, %v2971
    %v2984 = vshrl.u32 920167782, %v2972
    %v2985 = vor.u32 %v2983, %v2984
    %v2986 = vshll.u32 920167782, %v2971
    %v2987 = vshrl.u32 1326507024, %v2972
    %v2988 = vor.u32 %v2986, %v2987
    %vm2989 = vcmp.lt.s32.totalorder %v2970, 1
    %vm2990 = vcmp.lt.s32.totalorder %v2970, 2
    %vm2991 = vcmp.lt.s32.totalorder %v2970, 3
    %vm2992 = vcmp.lt.s32.totalorder %v2970, 4
    %v2993 = vsel %vm2989, %v2973, %v2976
    %v2994 = vsel %vm2992, %v2982, 2102212464
    %v2995 = vsel %vm2991, %v2979, %v2994
    %v2996 = vsel %vm2990, %v2993, %v2995
    %v2997 = vsel %vm2989, %v2976, %v2979
    %v2998 = vsel %vm2992, %v2985, 920167782
    %v2999 = vsel %vm2991, %v2982, %v2998
    %v3000 = vsel %vm2990, %v2997, %v2999
    %v3001 = vsel %vm2989, %v2979, %v2982
    %v3002 = vsel %vm2992, %v2988, 1326507024
    %v3003 = vsel %vm2991, %v2985, %v3002
    %v3004 = vsel %vm2990, %v3001, %v3003
    %v3005 = vshll.u32 %v2965, 8
    %v3006 = vmul.u32.u64.compose %v3005, %v3004
    %v3007 = vextract.low.u32 %v3006
    %v3008 = vextract.high.u32 %v3006
    %v3009 = vmul.u32.u64.compose %v3005, %v3000
    %v3010 = vextract.low.u32 %v3009
    %v3011 = vextract.high.u32 %v3009
    %v3012 = vmul.u32 %v3005, %v2996
    %v3013 = vadd.s32 %v3008, %v3010
    %vm3014 = vc.u32 %v3008, %v3010
    %v3015 = vadd.s32 %v3011, 1
    %v3016 = vsel %vm3014, %v3015, %v3011
    %v3017 = vadd.s32 %v3012, %v3016
    %v3018 = vadd.s32 %v3017, 536870912
    %v3019 = vshrl.u32 %v3018, 30
    %v3020 = vshll.u32 %v3019, 30
    %v3021 = vsub.s32 %v3017, %v3020
    %vm3022 = vcmp.lt.s32.totalorder %v3021, 0
    %v3023 = vsub.s32 0, %v3021
    %v3024 = vsel %vm3022, %v3023, %v3021
    %v3025 = vclz %v3024
    %v3026 = vsub.s32 %v3025, 2
    %vm3027 = vcmp.gt.s32.totalorder 0, %v3026
    %v3028 = vsel %vm3027, 0, %v3026
    %v3029 = vsub.s32 32, %v3028
    %v3030 = vshll.u32 %v3021, %v3028
    %v3031 = vshrl.u32 %v3013, %v3029
    %v3032 = vor.u32 %v3030, %v3031
    %v3033 = vsub.s32 4294967266, %v3028
    %v3034 = vadd.s32 %v3033, 127
    %v3035 = vshll.u32 %v3034, 23
    %v3036 = vor.u32 4788187, %v3035
    %v3037 = vand.u32 2147483647, %v3036
    %v3039 = vcvt.s32.f32 %v3032
    %v3040 = vmul.f32 %v3039, %v3037
    %v3041 = vxor.u32 %v3040, 2147483648
    %v3042 = vsel %vm2959, %v3041, %v3040
    %v3043 = vsub.s32 4, %v3019
    %v3044 = vsel %vm2959, %v3043, %v3019
    %v3045 = vsel %vm2958, %v1101, %v3042
    %v3046 = vsel %vm2958, 0, %v3044
    %v3047 = vcosq.f32.pop %v3045
    %v3048 = vsinq.f32.pop %v3045
    %vm3049 = vweird.f32 %v1101
    %v3050 = vadd.s32 %v3046, 3
    %v3051 = vand.u32 %v3050, 3
    %vm3052 = vcmp.lt.s32.totalorder %v3051, 2
    %vm3053 = vcmp.eq.s32.totalorder %v3051, 0
    %v3054 = vxor.u32 %v3048, 2147483648
    %v3055 = vsel %vm3053, %v3047, %v3054
    %vm3056 = vcmp.eq.s32.totalorder %v3051, 2
    %v3057 = vxor.u32 %v3047, 2147483648
    %v3058 = vsel %vm3056, %v3057, %v3048
    %v3059 = vsel %vm3052, %v3055, %v3058
    %v3060 = vsel %vm3049, nan, %v3059
    %v3061 = vand.u32 2147483647, %v1107
    %vm3062 = vcmp.le.f32.partialorder %v3061, 0.7853982
    %vm3063 = vcmp.lt.s32.totalorder %v1107, 0
    %v3064 = vand.u32 %v1107, 2139095040
    %v3065 = vshrl.u32 %v3064, 23
    %v3066 = vsub.s32 %v3065, 127
    %v3067 = vand.u32 2147483647, %v1107
    %v3068 = vand.u32 %v3067, 8388607
    %v3069 = vor.u32 %v3068, 8388608
    %v3070 = vsub.s32 0, %v3069
    %v3071 = vadd.s32 %v3066, 1
    %vm3072 = vcmp.gt.s32.totalorder %v3071, 0
    %v3073 = vsel %vm3072, %v3071, 0
    %v3074 = vshrl.u32 %v3073, 5
    %v3075 = vand.u32 %v3073, 31
    %v3076 = vsub.s32 32, %v3075
    %v3077 = vshrl.u32 683565275, %v3076
    %v3078 = vshll.u32 683565275, %v3075
    %v3079 = vshrl.u32 2475754826, %v3076
    %v3080 = vor.u32 %v3078, %v3079
    %v3081 = vshll.u32 2475754826, %v3075
    %v3082 = vshrl.u32 2131351028, %v3076
    %v3083 = vor.u32 %v3081, %v3082
    %v3084 = vshll.u32 2131351028, %v3075
    %v3085 = vshrl.u32 2102212464, %v3076
    %v3086 = vor.u32 %v3084, %v3085
    %v3087 = vshll.u32 2102212464, %v3075
    %v3088 = vshrl.u32 920167782, %v3076
    %v3089 = vor.u32 %v3087, %v3088
    %v3090 = vshll.u32 920167782, %v3075
    %v3091 = vshrl.u32 1326507024, %v3076
    %v3092 = vor.u32 %v3090, %v3091
    %vm3093 = vcmp.lt.s32.totalorder %v3074, 1
    %vm3094 = vcmp.lt.s32.totalorder %v3074, 2
    %vm3095 = vcmp.lt.s32.totalorder %v3074, 3
    %vm3096 = vcmp.lt.s32.totalorder %v3074, 4
    %v3097 = vsel %vm3093, %v3077, %v3080
    %v3098 = vsel %vm3096, %v3086, 2102212464
    %v3099 = vsel %vm3095, %v3083, %v3098
    %v3100 = vsel %vm3094, %v3097, %v3099
    %v3101 = vsel %vm3093, %v3080, %v3083
    %v3102 = vsel %vm3096, %v3089, 920167782
    %v3103 = vsel %vm3095, %v3086, %v3102
    %v3104 = vsel %vm3094, %v3101, %v3103
    %v3105 = vsel %vm3093, %v3083, %v3086
    %v3106 = vsel %vm3096, %v3092, 1326507024
    %v3107 = vsel %vm3095, %v3089, %v3106
    %v3108 = vsel %vm3094, %v3105, %v3107
    %v3109 = vshll.u32 %v3069, 8
    %v3110 = vmul.u32.u64.compose %v3109, %v3108
    %v3111 = vextract.low.u32 %v3110
    %v3112 = vextract.high.u32 %v3110
    %v3113 = vmul.u32.u64.compose %v3109, %v3104
    %v3114 = vextract.low.u32 %v3113
    %v3115 = vextract.high.u32 %v3113
    %v3116 = vmul.u32 %v3109, %v3100
    %v3117 = vadd.s32 %v3112, %v3114
    %vm3118 = vc.u32 %v3112, %v3114
    %v3119 = vadd.s32 %v3115, 1
    %v3120 = vsel %vm3118, %v3119, %v3115
    %v3121 = vadd.s32 %v3116, %v3120
    %v3122 = vadd.s32 %v3121, 536870912
    %v3123 = vshrl.u32 %v3122, 30
    %v3124 = vshll.u32 %v3123, 30
    %v3125 = vsub.s32 %v3121, %v3124
    %vm3126 = vcmp.lt.s32.totalorder %v3125, 0
    %v3127 = vsub.s32 0, %v3125
    %v3128 = vsel %vm3126, %v3127, %v3125
    %v3129 = vclz %v3128
    %v3130 = vsub.s32 %v3129, 2
    %vm3131 = vcmp.gt.s32.totalorder 0, %v3130
    %v3132 = vsel %vm3131, 0, %v3130
    %v3133 = vsub.s32 32, %v3132
    %v3134 = vshll.u32 %v3125, %v3132
    %v3135 = vshrl.u32 %v3117, %v3133
    %v3136 = vor.u32 %v3134, %v3135
    %v3137 = vsub.s32 4294967266, %v3132
    %v3138 = vadd.s32 %v3137, 127
    %v3139 = vshll.u32 %v3138, 23
    %v3140 = vor.u32 4788187, %v3139
    %v3141 = vand.u32 2147483647, %v3140
    %v3143 = vcvt.s32.f32 %v3136
    %v3144 = vmul.f32 %v3143, %v3141
    %v3145 = vxor.u32 %v3144, 2147483648
    %v3146 = vsel %vm3063, %v3145, %v3144
    %v3147 = vsub.s32 4, %v3123
    %v3148 = vsel %vm3063, %v3147, %v3123
    %v3149 = vsel %vm3062, %v1107, %v3146
    %v3150 = vsel %vm3062, 0, %v3148
    %v3151 = vcosq.f32.pop %v3149
    %v3152 = vsinq.f32.pop %v3149
    %vm3153 = vweird.f32 %v1107
    %v3154 = vadd.s32 %v3150, 3
    %v3155 = vand.u32 %v3154, 3
    %vm3156 = vcmp.lt.s32.totalorder %v3155, 2
    %vm3157 = vcmp.eq.s32.totalorder %v3155, 0
    %v3158 = vxor.u32 %v3152, 2147483648
    %v3159 = vsel %vm3157, %v3151, %v3158
    %vm3160 = vcmp.eq.s32.totalorder %v3155, 2
    %v3161 = vxor.u32 %v3151, 2147483648
    %v3162 = vsel %vm3160, %v3161, %v3152
    %v3163 = vsel %vm3156, %v3159, %v3162
    %v3164 = vsel %vm3153, nan, %v3163
    %v3165 = vand.u32 2147483647, %v1113
    %vm3166 = vcmp.le.f32.partialorder %v3165, 0.7853982
    %vm3167 = vcmp.lt.s32.totalorder %v1113, 0
    %v3168 = vand.u32 %v1113, 2139095040
    %v3169 = vshrl.u32 %v3168, 23
    %v3170 = vsub.s32 %v3169, 127
    %v3171 = vand.u32 2147483647, %v1113
    %v3172 = vand.u32 %v3171, 8388607
    %v3173 = vor.u32 %v3172, 8388608
    %v3174 = vsub.s32 0, %v3173
    %v3175 = vadd.s32 %v3170, 1
    %vm3176 = vcmp.gt.s32.totalorder %v3175, 0
    %v3177 = vsel %vm3176, %v3175, 0
    %v3178 = vshrl.u32 %v3177, 5
    %v3179 = vand.u32 %v3177, 31
    %v3180 = vsub.s32 32, %v3179
    %v3181 = vshrl.u32 683565275, %v3180
    %v3182 = vshll.u32 683565275, %v3179
    %v3183 = vshrl.u32 2475754826, %v3180
    %v3184 = vor.u32 %v3182, %v3183
    %v3185 = vshll.u32 2475754826, %v3179
    %v3186 = vshrl.u32 2131351028, %v3180
    %v3187 = vor.u32 %v3185, %v3186
    %v3188 = vshll.u32 2131351028, %v3179
    %v3189 = vshrl.u32 2102212464, %v3180
    %v3190 = vor.u32 %v3188, %v3189
    %v3191 = vshll.u32 2102212464, %v3179
    %v3192 = vshrl.u32 920167782, %v3180
    %v3193 = vor.u32 %v3191, %v3192
    %v3194 = vshll.u32 920167782, %v3179
    %v3195 = vshrl.u32 1326507024, %v3180
    %v3196 = vor.u32 %v3194, %v3195
    %vm3197 = vcmp.lt.s32.totalorder %v3178, 1
    %vm3198 = vcmp.lt.s32.totalorder %v3178, 2
    %vm3199 = vcmp.lt.s32.totalorder %v3178, 3
    %vm3200 = vcmp.lt.s32.totalorder %v3178, 4
    %v3201 = vsel %vm3197, %v3181, %v3184
    %v3202 = vsel %vm3200, %v3190, 2102212464
    %v3203 = vsel %vm3199, %v3187, %v3202
    %v3204 = vsel %vm3198, %v3201, %v3203
    %v3205 = vsel %vm3197, %v3184, %v3187
    %v3206 = vsel %vm3200, %v3193, 920167782
    %v3207 = vsel %vm3199, %v3190, %v3206
    %v3208 = vsel %vm3198, %v3205, %v3207
    %v3209 = vsel %vm3197, %v3187, %v3190
    %v3210 = vsel %vm3200, %v3196, 1326507024
    %v3211 = vsel %vm3199, %v3193, %v3210
    %v3212 = vsel %vm3198, %v3209, %v3211
    %v3213 = vshll.u32 %v3173, 8
    %v3214 = vmul.u32.u64.compose %v3213, %v3212
    %v3215 = vextract.low.u32 %v3214
    %v3216 = vextract.high.u32 %v3214
    %v3217 = vmul.u32.u64.compose %v3213, %v3208
    %v3218 = vextract.low.u32 %v3217
    %v3219 = vextract.high.u32 %v3217
    %v3220 = vmul.u32 %v3213, %v3204
    %v3221 = vadd.s32 %v3216, %v3218
    %vm3222 = vc.u32 %v3216, %v3218
    %v3223 = vadd.s32 %v3219, 1
    %v3224 = vsel %vm3222, %v3223, %v3219
    %v3225 = vadd.s32 %v3220, %v3224
    %v3226 = vadd.s32 %v3225, 536870912
    %v3227 = vshrl.u32 %v3226, 30
    %v3228 = vshll.u32 %v3227, 30
    %v3229 = vsub.s32 %v3225, %v3228
    %vm3230 = vcmp.lt.s32.totalorder %v3229, 0
    %v3231 = vsub.s32 0, %v3229
    %v3232 = vsel %vm3230, %v3231, %v3229
    %v3233 = vclz %v3232
    %v3234 = vsub.s32 %v3233, 2
    %vm3235 = vcmp.gt.s32.totalorder 0, %v3234
    %v3236 = vsel %vm3235, 0, %v3234
    %v3237 = vsub.s32 32, %v3236
    %v3238 = vshll.u32 %v3229, %v3236
    %v3239 = vshrl.u32 %v3221, %v3237
    %v3240 = vor.u32 %v3238, %v3239
    %v3241 = vsub.s32 4294967266, %v3236
    %v3242 = vadd.s32 %v3241, 127
    %v3243 = vshll.u32 %v3242, 23
    %v3244 = vor.u32 4788187, %v3243
    %v3245 = vand.u32 2147483647, %v3244
    %v3247 = vcvt.s32.f32 %v3240
    %v3248 = vmul.f32 %v3247, %v3245
    %v3249 = vxor.u32 %v3248, 2147483648
    %v3250 = vsel %vm3167, %v3249, %v3248
    %v3251 = vsub.s32 4, %v3227
    %v3252 = vsel %vm3167, %v3251, %v3227
    %v3253 = vsel %vm3166, %v1113, %v3250
    %v3254 = vsel %vm3166, 0, %v3252
    %v3255 = vcosq.f32.pop %v3253
    %v3256 = vsinq.f32.pop %v3253
    %vm3257 = vweird.f32 %v1113
    %v3258 = vadd.s32 %v3254, 3
    %v3259 = vand.u32 %v3258, 3
    %vm3260 = vcmp.lt.s32.totalorder %v3259, 2
    %vm3261 = vcmp.eq.s32.totalorder %v3259, 0
    %v3262 = vxor.u32 %v3256, 2147483648
    %v3263 = vsel %vm3261, %v3255, %v3262
    %vm3264 = vcmp.eq.s32.totalorder %v3259, 2
    %v3265 = vxor.u32 %v3255, 2147483648
    %v3266 = vsel %vm3264, %v3265, %v3256
    %v3267 = vsel %vm3260, %v3263, %v3266
    %v3268 = vsel %vm3257, nan, %v3267
    %v3269 = vand.u32 2147483647, %v1119
    %vm3270 = vcmp.le.f32.partialorder %v3269, 0.7853982
    %vm3271 = vcmp.lt.s32.totalorder %v1119, 0
    %v3272 = vand.u32 %v1119, 2139095040
    %v3273 = vshrl.u32 %v3272, 23
    %v3274 = vsub.s32 %v3273, 127
    %v3275 = vand.u32 2147483647, %v1119
    %v3276 = vand.u32 %v3275, 8388607
    %v3277 = vor.u32 %v3276, 8388608
    %v3278 = vsub.s32 0, %v3277
    %v3279 = vadd.s32 %v3274, 1
    %vm3280 = vcmp.gt.s32.totalorder %v3279, 0
    %v3281 = vsel %vm3280, %v3279, 0
    %v3282 = vshrl.u32 %v3281, 5
    %v3283 = vand.u32 %v3281, 31
    %v3284 = vsub.s32 32, %v3283
    %v3285 = vshrl.u32 683565275, %v3284
    %v3286 = vshll.u32 683565275, %v3283
    %v3287 = vshrl.u32 2475754826, %v3284
    %v3288 = vor.u32 %v3286, %v3287
    %v3289 = vshll.u32 2475754826, %v3283
    %v3290 = vshrl.u32 2131351028, %v3284
    %v3291 = vor.u32 %v3289, %v3290
    %v3292 = vshll.u32 2131351028, %v3283
    %v3293 = vshrl.u32 2102212464, %v3284
    %v3294 = vor.u32 %v3292, %v3293
    %v3295 = vshll.u32 2102212464, %v3283
    %v3296 = vshrl.u32 920167782, %v3284
    %v3297 = vor.u32 %v3295, %v3296
    %v3298 = vshll.u32 920167782, %v3283
    %v3299 = vshrl.u32 1326507024, %v3284
    %v3300 = vor.u32 %v3298, %v3299
    %vm3301 = vcmp.lt.s32.totalorder %v3282, 1
    %vm3302 = vcmp.lt.s32.totalorder %v3282, 2
    %vm3303 = vcmp.lt.s32.totalorder %v3282, 3
    %vm3304 = vcmp.lt.s32.totalorder %v3282, 4
    %v3305 = vsel %vm3301, %v3285, %v3288
    %v3306 = vsel %vm3304, %v3294, 2102212464
    %v3307 = vsel %vm3303, %v3291, %v3306
    %v3308 = vsel %vm3302, %v3305, %v3307
    %v3309 = vsel %vm3301, %v3288, %v3291
    %v3310 = vsel %vm3304, %v3297, 920167782
    %v3311 = vsel %vm3303, %v3294, %v3310
    %v3312 = vsel %vm3302, %v3309, %v3311
    %v3313 = vsel %vm3301, %v3291, %v3294
    %v3314 = vsel %vm3304, %v3300, 1326507024
    %v3315 = vsel %vm3303, %v3297, %v3314
    %v3316 = vsel %vm3302, %v3313, %v3315
    %v3317 = vshll.u32 %v3277, 8
    %v3318 = vmul.u32.u64.compose %v3317, %v3316
    %v3319 = vextract.low.u32 %v3318
    %v3320 = vextract.high.u32 %v3318
    %v3321 = vmul.u32.u64.compose %v3317, %v3312
    %v3322 = vextract.low.u32 %v3321
    %v3323 = vextract.high.u32 %v3321
    %v3324 = vmul.u32 %v3317, %v3308
    %v3325 = vadd.s32 %v3320, %v3322
    %vm3326 = vc.u32 %v3320, %v3322
    %v3327 = vadd.s32 %v3323, 1
    %v3328 = vsel %vm3326, %v3327, %v3323
    %v3329 = vadd.s32 %v3324, %v3328
    %v3330 = vadd.s32 %v3329, 536870912
    %v3331 = vshrl.u32 %v3330, 30
    %v3332 = vshll.u32 %v3331, 30
    %v3333 = vsub.s32 %v3329, %v3332
    %vm3334 = vcmp.lt.s32.totalorder %v3333, 0
    %v3335 = vsub.s32 0, %v3333
    %v3336 = vsel %vm3334, %v3335, %v3333
    %v3337 = vclz %v3336
    %v3338 = vsub.s32 %v3337, 2
    %vm3339 = vcmp.gt.s32.totalorder 0, %v3338
    %v3340 = vsel %vm3339, 0, %v3338
    %v3341 = vsub.s32 32, %v3340
    %v3342 = vshll.u32 %v3333, %v3340
    %v3343 = vshrl.u32 %v3325, %v3341
    %v3344 = vor.u32 %v3342, %v3343
    %v3345 = vsub.s32 4294967266, %v3340
    %v3346 = vadd.s32 %v3345, 127
    %v3347 = vshll.u32 %v3346, 23
    %v3348 = vor.u32 4788187, %v3347
    %v3349 = vand.u32 2147483647, %v3348
    %v3351 = vcvt.s32.f32 %v3344
    %v3352 = vmul.f32 %v3351, %v3349
    %v3353 = vxor.u32 %v3352, 2147483648
    %v3354 = vsel %vm3271, %v3353, %v3352
    %v3355 = vsub.s32 4, %v3331
    %v3356 = vsel %vm3271, %v3355, %v3331
    %v3357 = vsel %vm3270, %v1119, %v3354
    %v3358 = vsel %vm3270, 0, %v3356
    %v3359 = vcosq.f32.pop %v3357
    %v3360 = vsinq.f32.pop %v3357
    %vm3361 = vweird.f32 %v1119
    %v3362 = vadd.s32 %v3358, 3
    %v3363 = vand.u32 %v3362, 3
    %vm3364 = vcmp.lt.s32.totalorder %v3363, 2
    %vm3365 = vcmp.eq.s32.totalorder %v3363, 0
    %v3366 = vxor.u32 %v3360, 2147483648
    %v3367 = vsel %vm3365, %v3359, %v3366
    %vm3368 = vcmp.eq.s32.totalorder %v3363, 2
    %v3369 = vxor.u32 %v3359, 2147483648
    %v3370 = vsel %vm3368, %v3369, %v3360
    %v3371 = vsel %vm3364, %v3367, %v3370
    %v3372 = vsel %vm3361, nan, %v3371
    %v3373 = vand.u32 2147483647, %v1125
    %vm3374 = vcmp.le.f32.partialorder %v3373, 0.7853982
    %vm3375 = vcmp.lt.s32.totalorder %v1125, 0
    %v3376 = vand.u32 %v1125, 2139095040
    %v3377 = vshrl.u32 %v3376, 23
    %v3378 = vsub.s32 %v3377, 127
    %v3379 = vand.u32 2147483647, %v1125
    %v3380 = vand.u32 %v3379, 8388607
    %v3381 = vor.u32 %v3380, 8388608
    %v3382 = vsub.s32 0, %v3381
    %v3383 = vadd.s32 %v3378, 1
    %vm3384 = vcmp.gt.s32.totalorder %v3383, 0
    %v3385 = vsel %vm3384, %v3383, 0
    %v3386 = vshrl.u32 %v3385, 5
    %v3387 = vand.u32 %v3385, 31
    %v3388 = vsub.s32 32, %v3387
    %v3389 = vshrl.u32 683565275, %v3388
    %v3390 = vshll.u32 683565275, %v3387
    %v3391 = vshrl.u32 2475754826, %v3388
    %v3392 = vor.u32 %v3390, %v3391
    %v3393 = vshll.u32 2475754826, %v3387
    %v3394 = vshrl.u32 2131351028, %v3388
    %v3395 = vor.u32 %v3393, %v3394
    %v3396 = vshll.u32 2131351028, %v3387
    %v3397 = vshrl.u32 2102212464, %v3388
    %v3398 = vor.u32 %v3396, %v3397
    %v3399 = vshll.u32 2102212464, %v3387
    %v3400 = vshrl.u32 920167782, %v3388
    %v3401 = vor.u32 %v3399, %v3400
    %v3402 = vshll.u32 920167782, %v3387
    %v3403 = vshrl.u32 1326507024, %v3388
    %v3404 = vor.u32 %v3402, %v3403
    %vm3405 = vcmp.lt.s32.totalorder %v3386, 1
    %vm3406 = vcmp.lt.s32.totalorder %v3386, 2
    %vm3407 = vcmp.lt.s32.totalorder %v3386, 3
    %vm3408 = vcmp.lt.s32.totalorder %v3386, 4
    %v3409 = vsel %vm3405, %v3389, %v3392
    %v3410 = vsel %vm3408, %v3398, 2102212464
    %v3411 = vsel %vm3407, %v3395, %v3410
    %v3412 = vsel %vm3406, %v3409, %v3411
    %v3413 = vsel %vm3405, %v3392, %v3395
    %v3414 = vsel %vm3408, %v3401, 920167782
    %v3415 = vsel %vm3407, %v3398, %v3414
    %v3416 = vsel %vm3406, %v3413, %v3415
    %v3417 = vsel %vm3405, %v3395, %v3398
    %v3418 = vsel %vm3408, %v3404, 1326507024
    %v3419 = vsel %vm3407, %v3401, %v3418
    %v3420 = vsel %vm3406, %v3417, %v3419
    %v3421 = vshll.u32 %v3381, 8
    %v3422 = vmul.u32.u64.compose %v3421, %v3420
    %v3423 = vextract.low.u32 %v3422
    %v3424 = vextract.high.u32 %v3422
    %v3425 = vmul.u32.u64.compose %v3421, %v3416
    %v3426 = vextract.low.u32 %v3425
    %v3427 = vextract.high.u32 %v3425
    %v3428 = vmul.u32 %v3421, %v3412
    %v3429 = vadd.s32 %v3424, %v3426
    %vm3430 = vc.u32 %v3424, %v3426
    %v3431 = vadd.s32 %v3427, 1
    %v3432 = vsel %vm3430, %v3431, %v3427
    %v3433 = vadd.s32 %v3428, %v3432
    %v3434 = vadd.s32 %v3433, 536870912
    %v3435 = vshrl.u32 %v3434, 30
    %v3436 = vshll.u32 %v3435, 30
    %v3437 = vsub.s32 %v3433, %v3436
    %vm3438 = vcmp.lt.s32.totalorder %v3437, 0
    %v3439 = vsub.s32 0, %v3437
    %v3440 = vsel %vm3438, %v3439, %v3437
    %v3441 = vclz %v3440
    %v3442 = vsub.s32 %v3441, 2
    %vm3443 = vcmp.gt.s32.totalorder 0, %v3442
    %v3444 = vsel %vm3443, 0, %v3442
    %v3445 = vsub.s32 32, %v3444
    %v3446 = vshll.u32 %v3437, %v3444
    %v3447 = vshrl.u32 %v3429, %v3445
    %v3448 = vor.u32 %v3446, %v3447
    %v3449 = vsub.s32 4294967266, %v3444
    %v3450 = vadd.s32 %v3449, 127
    %v3451 = vshll.u32 %v3450, 23
    %v3452 = vor.u32 4788187, %v3451
    %v3453 = vand.u32 2147483647, %v3452
    %v3455 = vcvt.s32.f32 %v3448
    %v3456 = vmul.f32 %v3455, %v3453
    %v3457 = vxor.u32 %v3456, 2147483648
    %v3458 = vsel %vm3375, %v3457, %v3456
    %v3459 = vsub.s32 4, %v3435
    %v3460 = vsel %vm3375, %v3459, %v3435
    %v3461 = vsel %vm3374, %v1125, %v3458
    %v3462 = vsel %vm3374, 0, %v3460
    %v3463 = vcosq.f32.pop %v3461
    %v3464 = vsinq.f32.pop %v3461
    %vm3465 = vweird.f32 %v1125
    %v3466 = vadd.s32 %v3462, 3
    %v3467 = vand.u32 %v3466, 3
    %vm3468 = vcmp.lt.s32.totalorder %v3467, 2
    %vm3469 = vcmp.eq.s32.totalorder %v3467, 0
    %v3470 = vxor.u32 %v3464, 2147483648
    %v3471 = vsel %vm3469, %v3463, %v3470
    %vm3472 = vcmp.eq.s32.totalorder %v3467, 2
    %v3473 = vxor.u32 %v3463, 2147483648
    %v3474 = vsel %vm3472, %v3473, %v3464
    %v3475 = vsel %vm3468, %v3471, %v3474
    %v3476 = vsel %vm3465, nan, %v3475
    %v3477 = vand.u32 2147483647, %v1131
    %vm3478 = vcmp.le.f32.partialorder %v3477, 0.7853982
    %vm3479 = vcmp.lt.s32.totalorder %v1131, 0
    %v3480 = vand.u32 %v1131, 2139095040
    %v3481 = vshrl.u32 %v3480, 23
    %v3482 = vsub.s32 %v3481, 127
    %v3483 = vand.u32 2147483647, %v1131
    %v3484 = vand.u32 %v3483, 8388607
    %v3485 = vor.u32 %v3484, 8388608
    %v3486 = vsub.s32 0, %v3485
    %v3487 = vadd.s32 %v3482, 1
    %vm3488 = vcmp.gt.s32.totalorder %v3487, 0
    %v3489 = vsel %vm3488, %v3487, 0
    %v3490 = vshrl.u32 %v3489, 5
    %v3491 = vand.u32 %v3489, 31
    %v3492 = vsub.s32 32, %v3491
    %v3493 = vshrl.u32 683565275, %v3492
    %v3494 = vshll.u32 683565275, %v3491
    %v3495 = vshrl.u32 2475754826, %v3492
    %v3496 = vor.u32 %v3494, %v3495
    %v3497 = vshll.u32 2475754826, %v3491
    %v3498 = vshrl.u32 2131351028, %v3492
    %v3499 = vor.u32 %v3497, %v3498
    %v3500 = vshll.u32 2131351028, %v3491
    %v3501 = vshrl.u32 2102212464, %v3492
    %v3502 = vor.u32 %v3500, %v3501
    %v3503 = vshll.u32 2102212464, %v3491
    %v3504 = vshrl.u32 920167782, %v3492
    %v3505 = vor.u32 %v3503, %v3504
    %v3506 = vshll.u32 920167782, %v3491
    %v3507 = vshrl.u32 1326507024, %v3492
    %v3508 = vor.u32 %v3506, %v3507
    %vm3509 = vcmp.lt.s32.totalorder %v3490, 1
    %vm3510 = vcmp.lt.s32.totalorder %v3490, 2
    %vm3511 = vcmp.lt.s32.totalorder %v3490, 3
    %vm3512 = vcmp.lt.s32.totalorder %v3490, 4
    %v3513 = vsel %vm3509, %v3493, %v3496
    %v3514 = vsel %vm3512, %v3502, 2102212464
    %v3515 = vsel %vm3511, %v3499, %v3514
    %v3516 = vsel %vm3510, %v3513, %v3515
    %v3517 = vsel %vm3509, %v3496, %v3499
    %v3518 = vsel %vm3512, %v3505, 920167782
    %v3519 = vsel %vm3511, %v3502, %v3518
    %v3520 = vsel %vm3510, %v3517, %v3519
    %v3521 = vsel %vm3509, %v3499, %v3502
    %v3522 = vsel %vm3512, %v3508, 1326507024
    %v3523 = vsel %vm3511, %v3505, %v3522
    %v3524 = vsel %vm3510, %v3521, %v3523
    %v3525 = vshll.u32 %v3485, 8
    %v3526 = vmul.u32.u64.compose %v3525, %v3524
    %v3527 = vextract.low.u32 %v3526
    %v3528 = vextract.high.u32 %v3526
    %v3529 = vmul.u32.u64.compose %v3525, %v3520
    %v3530 = vextract.low.u32 %v3529
    %v3531 = vextract.high.u32 %v3529
    %v3532 = vmul.u32 %v3525, %v3516
    %v3533 = vadd.s32 %v3528, %v3530
    %vm3534 = vc.u32 %v3528, %v3530
    %v3535 = vadd.s32 %v3531, 1
    %v3536 = vsel %vm3534, %v3535, %v3531
    %v3537 = vadd.s32 %v3532, %v3536
    %v3538 = vadd.s32 %v3537, 536870912
    %v3539 = vshrl.u32 %v3538, 30
    %v3540 = vshll.u32 %v3539, 30
    %v3541 = vsub.s32 %v3537, %v3540
    %vm3542 = vcmp.lt.s32.totalorder %v3541, 0
    %v3543 = vsub.s32 0, %v3541
    %v3544 = vsel %vm3542, %v3543, %v3541
    %v3545 = vclz %v3544
    %v3546 = vsub.s32 %v3545, 2
    %vm3547 = vcmp.gt.s32.totalorder 0, %v3546
    %v3548 = vsel %vm3547, 0, %v3546
    %v3549 = vsub.s32 32, %v3548
    %v3550 = vshll.u32 %v3541, %v3548
    %v3551 = vshrl.u32 %v3533, %v3549
    %v3552 = vor.u32 %v3550, %v3551
    %v3553 = vsub.s32 4294967266, %v3548
    %v3554 = vadd.s32 %v3553, 127
    %v3555 = vshll.u32 %v3554, 23
    %v3556 = vor.u32 4788187, %v3555
    %v3557 = vand.u32 2147483647, %v3556
    %v3559 = vcvt.s32.f32 %v3552
    %v3560 = vmul.f32 %v3559, %v3557
    %v3561 = vxor.u32 %v3560, 2147483648
    %v3562 = vsel %vm3479, %v3561, %v3560
    %v3563 = vsub.s32 4, %v3539
    %v3564 = vsel %vm3479, %v3563, %v3539
    %v3565 = vsel %vm3478, %v1131, %v3562
    %v3566 = vsel %vm3478, 0, %v3564
    %v3567 = vcosq.f32.pop %v3565
    %v3568 = vsinq.f32.pop %v3565
    %vm3569 = vweird.f32 %v1131
    %v3570 = vadd.s32 %v3566, 3
    %v3571 = vand.u32 %v3570, 3
    %vm3572 = vcmp.lt.s32.totalorder %v3571, 2
    %vm3573 = vcmp.eq.s32.totalorder %v3571, 0
    %v3574 = vxor.u32 %v3568, 2147483648
    %v3575 = vsel %vm3573, %v3567, %v3574
    %vm3576 = vcmp.eq.s32.totalorder %v3571, 2
    %v3577 = vxor.u32 %v3567, 2147483648
    %v3578 = vsel %vm3576, %v3577, %v3568
    %v3579 = vsel %vm3572, %v3575, %v3578
    %v3580 = vsel %vm3569, nan, %v3579
    %v3581 = vand.u32 2147483647, %v1137
    %vm3582 = vcmp.le.f32.partialorder %v3581, 0.7853982
    %vm3583 = vcmp.lt.s32.totalorder %v1137, 0
    %v3584 = vand.u32 %v1137, 2139095040
    %v3585 = vshrl.u32 %v3584, 23
    %v3586 = vsub.s32 %v3585, 127
    %v3587 = vand.u32 2147483647, %v1137
    %v3588 = vand.u32 %v3587, 8388607
    %v3589 = vor.u32 %v3588, 8388608
    %v3590 = vsub.s32 0, %v3589
    %v3591 = vadd.s32 %v3586, 1
    %vm3592 = vcmp.gt.s32.totalorder %v3591, 0
    %v3593 = vsel %vm3592, %v3591, 0
    %v3594 = vshrl.u32 %v3593, 5
    %v3595 = vand.u32 %v3593, 31
    %v3596 = vsub.s32 32, %v3595
    %v3597 = vshrl.u32 683565275, %v3596
    %v3598 = vshll.u32 683565275, %v3595
    %v3599 = vshrl.u32 2475754826, %v3596
    %v3600 = vor.u32 %v3598, %v3599
    %v3601 = vshll.u32 2475754826, %v3595
    %v3602 = vshrl.u32 2131351028, %v3596
    %v3603 = vor.u32 %v3601, %v3602
    %v3604 = vshll.u32 2131351028, %v3595
    %v3605 = vshrl.u32 2102212464, %v3596
    %v3606 = vor.u32 %v3604, %v3605
    %v3607 = vshll.u32 2102212464, %v3595
    %v3608 = vshrl.u32 920167782, %v3596
    %v3609 = vor.u32 %v3607, %v3608
    %v3610 = vshll.u32 920167782, %v3595
    %v3611 = vshrl.u32 1326507024, %v3596
    %v3612 = vor.u32 %v3610, %v3611
    %vm3613 = vcmp.lt.s32.totalorder %v3594, 1
    %vm3614 = vcmp.lt.s32.totalorder %v3594, 2
    %vm3615 = vcmp.lt.s32.totalorder %v3594, 3
    %vm3616 = vcmp.lt.s32.totalorder %v3594, 4
    %v3617 = vsel %vm3613, %v3597, %v3600
    %v3618 = vsel %vm3616, %v3606, 2102212464
    %v3619 = vsel %vm3615, %v3603, %v3618
    %v3620 = vsel %vm3614, %v3617, %v3619
    %v3621 = vsel %vm3613, %v3600, %v3603
    %v3622 = vsel %vm3616, %v3609, 920167782
    %v3623 = vsel %vm3615, %v3606, %v3622
    %v3624 = vsel %vm3614, %v3621, %v3623
    %v3625 = vsel %vm3613, %v3603, %v3606
    %v3626 = vsel %vm3616, %v3612, 1326507024
    %v3627 = vsel %vm3615, %v3609, %v3626
    %v3628 = vsel %vm3614, %v3625, %v3627
    %v3629 = vshll.u32 %v3589, 8
    %v3630 = vmul.u32.u64.compose %v3629, %v3628
    %v3631 = vextract.low.u32 %v3630
    %v3632 = vextract.high.u32 %v3630
    %v3633 = vmul.u32.u64.compose %v3629, %v3624
    %v3634 = vextract.low.u32 %v3633
    %v3635 = vextract.high.u32 %v3633
    %v3636 = vmul.u32 %v3629, %v3620
    %v3637 = vadd.s32 %v3632, %v3634
    %vm3638 = vc.u32 %v3632, %v3634
    %v3639 = vadd.s32 %v3635, 1
    %v3640 = vsel %vm3638, %v3639, %v3635
    %v3641 = vadd.s32 %v3636, %v3640
    %v3642 = vadd.s32 %v3641, 536870912
    %v3643 = vshrl.u32 %v3642, 30
    %v3644 = vshll.u32 %v3643, 30
    %v3645 = vsub.s32 %v3641, %v3644
    %vm3646 = vcmp.lt.s32.totalorder %v3645, 0
    %v3647 = vsub.s32 0, %v3645
    %v3648 = vsel %vm3646, %v3647, %v3645
    %v3649 = vclz %v3648
    %v3650 = vsub.s32 %v3649, 2
    %vm3651 = vcmp.gt.s32.totalorder 0, %v3650
    %v3652 = vsel %vm3651, 0, %v3650
    %v3653 = vsub.s32 32, %v3652
    %v3654 = vshll.u32 %v3645, %v3652
    %v3655 = vshrl.u32 %v3637, %v3653
    %v3656 = vor.u32 %v3654, %v3655
    %v3657 = vsub.s32 4294967266, %v3652
    %v3658 = vadd.s32 %v3657, 127
    %v3659 = vshll.u32 %v3658, 23
    %v3660 = vor.u32 4788187, %v3659
    %v3661 = vand.u32 2147483647, %v3660
    %v3663 = vcvt.s32.f32 %v3656
    %v3664 = vmul.f32 %v3663, %v3661
    %v3665 = vxor.u32 %v3664, 2147483648
    %v3666 = vsel %vm3583, %v3665, %v3664
    %v3667 = vsub.s32 4, %v3643
    %v3668 = vsel %vm3583, %v3667, %v3643
    %v3669 = vsel %vm3582, %v1137, %v3666
    %v3670 = vsel %vm3582, 0, %v3668
    %v3671 = vcosq.f32.pop %v3669
    %v3672 = vsinq.f32.pop %v3669
    %vm3673 = vweird.f32 %v1137
    %v3674 = vadd.s32 %v3670, 3
    %v3675 = vand.u32 %v3674, 3
    %vm3676 = vcmp.lt.s32.totalorder %v3675, 2
    %vm3677 = vcmp.eq.s32.totalorder %v3675, 0
    %v3678 = vxor.u32 %v3672, 2147483648
    %v3679 = vsel %vm3677, %v3671, %v3678
    %vm3680 = vcmp.eq.s32.totalorder %v3675, 2
    %v3681 = vxor.u32 %v3671, 2147483648
    %v3682 = vsel %vm3680, %v3681, %v3672
    %v3683 = vsel %vm3676, %v3679, %v3682
    %v3684 = vsel %vm3673, nan, %v3683
    %v3685 = vand.u32 2147483647, %v1143
    %vm3686 = vcmp.le.f32.partialorder %v3685, 0.7853982
    %vm3687 = vcmp.lt.s32.totalorder %v1143, 0
    %v3688 = vand.u32 %v1143, 2139095040
    %v3689 = vshrl.u32 %v3688, 23
    %v3690 = vsub.s32 %v3689, 127
    %v3691 = vand.u32 2147483647, %v1143
    %v3692 = vand.u32 %v3691, 8388607
    %v3693 = vor.u32 %v3692, 8388608
    %v3694 = vsub.s32 0, %v3693
    %v3695 = vadd.s32 %v3690, 1
    %vm3696 = vcmp.gt.s32.totalorder %v3695, 0
    %v3697 = vsel %vm3696, %v3695, 0
    %v3698 = vshrl.u32 %v3697, 5
    %v3699 = vand.u32 %v3697, 31
    %v3700 = vsub.s32 32, %v3699
    %v3701 = vshrl.u32 683565275, %v3700
    %v3702 = vshll.u32 683565275, %v3699
    %v3703 = vshrl.u32 2475754826, %v3700
    %v3704 = vor.u32 %v3702, %v3703
    %v3705 = vshll.u32 2475754826, %v3699
    %v3706 = vshrl.u32 2131351028, %v3700
    %v3707 = vor.u32 %v3705, %v3706
    %v3708 = vshll.u32 2131351028, %v3699
    %v3709 = vshrl.u32 2102212464, %v3700
    %v3710 = vor.u32 %v3708, %v3709
    %v3711 = vshll.u32 2102212464, %v3699
    %v3712 = vshrl.u32 920167782, %v3700
    %v3713 = vor.u32 %v3711, %v3712
    %v3714 = vshll.u32 920167782, %v3699
    %v3715 = vshrl.u32 1326507024, %v3700
    %v3716 = vor.u32 %v3714, %v3715
    %vm3717 = vcmp.lt.s32.totalorder %v3698, 1
    %vm3718 = vcmp.lt.s32.totalorder %v3698, 2
    %vm3719 = vcmp.lt.s32.totalorder %v3698, 3
    %vm3720 = vcmp.lt.s32.totalorder %v3698, 4
    %v3721 = vsel %vm3717, %v3701, %v3704
    %v3722 = vsel %vm3720, %v3710, 2102212464
    %v3723 = vsel %vm3719, %v3707, %v3722
    %v3724 = vsel %vm3718, %v3721, %v3723
    %v3725 = vsel %vm3717, %v3704, %v3707
    %v3726 = vsel %vm3720, %v3713, 920167782
    %v3727 = vsel %vm3719, %v3710, %v3726
    %v3728 = vsel %vm3718, %v3725, %v3727
    %v3729 = vsel %vm3717, %v3707, %v3710
    %v3730 = vsel %vm3720, %v3716, 1326507024
    %v3731 = vsel %vm3719, %v3713, %v3730
    %v3732 = vsel %vm3718, %v3729, %v3731
    %v3733 = vshll.u32 %v3693, 8
    %v3734 = vmul.u32.u64.compose %v3733, %v3732
    %v3735 = vextract.low.u32 %v3734
    %v3736 = vextract.high.u32 %v3734
    %v3737 = vmul.u32.u64.compose %v3733, %v3728
    %v3738 = vextract.low.u32 %v3737
    %v3739 = vextract.high.u32 %v3737
    %v3740 = vmul.u32 %v3733, %v3724
    %v3741 = vadd.s32 %v3736, %v3738
    %vm3742 = vc.u32 %v3736, %v3738
    %v3743 = vadd.s32 %v3739, 1
    %v3744 = vsel %vm3742, %v3743, %v3739
    %v3745 = vadd.s32 %v3740, %v3744
    %v3746 = vadd.s32 %v3745, 536870912
    %v3747 = vshrl.u32 %v3746, 30
    %v3748 = vshll.u32 %v3747, 30
    %v3749 = vsub.s32 %v3745, %v3748
    %vm3750 = vcmp.lt.s32.totalorder %v3749, 0
    %v3751 = vsub.s32 0, %v3749
    %v3752 = vsel %vm3750, %v3751, %v3749
    %v3753 = vclz %v3752
    %v3754 = vsub.s32 %v3753, 2
    %vm3755 = vcmp.gt.s32.totalorder 0, %v3754
    %v3756 = vsel %vm3755, 0, %v3754
    %v3757 = vsub.s32 32, %v3756
    %v3758 = vshll.u32 %v3749, %v3756
    %v3759 = vshrl.u32 %v3741, %v3757
    %v3760 = vor.u32 %v3758, %v3759
    %v3761 = vsub.s32 4294967266, %v3756
    %v3762 = vadd.s32 %v3761, 127
    %v3763 = vshll.u32 %v3762, 23
    %v3764 = vor.u32 4788187, %v3763
    %v3765 = vand.u32 2147483647, %v3764
    %v3767 = vcvt.s32.f32 %v3760
    %v3768 = vmul.f32 %v3767, %v3765
    %v3769 = vxor.u32 %v3768, 2147483648
    %v3770 = vsel %vm3687, %v3769, %v3768
    %v3771 = vsub.s32 4, %v3747
    %v3772 = vsel %vm3687, %v3771, %v3747
    %v3773 = vsel %vm3686, %v1143, %v3770
    %v3774 = vsel %vm3686, 0, %v3772
    %v3775 = vcosq.f32.pop %v3773
    %v3776 = vsinq.f32.pop %v3773
    %vm3777 = vweird.f32 %v1143
    %v3778 = vadd.s32 %v3774, 3
    %v3779 = vand.u32 %v3778, 3
    %vm3780 = vcmp.lt.s32.totalorder %v3779, 2
    %vm3781 = vcmp.eq.s32.totalorder %v3779, 0
    %v3782 = vxor.u32 %v3776, 2147483648
    %v3783 = vsel %vm3781, %v3775, %v3782
    %vm3784 = vcmp.eq.s32.totalorder %v3779, 2
    %v3785 = vxor.u32 %v3775, 2147483648
    %v3786 = vsel %vm3784, %v3785, %v3776
    %v3787 = vsel %vm3780, %v3783, %v3786
    %v3788 = vsel %vm3777, nan, %v3787
    %v3789 = vand.u32 2147483647, %v1149
    %vm3790 = vcmp.le.f32.partialorder %v3789, 0.7853982
    %vm3791 = vcmp.lt.s32.totalorder %v1149, 0
    %v3792 = vand.u32 %v1149, 2139095040
    %v3793 = vshrl.u32 %v3792, 23
    %v3794 = vsub.s32 %v3793, 127
    %v3795 = vand.u32 2147483647, %v1149
    %v3796 = vand.u32 %v3795, 8388607
    %v3797 = vor.u32 %v3796, 8388608
    %v3798 = vsub.s32 0, %v3797
    %v3799 = vadd.s32 %v3794, 1
    %vm3800 = vcmp.gt.s32.totalorder %v3799, 0
    %v3801 = vsel %vm3800, %v3799, 0
    %v3802 = vshrl.u32 %v3801, 5
    %v3803 = vand.u32 %v3801, 31
    %v3804 = vsub.s32 32, %v3803
    %v3805 = vshrl.u32 683565275, %v3804
    %v3806 = vshll.u32 683565275, %v3803
    %v3807 = vshrl.u32 2475754826, %v3804
    %v3808 = vor.u32 %v3806, %v3807
    %v3809 = vshll.u32 2475754826, %v3803
    %v3810 = vshrl.u32 2131351028, %v3804
    %v3811 = vor.u32 %v3809, %v3810
    %v3812 = vshll.u32 2131351028, %v3803
    %v3813 = vshrl.u32 2102212464, %v3804
    %v3814 = vor.u32 %v3812, %v3813
    %v3815 = vshll.u32 2102212464, %v3803
    %v3816 = vshrl.u32 920167782, %v3804
    %v3817 = vor.u32 %v3815, %v3816
    %v3818 = vshll.u32 920167782, %v3803
    %v3819 = vshrl.u32 1326507024, %v3804
    %v3820 = vor.u32 %v3818, %v3819
    %vm3821 = vcmp.lt.s32.totalorder %v3802, 1
    %vm3822 = vcmp.lt.s32.totalorder %v3802, 2
    %vm3823 = vcmp.lt.s32.totalorder %v3802, 3
    %vm3824 = vcmp.lt.s32.totalorder %v3802, 4
    %v3825 = vsel %vm3821, %v3805, %v3808
    %v3826 = vsel %vm3824, %v3814, 2102212464
    %v3827 = vsel %vm3823, %v3811, %v3826
    %v3828 = vsel %vm3822, %v3825, %v3827
    %v3829 = vsel %vm3821, %v3808, %v3811
    %v3830 = vsel %vm3824, %v3817, 920167782
    %v3831 = vsel %vm3823, %v3814, %v3830
    %v3832 = vsel %vm3822, %v3829, %v3831
    %v3833 = vsel %vm3821, %v3811, %v3814
    %v3834 = vsel %vm3824, %v3820, 1326507024
    %v3835 = vsel %vm3823, %v3817, %v3834
    %v3836 = vsel %vm3822, %v3833, %v3835
    %v3837 = vshll.u32 %v3797, 8
    %v3838 = vmul.u32.u64.compose %v3837, %v3836
    %v3839 = vextract.low.u32 %v3838
    %v3840 = vextract.high.u32 %v3838
    %v3841 = vmul.u32.u64.compose %v3837, %v3832
    %v3842 = vextract.low.u32 %v3841
    %v3843 = vextract.high.u32 %v3841
    %v3844 = vmul.u32 %v3837, %v3828
    %v3845 = vadd.s32 %v3840, %v3842
    %vm3846 = vc.u32 %v3840, %v3842
    %v3847 = vadd.s32 %v3843, 1
    %v3848 = vsel %vm3846, %v3847, %v3843
    %v3849 = vadd.s32 %v3844, %v3848
    %v3850 = vadd.s32 %v3849, 536870912
    %v3851 = vshrl.u32 %v3850, 30
    %v3852 = vshll.u32 %v3851, 30
    %v3853 = vsub.s32 %v3849, %v3852
    %vm3854 = vcmp.lt.s32.totalorder %v3853, 0
    %v3855 = vsub.s32 0, %v3853
    %v3856 = vsel %vm3854, %v3855, %v3853
    %v3857 = vclz %v3856
    %v3858 = vsub.s32 %v3857, 2
    %vm3859 = vcmp.gt.s32.totalorder 0, %v3858
    %v3860 = vsel %vm3859, 0, %v3858
    %v3861 = vsub.s32 32, %v3860
    %v3862 = vshll.u32 %v3853, %v3860
    %v3863 = vshrl.u32 %v3845, %v3861
    %v3864 = vor.u32 %v3862, %v3863
    %v3865 = vsub.s32 4294967266, %v3860
    %v3866 = vadd.s32 %v3865, 127
    %v3867 = vshll.u32 %v3866, 23
    %v3868 = vor.u32 4788187, %v3867
    %v3869 = vand.u32 2147483647, %v3868
    %v3871 = vcvt.s32.f32 %v3864
    %v3872 = vmul.f32 %v3871, %v3869
    %v3873 = vxor.u32 %v3872, 2147483648
    %v3874 = vsel %vm3791, %v3873, %v3872
    %v3875 = vsub.s32 4, %v3851
    %v3876 = vsel %vm3791, %v3875, %v3851
    %v3877 = vsel %vm3790, %v1149, %v3874
    %v3878 = vsel %vm3790, 0, %v3876
    %v3879 = vcosq.f32.pop %v3877
    %v3880 = vsinq.f32.pop %v3877
    %vm3881 = vweird.f32 %v1149
    %v3882 = vadd.s32 %v3878, 3
    %v3883 = vand.u32 %v3882, 3
    %vm3884 = vcmp.lt.s32.totalorder %v3883, 2
    %vm3885 = vcmp.eq.s32.totalorder %v3883, 0
    %v3886 = vxor.u32 %v3880, 2147483648
    %v3887 = vsel %vm3885, %v3879, %v3886
    %vm3888 = vcmp.eq.s32.totalorder %v3883, 2
    %v3889 = vxor.u32 %v3879, 2147483648
    %v3890 = vsel %vm3888, %v3889, %v3880
    %v3891 = vsel %vm3884, %v3887, %v3890
    %v3892 = vsel %vm3881, nan, %v3891
    %v3893 = vand.u32 2147483647, %v1155
    %vm3894 = vcmp.le.f32.partialorder %v3893, 0.7853982
    %vm3895 = vcmp.lt.s32.totalorder %v1155, 0
    %v3896 = vand.u32 %v1155, 2139095040
    %v3897 = vshrl.u32 %v3896, 23
    %v3898 = vsub.s32 %v3897, 127
    %v3899 = vand.u32 2147483647, %v1155
    %v3900 = vand.u32 %v3899, 8388607
    %v3901 = vor.u32 %v3900, 8388608
    %v3902 = vsub.s32 0, %v3901
    %v3903 = vadd.s32 %v3898, 1
    %vm3904 = vcmp.gt.s32.totalorder %v3903, 0
    %v3905 = vsel %vm3904, %v3903, 0
    %v3906 = vshrl.u32 %v3905, 5
    %v3907 = vand.u32 %v3905, 31
    %v3908 = vsub.s32 32, %v3907
    %v3909 = vshrl.u32 683565275, %v3908
    %v3910 = vshll.u32 683565275, %v3907
    %v3911 = vshrl.u32 2475754826, %v3908
    %v3912 = vor.u32 %v3910, %v3911
    %v3913 = vshll.u32 2475754826, %v3907
    %v3914 = vshrl.u32 2131351028, %v3908
    %v3915 = vor.u32 %v3913, %v3914
    %v3916 = vshll.u32 2131351028, %v3907
    %v3917 = vshrl.u32 2102212464, %v3908
    %v3918 = vor.u32 %v3916, %v3917
    %v3919 = vshll.u32 2102212464, %v3907
    %v3920 = vshrl.u32 920167782, %v3908
    %v3921 = vor.u32 %v3919, %v3920
    %v3922 = vshll.u32 920167782, %v3907
    %v3923 = vshrl.u32 1326507024, %v3908
    %v3924 = vor.u32 %v3922, %v3923
    %vm3925 = vcmp.lt.s32.totalorder %v3906, 1
    %vm3926 = vcmp.lt.s32.totalorder %v3906, 2
    %vm3927 = vcmp.lt.s32.totalorder %v3906, 3
    %vm3928 = vcmp.lt.s32.totalorder %v3906, 4
    %v3929 = vsel %vm3925, %v3909, %v3912
    %v3930 = vsel %vm3928, %v3918, 2102212464
    %v3931 = vsel %vm3927, %v3915, %v3930
    %v3932 = vsel %vm3926, %v3929, %v3931
    %v3933 = vsel %vm3925, %v3912, %v3915
    %v3934 = vsel %vm3928, %v3921, 920167782
    %v3935 = vsel %vm3927, %v3918, %v3934
    %v3936 = vsel %vm3926, %v3933, %v3935
    %v3937 = vsel %vm3925, %v3915, %v3918
    %v3938 = vsel %vm3928, %v3924, 1326507024
    %v3939 = vsel %vm3927, %v3921, %v3938
    %v3940 = vsel %vm3926, %v3937, %v3939
    %v3941 = vshll.u32 %v3901, 8
    %v3942 = vmul.u32.u64.compose %v3941, %v3940
    %v3943 = vextract.low.u32 %v3942
    %v3944 = vextract.high.u32 %v3942
    %v3945 = vmul.u32.u64.compose %v3941, %v3936
    %v3946 = vextract.low.u32 %v3945
    %v3947 = vextract.high.u32 %v3945
    %v3948 = vmul.u32 %v3941, %v3932
    %v3949 = vadd.s32 %v3944, %v3946
    %vm3950 = vc.u32 %v3944, %v3946
    %v3951 = vadd.s32 %v3947, 1
    %v3952 = vsel %vm3950, %v3951, %v3947
    %v3953 = vadd.s32 %v3948, %v3952
    %v3954 = vadd.s32 %v3953, 536870912
    %v3955 = vshrl.u32 %v3954, 30
    %v3956 = vshll.u32 %v3955, 30
    %v3957 = vsub.s32 %v3953, %v3956
    %vm3958 = vcmp.lt.s32.totalorder %v3957, 0
    %v3959 = vsub.s32 0, %v3957
    %v3960 = vsel %vm3958, %v3959, %v3957
    %v3961 = vclz %v3960
    %v3962 = vsub.s32 %v3961, 2
    %vm3963 = vcmp.gt.s32.totalorder 0, %v3962
    %v3964 = vsel %vm3963, 0, %v3962
    %v3965 = vsub.s32 32, %v3964
    %v3966 = vshll.u32 %v3957, %v3964
    %v3967 = vshrl.u32 %v3949, %v3965
    %v3968 = vor.u32 %v3966, %v3967
    %v3969 = vsub.s32 4294967266, %v3964
    %v3970 = vadd.s32 %v3969, 127
    %v3971 = vshll.u32 %v3970, 23
    %v3972 = vor.u32 4788187, %v3971
    %v3973 = vand.u32 2147483647, %v3972
    %v3975 = vcvt.s32.f32 %v3968
    %v3976 = vmul.f32 %v3975, %v3973
    %v3977 = vxor.u32 %v3976, 2147483648
    %v3978 = vsel %vm3895, %v3977, %v3976
    %v3979 = vsub.s32 4, %v3955
    %v3980 = vsel %vm3895, %v3979, %v3955
    %v3981 = vsel %vm3894, %v1155, %v3978
    %v3982 = vsel %vm3894, 0, %v3980
    %v3983 = vcosq.f32.pop %v3981
    %v3984 = vsinq.f32.pop %v3981
    %vm3985 = vweird.f32 %v1155
    %v3986 = vadd.s32 %v3982, 3
    %v3987 = vand.u32 %v3986, 3
    %vm3988 = vcmp.lt.s32.totalorder %v3987, 2
    %vm3989 = vcmp.eq.s32.totalorder %v3987, 0
    %v3990 = vxor.u32 %v3984, 2147483648
    %v3991 = vsel %vm3989, %v3983, %v3990
    %vm3992 = vcmp.eq.s32.totalorder %v3987, 2
    %v3993 = vxor.u32 %v3983, 2147483648
    %v3994 = vsel %vm3992, %v3993, %v3984
    %v3995 = vsel %vm3988, %v3991, %v3994
    %v3996 = vsel %vm3985, nan, %v3995
    %v3997 = vand.u32 2147483647, %v1161
    %vm3998 = vcmp.le.f32.partialorder %v3997, 0.7853982
    %vm3999 = vcmp.lt.s32.totalorder %v1161, 0
    %v4000 = vand.u32 %v1161, 2139095040
    %v4001 = vshrl.u32 %v4000, 23
    %v4002 = vsub.s32 %v4001, 127
    %v4003 = vand.u32 2147483647, %v1161
    %v4004 = vand.u32 %v4003, 8388607
    %v4005 = vor.u32 %v4004, 8388608
    %v4006 = vsub.s32 0, %v4005
    %v4007 = vadd.s32 %v4002, 1
    %vm4008 = vcmp.gt.s32.totalorder %v4007, 0
    %v4009 = vsel %vm4008, %v4007, 0
    %v4010 = vshrl.u32 %v4009, 5
    %v4011 = vand.u32 %v4009, 31
    %v4012 = vsub.s32 32, %v4011
    %v4013 = vshrl.u32 683565275, %v4012
    %v4014 = vshll.u32 683565275, %v4011
    %v4015 = vshrl.u32 2475754826, %v4012
    %v4016 = vor.u32 %v4014, %v4015
    %v4017 = vshll.u32 2475754826, %v4011
    %v4018 = vshrl.u32 2131351028, %v4012
    %v4019 = vor.u32 %v4017, %v4018
    %v4020 = vshll.u32 2131351028, %v4011
    %v4021 = vshrl.u32 2102212464, %v4012
    %v4022 = vor.u32 %v4020, %v4021
    %v4023 = vshll.u32 2102212464, %v4011
    %v4024 = vshrl.u32 920167782, %v4012
    %v4025 = vor.u32 %v4023, %v4024
    %v4026 = vshll.u32 920167782, %v4011
    %v4027 = vshrl.u32 1326507024, %v4012
    %v4028 = vor.u32 %v4026, %v4027
    %vm4029 = vcmp.lt.s32.totalorder %v4010, 1
    %vm4030 = vcmp.lt.s32.totalorder %v4010, 2
    %vm4031 = vcmp.lt.s32.totalorder %v4010, 3
    %vm4032 = vcmp.lt.s32.totalorder %v4010, 4
    %v4033 = vsel %vm4029, %v4013, %v4016
    %v4034 = vsel %vm4032, %v4022, 2102212464
    %v4035 = vsel %vm4031, %v4019, %v4034
    %v4036 = vsel %vm4030, %v4033, %v4035
    %v4037 = vsel %vm4029, %v4016, %v4019
    %v4038 = vsel %vm4032, %v4025, 920167782
    %v4039 = vsel %vm4031, %v4022, %v4038
    %v4040 = vsel %vm4030, %v4037, %v4039
    %v4041 = vsel %vm4029, %v4019, %v4022
    %v4042 = vsel %vm4032, %v4028, 1326507024
    %v4043 = vsel %vm4031, %v4025, %v4042
    %v4044 = vsel %vm4030, %v4041, %v4043
    %v4045 = vshll.u32 %v4005, 8
    %v4046 = vmul.u32.u64.compose %v4045, %v4044
    %v4047 = vextract.low.u32 %v4046
    %v4048 = vextract.high.u32 %v4046
    %v4049 = vmul.u32.u64.compose %v4045, %v4040
    %v4050 = vextract.low.u32 %v4049
    %v4051 = vextract.high.u32 %v4049
    %v4052 = vmul.u32 %v4045, %v4036
    %v4053 = vadd.s32 %v4048, %v4050
    %vm4054 = vc.u32 %v4048, %v4050
    %v4055 = vadd.s32 %v4051, 1
    %v4056 = vsel %vm4054, %v4055, %v4051
    %v4057 = vadd.s32 %v4052, %v4056
    %v4058 = vadd.s32 %v4057, 536870912
    %v4059 = vshrl.u32 %v4058, 30
    %v4060 = vshll.u32 %v4059, 30
    %v4061 = vsub.s32 %v4057, %v4060
    %vm4062 = vcmp.lt.s32.totalorder %v4061, 0
    %v4063 = vsub.s32 0, %v4061
    %v4064 = vsel %vm4062, %v4063, %v4061
    %v4065 = vclz %v4064
    %v4066 = vsub.s32 %v4065, 2
    %vm4067 = vcmp.gt.s32.totalorder 0, %v4066
    %v4068 = vsel %vm4067, 0, %v4066
    %v4069 = vsub.s32 32, %v4068
    %v4070 = vshll.u32 %v4061, %v4068
    %v4071 = vshrl.u32 %v4053, %v4069
    %v4072 = vor.u32 %v4070, %v4071
    %v4073 = vsub.s32 4294967266, %v4068
    %v4074 = vadd.s32 %v4073, 127
    %v4075 = vshll.u32 %v4074, 23
    %v4076 = vor.u32 4788187, %v4075
    %v4077 = vand.u32 2147483647, %v4076
    %v4079 = vcvt.s32.f32 %v4072
    %v4080 = vmul.f32 %v4079, %v4077
    %v4081 = vxor.u32 %v4080, 2147483648
    %v4082 = vsel %vm3999, %v4081, %v4080
    %v4083 = vsub.s32 4, %v4059
    %v4084 = vsel %vm3999, %v4083, %v4059
    %v4085 = vsel %vm3998, %v1161, %v4082
    %v4086 = vsel %vm3998, 0, %v4084
    %v4087 = vcosq.f32.pop %v4085
    %v4088 = vsinq.f32.pop %v4085
    %vm4089 = vweird.f32 %v1161
    %v4090 = vadd.s32 %v4086, 3
    %v4091 = vand.u32 %v4090, 3
    %vm4092 = vcmp.lt.s32.totalorder %v4091, 2
    %vm4093 = vcmp.eq.s32.totalorder %v4091, 0
    %v4094 = vxor.u32 %v4088, 2147483648
    %v4095 = vsel %vm4093, %v4087, %v4094
    %vm4096 = vcmp.eq.s32.totalorder %v4091, 2
    %v4097 = vxor.u32 %v4087, 2147483648
    %v4098 = vsel %vm4096, %v4097, %v4088
    %v4099 = vsel %vm4092, %v4095, %v4098
    %v4100 = vsel %vm4089, nan, %v4099
    %v4101 = vand.u32 2147483647, %v1167
    %vm4102 = vcmp.le.f32.partialorder %v4101, 0.7853982
    %vm4103 = vcmp.lt.s32.totalorder %v1167, 0
    %v4104 = vand.u32 %v1167, 2139095040
    %v4105 = vshrl.u32 %v4104, 23
    %v4106 = vsub.s32 %v4105, 127
    %v4107 = vand.u32 2147483647, %v1167
    %v4108 = vand.u32 %v4107, 8388607
    %v4109 = vor.u32 %v4108, 8388608
    %v4110 = vsub.s32 0, %v4109
    %v4111 = vadd.s32 %v4106, 1
    %vm4112 = vcmp.gt.s32.totalorder %v4111, 0
    %v4113 = vsel %vm4112, %v4111, 0
    %v4114 = vshrl.u32 %v4113, 5
    %v4115 = vand.u32 %v4113, 31
    %v4116 = vsub.s32 32, %v4115
    %v4117 = vshrl.u32 683565275, %v4116
    %v4118 = vshll.u32 683565275, %v4115
    %v4119 = vshrl.u32 2475754826, %v4116
    %v4120 = vor.u32 %v4118, %v4119
    %v4121 = vshll.u32 2475754826, %v4115
    %v4122 = vshrl.u32 2131351028, %v4116
    %v4123 = vor.u32 %v4121, %v4122
    %v4124 = vshll.u32 2131351028, %v4115
    %v4125 = vshrl.u32 2102212464, %v4116
    %v4126 = vor.u32 %v4124, %v4125
    %v4127 = vshll.u32 2102212464, %v4115
    %v4128 = vshrl.u32 920167782, %v4116
    %v4129 = vor.u32 %v4127, %v4128
    %v4130 = vshll.u32 920167782, %v4115
    %v4131 = vshrl.u32 1326507024, %v4116
    %v4132 = vor.u32 %v4130, %v4131
    %vm4133 = vcmp.lt.s32.totalorder %v4114, 1
    %vm4134 = vcmp.lt.s32.totalorder %v4114, 2
    %vm4135 = vcmp.lt.s32.totalorder %v4114, 3
    %vm4136 = vcmp.lt.s32.totalorder %v4114, 4
    %v4137 = vsel %vm4133, %v4117, %v4120
    %v4138 = vsel %vm4136, %v4126, 2102212464
    %v4139 = vsel %vm4135, %v4123, %v4138
    %v4140 = vsel %vm4134, %v4137, %v4139
    %v4141 = vsel %vm4133, %v4120, %v4123
    %v4142 = vsel %vm4136, %v4129, 920167782
    %v4143 = vsel %vm4135, %v4126, %v4142
    %v4144 = vsel %vm4134, %v4141, %v4143
    %v4145 = vsel %vm4133, %v4123, %v4126
    %v4146 = vsel %vm4136, %v4132, 1326507024
    %v4147 = vsel %vm4135, %v4129, %v4146
    %v4148 = vsel %vm4134, %v4145, %v4147
    %v4149 = vshll.u32 %v4109, 8
    %v4150 = vmul.u32.u64.compose %v4149, %v4148
    %v4151 = vextract.low.u32 %v4150
    %v4152 = vextract.high.u32 %v4150
    %v4153 = vmul.u32.u64.compose %v4149, %v4144
    %v4154 = vextract.low.u32 %v4153
    %v4155 = vextract.high.u32 %v4153
    %v4156 = vmul.u32 %v4149, %v4140
    %v4157 = vadd.s32 %v4152, %v4154
    %vm4158 = vc.u32 %v4152, %v4154
    %v4159 = vadd.s32 %v4155, 1
    %v4160 = vsel %vm4158, %v4159, %v4155
    %v4161 = vadd.s32 %v4156, %v4160
    %v4162 = vadd.s32 %v4161, 536870912
    %v4163 = vshrl.u32 %v4162, 30
    %v4164 = vshll.u32 %v4163, 30
    %v4165 = vsub.s32 %v4161, %v4164
    %vm4166 = vcmp.lt.s32.totalorder %v4165, 0
    %v4167 = vsub.s32 0, %v4165
    %v4168 = vsel %vm4166, %v4167, %v4165
    %v4169 = vclz %v4168
    %v4170 = vsub.s32 %v4169, 2
    %vm4171 = vcmp.gt.s32.totalorder 0, %v4170
    %v4172 = vsel %vm4171, 0, %v4170
    %v4173 = vsub.s32 32, %v4172
    %v4174 = vshll.u32 %v4165, %v4172
    %v4175 = vshrl.u32 %v4157, %v4173
    %v4176 = vor.u32 %v4174, %v4175
    %v4177 = vsub.s32 4294967266, %v4172
    %v4178 = vadd.s32 %v4177, 127
    %v4179 = vshll.u32 %v4178, 23
    %v4180 = vor.u32 4788187, %v4179
    %v4181 = vand.u32 2147483647, %v4180
    %v4183 = vcvt.s32.f32 %v4176
    %v4184 = vmul.f32 %v4183, %v4181
    %v4185 = vxor.u32 %v4184, 2147483648
    %v4186 = vsel %vm4103, %v4185, %v4184
    %v4187 = vsub.s32 4, %v4163
    %v4188 = vsel %vm4103, %v4187, %v4163
    %v4189 = vsel %vm4102, %v1167, %v4186
    %v4190 = vsel %vm4102, 0, %v4188
    %v4191 = vcosq.f32.pop %v4189
    %v4192 = vsinq.f32.pop %v4189
    %vm4193 = vweird.f32 %v1167
    %v4194 = vadd.s32 %v4190, 3
    %v4195 = vand.u32 %v4194, 3
    %vm4196 = vcmp.lt.s32.totalorder %v4195, 2
    %vm4197 = vcmp.eq.s32.totalorder %v4195, 0
    %v4198 = vxor.u32 %v4192, 2147483648
    %v4199 = vsel %vm4197, %v4191, %v4198
    %vm4200 = vcmp.eq.s32.totalorder %v4195, 2
    %v4201 = vxor.u32 %v4191, 2147483648
    %v4202 = vsel %vm4200, %v4201, %v4192
    %v4203 = vsel %vm4196, %v4199, %v4202
    %v4204 = vsel %vm4193, nan, %v4203
    %v4205 = vand.u32 2147483647, %v1173
    %vm4206 = vcmp.le.f32.partialorder %v4205, 0.7853982
    %vm4207 = vcmp.lt.s32.totalorder %v1173, 0
    %v4208 = vand.u32 %v1173, 2139095040
    %v4209 = vshrl.u32 %v4208, 23
    %v4210 = vsub.s32 %v4209, 127
    %v4211 = vand.u32 2147483647, %v1173
    %v4212 = vand.u32 %v4211, 8388607
    %v4213 = vor.u32 %v4212, 8388608
    %v4214 = vsub.s32 0, %v4213
    %v4215 = vadd.s32 %v4210, 1
    %vm4216 = vcmp.gt.s32.totalorder %v4215, 0
    %v4217 = vsel %vm4216, %v4215, 0
    %v4218 = vshrl.u32 %v4217, 5
    %v4219 = vand.u32 %v4217, 31
    %v4220 = vsub.s32 32, %v4219
    %v4221 = vshrl.u32 683565275, %v4220
    %v4222 = vshll.u32 683565275, %v4219
    %v4223 = vshrl.u32 2475754826, %v4220
    %v4224 = vor.u32 %v4222, %v4223
    %v4225 = vshll.u32 2475754826, %v4219
    %v4226 = vshrl.u32 2131351028, %v4220
    %v4227 = vor.u32 %v4225, %v4226
    %v4228 = vshll.u32 2131351028, %v4219
    %v4229 = vshrl.u32 2102212464, %v4220
    %v4230 = vor.u32 %v4228, %v4229
    %v4231 = vshll.u32 2102212464, %v4219
    %v4232 = vshrl.u32 920167782, %v4220
    %v4233 = vor.u32 %v4231, %v4232
    %v4234 = vshll.u32 920167782, %v4219
    %v4235 = vshrl.u32 1326507024, %v4220
    %v4236 = vor.u32 %v4234, %v4235
    %vm4237 = vcmp.lt.s32.totalorder %v4218, 1
    %vm4238 = vcmp.lt.s32.totalorder %v4218, 2
    %vm4239 = vcmp.lt.s32.totalorder %v4218, 3
    %vm4240 = vcmp.lt.s32.totalorder %v4218, 4
    %v4241 = vsel %vm4237, %v4221, %v4224
    %v4242 = vsel %vm4240, %v4230, 2102212464
    %v4243 = vsel %vm4239, %v4227, %v4242
    %v4244 = vsel %vm4238, %v4241, %v4243
    %v4245 = vsel %vm4237, %v4224, %v4227
    %v4246 = vsel %vm4240, %v4233, 920167782
    %v4247 = vsel %vm4239, %v4230, %v4246
    %v4248 = vsel %vm4238, %v4245, %v4247
    %v4249 = vsel %vm4237, %v4227, %v4230
    %v4250 = vsel %vm4240, %v4236, 1326507024
    %v4251 = vsel %vm4239, %v4233, %v4250
    %v4252 = vsel %vm4238, %v4249, %v4251
    %v4253 = vshll.u32 %v4213, 8
    %v4254 = vmul.u32.u64.compose %v4253, %v4252
    %v4255 = vextract.low.u32 %v4254
    %v4256 = vextract.high.u32 %v4254
    %v4257 = vmul.u32.u64.compose %v4253, %v4248
    %v4258 = vextract.low.u32 %v4257
    %v4259 = vextract.high.u32 %v4257
    %v4260 = vmul.u32 %v4253, %v4244
    %v4261 = vadd.s32 %v4256, %v4258
    %vm4262 = vc.u32 %v4256, %v4258
    %v4263 = vadd.s32 %v4259, 1
    %v4264 = vsel %vm4262, %v4263, %v4259
    %v4265 = vadd.s32 %v4260, %v4264
    %v4266 = vadd.s32 %v4265, 536870912
    %v4267 = vshrl.u32 %v4266, 30
    %v4268 = vshll.u32 %v4267, 30
    %v4269 = vsub.s32 %v4265, %v4268
    %vm4270 = vcmp.lt.s32.totalorder %v4269, 0
    %v4271 = vsub.s32 0, %v4269
    %v4272 = vsel %vm4270, %v4271, %v4269
    %v4273 = vclz %v4272
    %v4274 = vsub.s32 %v4273, 2
    %vm4275 = vcmp.gt.s32.totalorder 0, %v4274
    %v4276 = vsel %vm4275, 0, %v4274
    %v4277 = vsub.s32 32, %v4276
    %v4278 = vshll.u32 %v4269, %v4276
    %v4279 = vshrl.u32 %v4261, %v4277
    %v4280 = vor.u32 %v4278, %v4279
    %v4281 = vsub.s32 4294967266, %v4276
    %v4282 = vadd.s32 %v4281, 127
    %v4283 = vshll.u32 %v4282, 23
    %v4284 = vor.u32 4788187, %v4283
    %v4285 = vand.u32 2147483647, %v4284
    %v4287 = vcvt.s32.f32 %v4280
    %v4288 = vmul.f32 %v4287, %v4285
    %v4289 = vxor.u32 %v4288, 2147483648
    %v4290 = vsel %vm4207, %v4289, %v4288
    %v4291 = vsub.s32 4, %v4267
    %v4292 = vsel %vm4207, %v4291, %v4267
    %v4293 = vsel %vm4206, %v1173, %v4290
    %v4294 = vsel %vm4206, 0, %v4292
    %v4295 = vcosq.f32.pop %v4293
    %v4296 = vsinq.f32.pop %v4293
    %vm4297 = vweird.f32 %v1173
    %v4298 = vadd.s32 %v4294, 3
    %v4299 = vand.u32 %v4298, 3
    %vm4300 = vcmp.lt.s32.totalorder %v4299, 2
    %vm4301 = vcmp.eq.s32.totalorder %v4299, 0
    %v4302 = vxor.u32 %v4296, 2147483648
    %v4303 = vsel %vm4301, %v4295, %v4302
    %vm4304 = vcmp.eq.s32.totalorder %v4299, 2
    %v4305 = vxor.u32 %v4295, 2147483648
    %v4306 = vsel %vm4304, %v4305, %v4296
    %v4307 = vsel %vm4300, %v4303, %v4306
    %v4308 = vsel %vm4297, nan, %v4307
    %v4309 = vand.u32 2147483647, %v1179
    %vm4310 = vcmp.le.f32.partialorder %v4309, 0.7853982
    %vm4311 = vcmp.lt.s32.totalorder %v1179, 0
    %v4312 = vand.u32 %v1179, 2139095040
    %v4313 = vshrl.u32 %v4312, 23
    %v4314 = vsub.s32 %v4313, 127
    %v4315 = vand.u32 2147483647, %v1179
    %v4316 = vand.u32 %v4315, 8388607
    %v4317 = vor.u32 %v4316, 8388608
    %v4318 = vsub.s32 0, %v4317
    %v4319 = vadd.s32 %v4314, 1
    %vm4320 = vcmp.gt.s32.totalorder %v4319, 0
    %v4321 = vsel %vm4320, %v4319, 0
    %v4322 = vshrl.u32 %v4321, 5
    %v4323 = vand.u32 %v4321, 31
    %v4324 = vsub.s32 32, %v4323
    %v4325 = vshrl.u32 683565275, %v4324
    %v4326 = vshll.u32 683565275, %v4323
    %v4327 = vshrl.u32 2475754826, %v4324
    %v4328 = vor.u32 %v4326, %v4327
    %v4329 = vshll.u32 2475754826, %v4323
    %v4330 = vshrl.u32 2131351028, %v4324
    %v4331 = vor.u32 %v4329, %v4330
    %v4332 = vshll.u32 2131351028, %v4323
    %v4333 = vshrl.u32 2102212464, %v4324
    %v4334 = vor.u32 %v4332, %v4333
    %v4335 = vshll.u32 2102212464, %v4323
    %v4336 = vshrl.u32 920167782, %v4324
    %v4337 = vor.u32 %v4335, %v4336
    %v4338 = vshll.u32 920167782, %v4323
    %v4339 = vshrl.u32 1326507024, %v4324
    %v4340 = vor.u32 %v4338, %v4339
    %vm4341 = vcmp.lt.s32.totalorder %v4322, 1
    %vm4342 = vcmp.lt.s32.totalorder %v4322, 2
    %vm4343 = vcmp.lt.s32.totalorder %v4322, 3
    %vm4344 = vcmp.lt.s32.totalorder %v4322, 4
    %v4345 = vsel %vm4341, %v4325, %v4328
    %v4346 = vsel %vm4344, %v4334, 2102212464
    %v4347 = vsel %vm4343, %v4331, %v4346
    %v4348 = vsel %vm4342, %v4345, %v4347
    %v4349 = vsel %vm4341, %v4328, %v4331
    %v4350 = vsel %vm4344, %v4337, 920167782
    %v4351 = vsel %vm4343, %v4334, %v4350
    %v4352 = vsel %vm4342, %v4349, %v4351
    %v4353 = vsel %vm4341, %v4331, %v4334
    %v4354 = vsel %vm4344, %v4340, 1326507024
    %v4355 = vsel %vm4343, %v4337, %v4354
    %v4356 = vsel %vm4342, %v4353, %v4355
    %v4357 = vshll.u32 %v4317, 8
    %v4358 = vmul.u32.u64.compose %v4357, %v4356
    %v4359 = vextract.low.u32 %v4358
    %v4360 = vextract.high.u32 %v4358
    %v4361 = vmul.u32.u64.compose %v4357, %v4352
    %v4362 = vextract.low.u32 %v4361
    %v4363 = vextract.high.u32 %v4361
    %v4364 = vmul.u32 %v4357, %v4348
    %v4365 = vadd.s32 %v4360, %v4362
    %vm4366 = vc.u32 %v4360, %v4362
    %v4367 = vadd.s32 %v4363, 1
    %v4368 = vsel %vm4366, %v4367, %v4363
    %v4369 = vadd.s32 %v4364, %v4368
    %v4370 = vadd.s32 %v4369, 536870912
    %v4371 = vshrl.u32 %v4370, 30
    %v4372 = vshll.u32 %v4371, 30
    %v4373 = vsub.s32 %v4369, %v4372
    %vm4374 = vcmp.lt.s32.totalorder %v4373, 0
    %v4375 = vsub.s32 0, %v4373
    %v4376 = vsel %vm4374, %v4375, %v4373
    %v4377 = vclz %v4376
    %v4378 = vsub.s32 %v4377, 2
    %vm4379 = vcmp.gt.s32.totalorder 0, %v4378
    %v4380 = vsel %vm4379, 0, %v4378
    %v4381 = vsub.s32 32, %v4380
    %v4382 = vshll.u32 %v4373, %v4380
    %v4383 = vshrl.u32 %v4365, %v4381
    %v4384 = vor.u32 %v4382, %v4383
    %v4385 = vsub.s32 4294967266, %v4380
    %v4386 = vadd.s32 %v4385, 127
    %v4387 = vshll.u32 %v4386, 23
    %v4388 = vor.u32 4788187, %v4387
    %v4389 = vand.u32 2147483647, %v4388
    %v4391 = vcvt.s32.f32 %v4384
    %v4392 = vmul.f32 %v4391, %v4389
    %v4393 = vxor.u32 %v4392, 2147483648
    %v4394 = vsel %vm4311, %v4393, %v4392
    %v4395 = vsub.s32 4, %v4371
    %v4396 = vsel %vm4311, %v4395, %v4371
    %v4397 = vsel %vm4310, %v1179, %v4394
    %v4398 = vsel %vm4310, 0, %v4396
    %v4399 = vcosq.f32.pop %v4397
    %v4400 = vsinq.f32.pop %v4397
    %vm4401 = vweird.f32 %v1179
    %v4402 = vadd.s32 %v4398, 3
    %v4403 = vand.u32 %v4402, 3
    %vm4404 = vcmp.lt.s32.totalorder %v4403, 2
    %vm4405 = vcmp.eq.s32.totalorder %v4403, 0
    %v4406 = vxor.u32 %v4400, 2147483648
    %v4407 = vsel %vm4405, %v4399, %v4406
    %vm4408 = vcmp.eq.s32.totalorder %v4403, 2
    %v4409 = vxor.u32 %v4399, 2147483648
    %v4410 = vsel %vm4408, %v4409, %v4400
    %v4411 = vsel %vm4404, %v4407, %v4410
    %v4412 = vsel %vm4401, nan, %v4411
    %v4413 = vand.u32 2147483647, %v1185
    %vm4414 = vcmp.le.f32.partialorder %v4413, 0.7853982
    %vm4415 = vcmp.lt.s32.totalorder %v1185, 0
    %v4416 = vand.u32 %v1185, 2139095040
    %v4417 = vshrl.u32 %v4416, 23
    %v4418 = vsub.s32 %v4417, 127
    %v4419 = vand.u32 2147483647, %v1185
    %v4420 = vand.u32 %v4419, 8388607
    %v4421 = vor.u32 %v4420, 8388608
    %v4422 = vsub.s32 0, %v4421
    %v4423 = vadd.s32 %v4418, 1
    %vm4424 = vcmp.gt.s32.totalorder %v4423, 0
    %v4425 = vsel %vm4424, %v4423, 0
    %v4426 = vshrl.u32 %v4425, 5
    %v4427 = vand.u32 %v4425, 31
    %v4428 = vsub.s32 32, %v4427
    %v4429 = vshrl.u32 683565275, %v4428
    %v4430 = vshll.u32 683565275, %v4427
    %v4431 = vshrl.u32 2475754826, %v4428
    %v4432 = vor.u32 %v4430, %v4431
    %v4433 = vshll.u32 2475754826, %v4427
    %v4434 = vshrl.u32 2131351028, %v4428
    %v4435 = vor.u32 %v4433, %v4434
    %v4436 = vshll.u32 2131351028, %v4427
    %v4437 = vshrl.u32 2102212464, %v4428
    %v4438 = vor.u32 %v4436, %v4437
    %v4439 = vshll.u32 2102212464, %v4427
    %v4440 = vshrl.u32 920167782, %v4428
    %v4441 = vor.u32 %v4439, %v4440
    %v4442 = vshll.u32 920167782, %v4427
    %v4443 = vshrl.u32 1326507024, %v4428
    %v4444 = vor.u32 %v4442, %v4443
    %vm4445 = vcmp.lt.s32.totalorder %v4426, 1
    %vm4446 = vcmp.lt.s32.totalorder %v4426, 2
    %vm4447 = vcmp.lt.s32.totalorder %v4426, 3
    %vm4448 = vcmp.lt.s32.totalorder %v4426, 4
    %v4449 = vsel %vm4445, %v4429, %v4432
    %v4450 = vsel %vm4448, %v4438, 2102212464
    %v4451 = vsel %vm4447, %v4435, %v4450
    %v4452 = vsel %vm4446, %v4449, %v4451
    %v4453 = vsel %vm4445, %v4432, %v4435
    %v4454 = vsel %vm4448, %v4441, 920167782
    %v4455 = vsel %vm4447, %v4438, %v4454
    %v4456 = vsel %vm4446, %v4453, %v4455
    %v4457 = vsel %vm4445, %v4435, %v4438
    %v4458 = vsel %vm4448, %v4444, 1326507024
    %v4459 = vsel %vm4447, %v4441, %v4458
    %v4460 = vsel %vm4446, %v4457, %v4459
    %v4461 = vshll.u32 %v4421, 8
    %v4462 = vmul.u32.u64.compose %v4461, %v4460
    %v4463 = vextract.low.u32 %v4462
    %v4464 = vextract.high.u32 %v4462
    %v4465 = vmul.u32.u64.compose %v4461, %v4456
    %v4466 = vextract.low.u32 %v4465
    %v4467 = vextract.high.u32 %v4465
    %v4468 = vmul.u32 %v4461, %v4452
    %v4469 = vadd.s32 %v4464, %v4466
    %vm4470 = vc.u32 %v4464, %v4466
    %v4471 = vadd.s32 %v4467, 1
    %v4472 = vsel %vm4470, %v4471, %v4467
    %v4473 = vadd.s32 %v4468, %v4472
    %v4474 = vadd.s32 %v4473, 536870912
    %v4475 = vshrl.u32 %v4474, 30
    %v4476 = vshll.u32 %v4475, 30
    %v4477 = vsub.s32 %v4473, %v4476
    %vm4478 = vcmp.lt.s32.totalorder %v4477, 0
    %v4479 = vsub.s32 0, %v4477
    %v4480 = vsel %vm4478, %v4479, %v4477
    %v4481 = vclz %v4480
    %v4482 = vsub.s32 %v4481, 2
    %vm4483 = vcmp.gt.s32.totalorder 0, %v4482
    %v4484 = vsel %vm4483, 0, %v4482
    %v4485 = vsub.s32 32, %v4484
    %v4486 = vshll.u32 %v4477, %v4484
    %v4487 = vshrl.u32 %v4469, %v4485
    %v4488 = vor.u32 %v4486, %v4487
    %v4489 = vsub.s32 4294967266, %v4484
    %v4490 = vadd.s32 %v4489, 127
    %v4491 = vshll.u32 %v4490, 23
    %v4492 = vor.u32 4788187, %v4491
    %v4493 = vand.u32 2147483647, %v4492
    %v4495 = vcvt.s32.f32 %v4488
    %v4496 = vmul.f32 %v4495, %v4493
    %v4497 = vxor.u32 %v4496, 2147483648
    %v4498 = vsel %vm4415, %v4497, %v4496
    %v4499 = vsub.s32 4, %v4475
    %v4500 = vsel %vm4415, %v4499, %v4475
    %v4501 = vsel %vm4414, %v1185, %v4498
    %v4502 = vsel %vm4414, 0, %v4500
    %v4503 = vcosq.f32.pop %v4501
    %v4504 = vsinq.f32.pop %v4501
    %vm4505 = vweird.f32 %v1185
    %v4506 = vadd.s32 %v4502, 3
    %v4507 = vand.u32 %v4506, 3
    %vm4508 = vcmp.lt.s32.totalorder %v4507, 2
    %vm4509 = vcmp.eq.s32.totalorder %v4507, 0
    %v4510 = vxor.u32 %v4504, 2147483648
    %v4511 = vsel %vm4509, %v4503, %v4510
    %vm4512 = vcmp.eq.s32.totalorder %v4507, 2
    %v4513 = vxor.u32 %v4503, 2147483648
    %v4514 = vsel %vm4512, %v4513, %v4504
    %v4515 = vsel %vm4508, %v4511, %v4514
    %v4516 = vsel %vm4505, nan, %v4515
    %v4517 = vmul.f32 %v2836, %v2956
    %v4518 = vmul.f32 %v2836, %v3060
    %v4519 = vmul.f32 %v2836, %v3164
    %v4520 = vmul.f32 %v2836, %v3268
    %v4521 = vmul.f32 %v2836, %v3372
    %v4522 = vmul.f32 %v2836, %v3476
    %v4523 = vmul.f32 %v2836, %v3580
    %v4524 = vmul.f32 %v2836, %v3684
    %v4525 = vmul.f32 %v2836, %v3788
    %v4526 = vmul.f32 %v2836, %v3892
    %v4527 = vmul.f32 %v2836, %v3996
    %v4528 = vmul.f32 %v2836, %v4100
    %v4529 = vmul.f32 %v2836, %v4204
    %v4530 = vmul.f32 %v2836, %v4308
    %v4531 = vmul.f32 %v2836, %v4412
    %v4532 = vmul.f32 %v2836, %v4516
    %4549 = vrot.lane.b32.xlu0 %v4517, 64
    %v4550 = vpop.permute.xlu0 %4549
    %4551 = vrot.lane.b32.xlu0 %v4518, 64
    %v4552 = vpop.permute.xlu0 %4551
    %4553 = vrot.lane.b32.xlu0 %v4519, 64
    %v4554 = vpop.permute.xlu0 %4553
    %4555 = vrot.lane.b32.xlu0 %v4520, 64
    %v4556 = vpop.permute.xlu0 %4555
    %4557 = vrot.lane.b32.xlu0 %v4521, 64
    %v4558 = vpop.permute.xlu0 %4557
    %4559 = vrot.lane.b32.xlu0 %v4522, 64
    %v4560 = vpop.permute.xlu0 %4559
    %4561 = vrot.lane.b32.xlu0 %v4523, 64
    %v4562 = vpop.permute.xlu0 %4561
    %4563 = vrot.lane.b32.xlu0 %v4524, 64
    %v4564 = vpop.permute.xlu0 %4563
    %4565 = vrot.lane.b32.xlu0 %v4525, 64
    %v4566 = vpop.permute.xlu0 %4565
    %4567 = vrot.lane.b32.xlu0 %v4526, 64
    %v4568 = vpop.permute.xlu0 %4567
    %4569 = vrot.lane.b32.xlu0 %v4527, 64
    %v4570 = vpop.permute.xlu0 %4569
    %4571 = vrot.lane.b32.xlu0 %v4528, 64
    %v4572 = vpop.permute.xlu0 %4571
    %4573 = vrot.lane.b32.xlu0 %v4529, 64
    %v4574 = vpop.permute.xlu0 %4573
    %4575 = vrot.lane.b32.xlu0 %v4530, 64
    %v4576 = vpop.permute.xlu0 %4575
    %4577 = vrot.lane.b32.xlu0 %v4531, 64
    %v4578 = vpop.permute.xlu0 %4577
    %4579 = vrot.lane.b32.xlu0 %v4532, 64
    %v4580 = vpop.permute.xlu0 %4579
    %vm4597 = vcmask 523264
    %v4598 = vsel %vm4597, %v2837, %v4550
    %v4599 = vsel %vm4597, %v2838, %v4552
    %v4600 = vsel %vm4597, %v2839, %v4554
    %v4601 = vsel %vm4597, %v2840, %v4556
    %v4602 = vsel %vm4597, %v2841, %v4558
    %v4603 = vsel %vm4597, %v2842, %v4560
    %v4604 = vsel %vm4597, %v2843, %v4562
    %v4605 = vsel %vm4597, %v2844, %v4564
    %v4606 = vsel %vm4597, %v2845, %v4566
    %v4607 = vsel %vm4597, %v2846, %v4568
    %v4608 = vsel %vm4597, %v2847, %v4570
    %v4609 = vsel %vm4597, %v2848, %v4572
    %v4610 = vsel %vm4597, %v2849, %v4574
    %v4611 = vsel %vm4597, %v2850, %v4576
    %v4612 = vsel %vm4597, %v2851, %v4578
    %v4613 = vsel %vm4597, %v2852, %v4580
    %4614 = vst [vmem:[#allocation3] sm:$0xff] %v4598
    %4615 = vst [vmem:[#allocation3 + $0x8] sm:$0xff] %v4599
    %4616 = vst [vmem:[#allocation3 + $0x10] sm:$0xff] %v4600
    %4617 = vst [vmem:[#allocation3 + $0x18] sm:$0xff] %v4601
    %4618 = vst [vmem:[#allocation3 + $0x20] sm:$0xff] %v4602
    %4619 = vst [vmem:[#allocation3 + $0x28] sm:$0xff] %v4603
    %4620 = vst [vmem:[#allocation3 + $0x30] sm:$0xff] %v4604
    %4621 = vst [vmem:[#allocation3 + $0x38] sm:$0xff] %v4605
    %4622 = vst [vmem:[#allocation3 + $0x40] sm:$0xff] %v4606
    %4623 = vst [vmem:[#allocation3 + $0x48] sm:$0xff] %v4607
    %4624 = vst [vmem:[#allocation3 + $0x50] sm:$0xff] %v4608
    %4625 = vst [vmem:[#allocation3 + $0x58] sm:$0xff] %v4609
    %4626 = vst [vmem:[#allocation3 + $0x60] sm:$0xff] %v4610
    %4627 = vst [vmem:[#allocation3 + $0x68] sm:$0xff] %v4611
    %4628 = vst [vmem:[#allocation3 + $0x70] sm:$0xff] %v4612
    %4629 = vst [vmem:[#allocation3 + $0x78] sm:$0xff] %v4613
    // Predicated region
    $region14: #{tpu_custom_call.1} parent=1 // pred_check
      _
    $region15: #{tpu_custom_call.1} parent=1 // pred_check_branch
      %4631 = sbr.rel (0) target = $region17
    $region16: #{tpu_custom_call.1} parent=1 // pred_region
      %s4633 = ssub.s32 2048, 2048
      %4634 = vsyncadd [#allocation4], %s4633
      %s4635 = sshll.u32 [#allocation3], 4
      %s4636 = int_to_ptr.vmem [resolvable:$true] %s4635
      %4641 = dma.vmem_to_hbm [thread:$0]  %s4636, 2048, %s3, [#allocation4], 128, 128, 8
    $region17: #{tpu_custom_call.1} parent=1 // pred_fallthru
      _
    // Predicated region
    $region18: #{tpu_custom_call.1} parent=1 // pred_check
      _
    $region19: #{tpu_custom_call.1} parent=1 // pred_check_branch
      %4643 = sbr.rel (0) target = $region21
    $region20: #{tpu_custom_call.1} parent=1 // pred_region
      %4644 = dma.done [#allocation4], 2048
    $region21: #{tpu_custom_call.1} parent=1 // pred_fallthru
      _
    %4645 = vsyncpa [#allocation4], 1

</llo_original>
